<compile_context>
chip_gen: v7x
topology: tpu7x:2x2x1
jax: 0.10.0
libtpu: 0.0.40
codegen_flags: <defaults>
</compile_context>

<pallas_src>
import functools

import jax
import jax.numpy as jnp
from jax import lax
from jax.experimental import pallas as pl
from jax.experimental.pallas import tpu as pltpu


# ----------------------------- Pallas kernel ------------------------------- #

def _fused_lstm_kernel(*refs, T, TB, P, num_layers):
    """Fused multi-layer LSTM + FC for one batch tile.

    refs layout (positional):
      inputs : x (T, TB, Din), (w_ih_t, w_hh_t, b_row) * num_layers,
               w_fc_t, b_fc_row
      outputs: out (TB, O)
      scratch: gpre (T*TB, 4P) f32, [hseq (T*TB, P) f32 if num_layers > 1],
               h (TB, P) f32, c (TB, P) f32
    Gate layout inside the 4P columns: [ i | f | o | g ], each P lanes wide.
    """
    x_ref = refs[0]
    layer_refs = [refs[1 + 3 * l: 1 + 3 * (l + 1)] for l in range(num_layers)]
    w_fc_ref = refs[1 + 3 * num_layers]
    b_fc_ref = refs[2 + 3 * num_layers]
    out_ref = refs[3 + 3 * num_layers]
    scratch = refs[4 + 3 * num_layers:]
    gpre_ref = scratch[0]
    hseq_ref = scratch[1] if num_layers > 1 else None
    h_ref, c_ref = scratch[-2], scratch[-1]

    for l in range(num_layers):
        w_ih_ref, w_hh_ref, b_ref = layer_refs[l]
        w_dt = w_ih_ref.dtype                    # MXU operand dtype (f32/bf16)

        # Layer input: original sequence for layer 0, previous layer's hidden
        # sequence (VMEM-resident) otherwise.
        if l == 0:
            din = x_ref.shape[-1]
            xin = x_ref[...].reshape(T * TB, din)
        else:
            xin = hseq_ref[...]

        # Hoisted input projection for the whole sequence: one big lane-dense
        # matmul feeds the MXU; folded bias added once.
        gpre_ref[...] = (jnp.dot(xin.astype(w_dt), w_ih_ref[...],
                                 preferred_element_type=jnp.float32)
                         + b_ref[...])

        # Zero initial state (matches h0/c0 = zeros in the PyTorch module).
        h_ref[...] = jnp.zeros_like(h_ref)
        c_ref[...] = jnp.zeros_like(c_ref)

        w_hh = w_hh_ref[...]                     # (P, 4P), hoisted load
        write_hseq = l < num_layers - 1          # last layer only needs h_T

        def step(t, carry, w_hh=w_hh, write_hseq=write_hseq, w_dt=w_dt):
            row = pl.multiple_of(t * TB, 8)      # TB is a multiple of 8
            gates = (gpre_ref[pl.ds(row, TB), :]
                     + jnp.dot(h_ref[...].astype(w_dt), w_hh,
                               preferred_element_type=jnp.float32))  # (TB, 4P)

            # Lane-aligned, minimal transcendental work:
            #   sigmoid over the contiguous [i|f|o] block, tanh only on g.
            sig = jax.nn.sigmoid(gates[:, 0:3 * P])
            g_g = jnp.tanh(gates[:, 3 * P:4 * P])
            i_g = sig[:, 0:P]
            f_g = sig[:, P:2 * P]
            o_g = sig[:, 2 * P:3 * P]

            c_new = f_g * c_ref[...] + i_g * g_g
            h_new = o_g * jnp.tanh(c_new)

            c_ref[...] = c_new
            h_ref[...] = h_new
            if write_hseq:
                hseq_ref[pl.ds(row, TB), :] = h_new
            return carry

        # Full unroll for small T (gives the LLO scheduler visibility);
        # bounded unroll once T grows to avoid vreg-pressure blowup.
        lax.fori_loop(0, T, step, 0, unroll=(True if T <= 16 else 4))

    # Final FC on the last layer's final hidden state (== out[:, -1, :] @ Wfc^T + b).
    out_ref[...] = (jnp.dot(h_ref[...].astype(w_fc_ref.dtype), w_fc_ref[...],
                            preferred_element_type=jnp.float32)
                    + b_fc_ref[...]).astype(out_ref.dtype)


# ------------------------------ JAX wrappers ------------------------------- #

def _fused_forward_pallas(x_tbd, layers, fc, *, T, Bp, TB, P, O):
    num_layers = len(layers)
    Din = x_tbd.shape[-1]

    in_arrays = [x_tbd]
    in_specs = [pl.BlockSpec((T, TB, Din), lambda i: (0, i, 0))]
    for (w_ih_t, w_hh_t, b_row) in layers:
        d_in = w_ih_t.shape[0]
        in_arrays += [w_ih_t, w_hh_t, b_row]
        in_specs += [
            pl.BlockSpec((d_in, 4 * P), lambda i: (0, 0)),
            pl.BlockSpec((P, 4 * P), lambda i: (0, 0)),
            pl.BlockSpec((1, 4 * P), lambda i: (0, 0)),
        ]
    w_fc_t, b_fc_row = fc
    in_arrays += [w_fc_t, b_fc_row]
    in_specs += [
        pl.BlockSpec((P, O), lambda i: (0, 0)),
        pl.BlockSpec((1, O), lambda i: (0, 0)),
    ]

    scratch_shapes = [pltpu.VMEM((T * TB, 4 * P), jnp.float32)]   # gpre
    if num_layers > 1:
        scratch_shapes.append(pltpu.VMEM((T * TB, P), jnp.float32))  # hseq
    scratch_shapes += [pltpu.VMEM((TB, P), jnp.float32),          # h carry
                       pltpu.VMEM((TB, P), jnp.float32)]          # c carry

    # Advisory cost estimate for XLA scheduling around the custom call.
    d_ins = [Din] + [P] * (num_layers - 1)
    flops = int(sum(2 * T * Bp * d * 4 * P + 2 * T * Bp * P * 4 * P
                    for d in d_ins) + 2 * Bp * P * O)
    transc = int(num_layers * T * Bp * 5 * P)
    bytes_accessed = int(sum(int(a.size) * a.dtype.itemsize for a in in_arrays)
                         + Bp * O * 4)

    kernel = functools.partial(_fused_lstm_kernel, T=T, TB=TB, P=P,
                               num_layers=num_layers)

    return pl.pallas_call(
        kernel,
        out_shape=jax.ShapeDtypeStruct((Bp, O), jnp.float32),
        grid_spec=pltpu.PrefetchScalarGridSpec(
            num_scalar_prefetch=0,
            grid=(Bp // TB,),                      # batch tiles
            in_specs=in_specs,
            out_specs=pl.BlockSpec((TB, O), lambda i: (i, 0)),
            scratch_shapes=scratch_shapes,
        ),
        compiler_params=pltpu.CompilerParams(
            dimension_semantics=("parallel",)),    # lets v7x use both TCs
        cost_estimate=pl.CostEstimate(flops=flops, transcendentals=transc,
                                      bytes_accessed=bytes_accessed),
    )(*in_arrays)


def prepare_params(params, mxu_dtype=jnp.float32):
    """One-time weight prep.

    Transposes PyTorch layouts, folds b_ih + b_hh, reorders gates to
    [i, f, o, g] and pads each gate to its own 128-lane block (P lanes), pads
    the hidden/contracting dim to P, and optionally casts MXU operands
    (weights) to bf16.  Biases stay f32 (elementwise path).
    """
    lstm = params["lstm"]
    H = lstm[0][1].shape[1]
    P = ((H + 127) // 128) * 128
    gate_perm = (0, 1, 3, 2)   # packed block k <- pytorch gate (i, f, g, o)

    layers = []
    for l, (w_ih, w_hh, b_ih, b_hh) in enumerate(lstm):
        d_in = w_ih.shape[1]
        d_in_p = d_in if l == 0 else P          # layers>0 consume padded hseq
        w_ih_t = jnp.transpose(w_ih)            # (d_in, 4H)
        w_hh_t = jnp.transpose(w_hh)            # (H, 4H)
        b = b_ih + b_hh                         # (4H,)
        w_ih_p = jnp.zeros((d_in_p, 4 * P), jnp.float32)
        w_hh_p = jnp.zeros((P, 4 * P), jnp.float32)
        b_p = jnp.zeros((1, 4 * P), jnp.float32)
        for k, src in enumerate(gate_perm):
            w_ih_p = w_ih_p.at[:d_in, k * P:k * P + H].set(
                w_ih_t[:, src * H:(src + 1) * H])
            w_hh_p = w_hh_p.at[:H, k * P:k * P + H].set(
                w_hh_t[:, src * H:(src + 1) * H])
            b_p = b_p.at[:, k * P:k * P + H].set(b[src * H:(src + 1) * H][None, :])
        layers.append((w_ih_p.astype(mxu_dtype), w_hh_p.astype(mxu_dtype), b_p))

    w_fc, b_fc = params["fc"]
    w_fc_p = jnp.zeros((P, w_fc.shape[0]), jnp.float32).at[:H, :].set(
        jnp.transpose(w_fc))
    return {"lstm": tuple(layers),
            "fc": (w_fc_p.astype(mxu_dtype), b_fc[None, :].astype(jnp.float32))}


def lstm_model_forward(x_btd, prep):
    """x_btd: (batch, seq, input_dim) -> (batch, output_dim)."""
    B, T, _ = x_btd.shape
    layers = prep["lstm"]
    P = layers[0][1].shape[0]                 # padded hidden width
    O = prep["fc"][0].shape[1]

    TB = 8                                    # batch tile (f32 sublane group)
    Bp = ((B + TB - 1) // TB) * TB
    xp = jnp.pad(x_btd.astype(jnp.float32), ((0, Bp - B), (0, 0), (0, 0)))
    x_tbd = jnp.swapaxes(xp, 0, 1)            # (T, Bp, Din), time-major

    out_p = _fused_forward_pallas(x_tbd, layers, prep["fc"],
                                  T=T, Bp=Bp, TB=TB, P=P, O=O)
    return out_p[:B]


# ----------------------- parameter init & reference ------------------------ #

def init_params(key, input_dim, hidden_dim, num_layers, output_dim):
    """PyTorch-style uniform(-1/sqrt(H), 1/sqrt(H)) init; PyTorch weight layouts."""
    H = hidden_dim
    bound = 1.0 / (H ** 0.5)
    lstm_params = []
    for layer in range(num_layers):
        d_in = input_dim if layer == 0 else H
        key, k1, k2, k3, k4 = jax.random.split(key, 5)
        w_ih = jax.random.uniform(k1, (4 * H, d_in), jnp.float32, -bound, bound)
        w_hh = jax.random.uniform(k2, (4 * H, H), jnp.float32, -bound, bound)
        b_ih = jax.random.uniform(k3, (4 * H,), jnp.float32, -bound, bound)
        b_hh = jax.random.uniform(k4, (4 * H,), jnp.float32, -bound, bound)
        lstm_params.append((w_ih, w_hh, b_ih, b_hh))
    key, k1, k2 = jax.random.split(key, 3)
    w_fc = jax.random.uniform(k1, (output_dim, H), jnp.float32, -bound, bound)
    b_fc = jax.random.uniform(k2, (output_dim,), jnp.float32, -bound, bound)
    return {"lstm": lstm_params, "fc": (w_fc, b_fc)}


def lstm_model_reference(x_btd, params):
    """Pure-JAX reference (lax.scan) mirroring torch.nn.LSTM + Linear (eval)."""
    h_seq = x_btd
    B = x_btd.shape[0]
    for (w_ih, w_hh, b_ih, b_hh) in params["lstm"]:
        H = w_hh.shape[1]

        def step(carry, x_t):
            h_prev, c_prev = carry
            gates = x_t @ w_ih.T + b_ih + h_prev @ w_hh.T + b_hh
            i, f, g, o = jnp.split(gates, 4, axis=-1)
            c = jax.nn.sigmoid(f) * c_prev + jax.nn.sigmoid(i) * jnp.tanh(g)
            h = jax.nn.sigmoid(o) * jnp.tanh(c)
            return (h, c), h

        carry0 = (jnp.zeros((B, H), jnp.float32), jnp.zeros((B, H), jnp.float32))
        _, hs = lax.scan(step, carry0, jnp.swapaxes(h_seq, 0, 1))
        h_seq = jnp.swapaxes(hs, 0, 1)
    w_fc, b_fc = params["fc"]
    return h_seq[:, -1, :] @ w_fc.T + b_fc


# ---------------------------------- main ----------------------------------- #

if __name__ == "__main__":
    input_dim, hidden_dim, num_layers, output_dim = 8, 32, 2, 4
    batch, seq_len = 2, 8

    key = jax.random.PRNGKey(0)
    key, kx = jax.random.split(key)
    x = jax.random.normal(kx, (batch, seq_len, input_dim), jnp.float32)
    params = init_params(key, input_dim, hidden_dim, num_layers, output_dim)
    ref = lstm_model_reference(x, params)

    fwd = jax.jit(lstm_model_forward)

    # f32 MXU operands: exact check against the pure-JAX reference.
    prep_f32 = prepare_params(params, mxu_dtype=jnp.float32)
    out = jax.block_until_ready(fwd(x, prep_f32))
    assert out.shape == (batch, output_dim)
    assert jnp.allclose(out, ref, atol=1e-5, rtol=1e-5), (out, ref)

    # bf16 MXU operands (weights + dot inputs), f32 elementwise/carries:
    # the recommended perf configuration on v5e/v6e/v7x; looser tolerance.
    prep_bf16 = prepare_params(params, mxu_dtype=jnp.bfloat16)
    out_bf16 = jax.block_until_ready(fwd(x, prep_bf16))
    assert out_bf16.shape == (batch, output_dim)
    assert float(jnp.max(jnp.abs(out_bf16 - ref))) < 5e-2, (out_bf16, ref)

    print("KERNEL_OK")
</pallas_src>

<mosaic_0001>
module attributes {stable_mosaic.version = 11 : i64} {
  func.func @_fused_lstm_kernel(%arg0: i32, %arg1: memref<8x8x8xf32, #tpu.memory_space<vmem>>, %arg2: memref<8x512xf32, #tpu.memory_space<vmem>>, %arg3: memref<128x512xf32, #tpu.memory_space<vmem>>, %arg4: memref<1x512xf32, #tpu.memory_space<vmem>>, %arg5: memref<128x512xf32, #tpu.memory_space<vmem>>, %arg6: memref<128x512xf32, #tpu.memory_space<vmem>>, %arg7: memref<1x512xf32, #tpu.memory_space<vmem>>, %arg8: memref<128x4xf32, #tpu.memory_space<vmem>>, %arg9: memref<1x4xf32, #tpu.memory_space<vmem>>, %arg10: memref<8x4xf32, #tpu.memory_space<vmem>>, %arg11: memref<64x512xf32, #tpu.memory_space<vmem>>, %arg12: memref<64x128xf32, #tpu.memory_space<vmem>>, %arg13: memref<8x128xf32, #tpu.memory_space<vmem>>, %arg14: memref<8x128xf32, #tpu.memory_space<vmem>>) attributes {dimension_semantics = [#tpu.dimension_semantics<parallel>], iteration_bounds = array<i64: 1>, scalar_prefetch = 0 : i64, scratch_operands = 4 : i64, tpu.core_type = #tpu.core_type<tc>, window_params = [{transform_indices = @transform_0, window_bounds = array<i64: 8, 8, 8>}, {pipeline_mode = #tpu.pipeline_mode<synchronous>, transform_indices = @transform_1, window_bounds = array<i64: 8, 512>}, {pipeline_mode = #tpu.pipeline_mode<synchronous>, transform_indices = @transform_2, window_bounds = array<i64: 128, 512>}, {pipeline_mode = #tpu.pipeline_mode<synchronous>, transform_indices = @transform_3, window_bounds = array<i64: 1, 512>}, {pipeline_mode = #tpu.pipeline_mode<synchronous>, transform_indices = @transform_4, window_bounds = array<i64: 128, 512>}, {pipeline_mode = #tpu.pipeline_mode<synchronous>, transform_indices = @transform_5, window_bounds = array<i64: 128, 512>}, {pipeline_mode = #tpu.pipeline_mode<synchronous>, transform_indices = @transform_6, window_bounds = array<i64: 1, 512>}, {pipeline_mode = #tpu.pipeline_mode<synchronous>, transform_indices = @transform_7, window_bounds = array<i64: 128, 4>}, {pipeline_mode = #tpu.pipeline_mode<synchronous>, transform_indices = @transform_8, window_bounds = array<i64: 1, 4>}, {transform_indices = @transform_9, window_bounds = array<i64: 8, 4>}]} {
    %c0 = arith.constant 0 : index
    %c0_0 = arith.constant 0 : index
    %c0_1 = arith.constant 0 : index
    %0 = vector.load %arg1[%c0, %c0_0, %c0_1] : memref<8x8x8xf32, #tpu.memory_space<vmem>>, vector<8x8x8xf32>
    %1 = vector.shape_cast %0 : vector<8x8x8xf32> to vector<64x8xf32>
    %c0_2 = arith.constant 0 : index
    %c0_3 = arith.constant 0 : index
    %2 = vector.load %arg2[%c0_2, %c0_3] : memref<8x512xf32, #tpu.memory_space<vmem>>, vector<8x512xf32>
    %cst = arith.constant dense<0.000000e+00> : vector<64x512xf32>
    %3 = tpu.matmul %1, %2, %cst {dimension_numbers = #tpu.dot_dimension_numbers<[1], [0], [0], [1], [0, 0, 1, 1], [], []>} : vector<64x8xf32>, vector<8x512xf32>, vector<64x512xf32> -> vector<64x512xf32>
    %c0_4 = arith.constant 0 : index
    %c0_5 = arith.constant 0 : index
    %4 = vector.load %arg4[%c0_4, %c0_5] : memref<1x512xf32, #tpu.memory_space<vmem>>, vector<1x512xf32>
    %5 = vector.broadcast %4 : vector<1x512xf32> to vector<64x512xf32>
    %6 = arith.addf %3, %5 : vector<64x512xf32>
    %c0_6 = arith.constant 0 : index
    %c0_7 = arith.constant 0 : index
    %7 = vector.load %arg11[%c0_6, %c0_7] : memref<64x512xf32, #tpu.memory_space<vmem>>, vector<64x512xf32>
    tpu.vector_store %arg11[%c0_6, %c0_7], %6 {strides = array<i32>} : memref<64x512xf32, #tpu.memory_space<vmem>>, vector<64x512xf32>,
    %cst_8 = arith.constant 0.000000e+00 : f32
    %8 = vector.broadcast %cst_8 : f32 to vector<8x128xf32>
    %c0_9 = arith.constant 0 : index
    %c0_10 = arith.constant 0 : index
    %9 = vector.load %arg13[%c0_9, %c0_10] : memref<8x128xf32, #tpu.memory_space<vmem>>, vector<8x128xf32>
    tpu.vector_store %arg13[%c0_9, %c0_10], %8 {strides = array<i32>} : memref<8x128xf32, #tpu.memory_space<vmem>>, vector<8x128xf32>,
    %cst_11 = arith.constant 0.000000e+00 : f32
    %10 = vector.broadcast %cst_11 : f32 to vector<8x128xf32>
    %c0_12 = arith.constant 0 : index
    %c0_13 = arith.constant 0 : index
    %11 = vector.load %arg14[%c0_12, %c0_13] : memref<8x128xf32, #tpu.memory_space<vmem>>, vector<8x128xf32>
    tpu.vector_store %arg14[%c0_12, %c0_13], %10 {strides = array<i32>} : memref<8x128xf32, #tpu.memory_space<vmem>>, vector<8x128xf32>,
    %c0_14 = arith.constant 0 : index
    %c0_15 = arith.constant 0 : index
    %12 = vector.load %arg3[%c0_14, %c0_15] : memref<128x512xf32, #tpu.memory_space<vmem>>, vector<128x512xf32>
    %c0_i32 = arith.constant 0 : i32
    %c8_i32 = arith.constant 8 : i32
    %13 = arith.muli %c0_i32, %c8_i32 : i32
    %14 = tpu.assume_multiple %13, 8 : i32
    %15 = arith.index_cast %14 : i32 to index
    %c0_16 = arith.constant 0 : index
    %16 = vector.load %arg11[%15, %c0_16] : memref<64x512xf32, #tpu.memory_space<vmem>>, vector<8x512xf32>
    %c0_17 = arith.constant 0 : index
    %c0_18 = arith.constant 0 : index
    %17 = vector.load %arg13[%c0_17, %c0_18] : memref<8x128xf32, #tpu.memory_space<vmem>>, vector<8x128xf32>
    %cst_19 = arith.constant dense<0.000000e+00> : vector<8x512xf32>
    %18 = tpu.matmul %17, %12, %cst_19 {dimension_numbers = #tpu.dot_dimension_numbers<[1], [0], [0], [1], [0, 0, 1, 1], [], []>} : vector<8x128xf32>, vector<128x512xf32>, vector<8x512xf32> -> vector<8x512xf32>
    %19 = arith.addf %16, %18 : vector<8x512xf32>
    %20 = vector.extract_strided_slice %19 {offsets = [0, 0], sizes = [8, 384], strides = [1, 1]} : vector<8x512xf32> to vector<8x384xf32>
    %21 = arith.negf %20 : vector<8x384xf32>
    %22 = math.exp %21 : vector<8x384xf32>
    %cst_20 = arith.constant 1.000000e+00 : f32
    %23 = vector.broadcast %cst_20 : f32 to vector<8x384xf32>
    %24 = arith.addf %23, %22 : vector<8x384xf32>
    %25 = arith.divf %23, %24 : vector<8x384xf32>
    %26 = vector.extract_strided_slice %19 {offsets = [0, 384], sizes = [8, 128], strides = [1, 1]} : vector<8x512xf32> to vector<8x128xf32>
    %27 = math.tanh %26 : vector<8x128xf32>
    %28 = vector.extract_strided_slice %25 {offsets = [0, 0], sizes = [8, 128], strides = [1, 1]} : vector<8x384xf32> to vector<8x128xf32>
    %29 = vector.extract_strided_slice %25 {offsets = [0, 128], sizes = [8, 128], strides = [1, 1]} : vector<8x384xf32> to vector<8x128xf32>
    %30 = vector.extract_strided_slice %25 {offsets = [0, 256], sizes = [8, 128], strides = [1, 1]} : vector<8x384xf32> to vector<8x128xf32>
    %c0_21 = arith.constant 0 : index
    %c0_22 = arith.constant 0 : index
    %31 = vector.load %arg14[%c0_21, %c0_22] : memref<8x128xf32, #tpu.memory_space<vmem>>, vector<8x128xf32>
    %32 = arith.mulf %29, %31 : vector<8x128xf32>
    %33 = arith.mulf %28, %27 : vector<8x128xf32>
    %34 = arith.addf %32, %33 : vector<8x128xf32>
    %35 = math.tanh %34 : vector<8x128xf32>
    %36 = arith.mulf %30, %35 : vector<8x128xf32>
    %c0_23 = arith.constant 0 : index
    %c0_24 = arith.constant 0 : index
    %37 = vector.load %arg14[%c0_23, %c0_24] : memref<8x128xf32, #tpu.memory_space<vmem>>, vector<8x128xf32>
    tpu.vector_store %arg14[%c0_23, %c0_24], %34 {strides = array<i32>} : memref<8x128xf32, #tpu.memory_space<vmem>>, vector<8x128xf32>,
    %c0_25 = arith.constant 0 : index
    %c0_26 = arith.constant 0 : index
    %38 = vector.load %arg13[%c0_25, %c0_26] : memref<8x128xf32, #tpu.memory_space<vmem>>, vector<8x128xf32>
    tpu.vector_store %arg13[%c0_25, %c0_26], %36 {strides = array<i32>} : memref<8x128xf32, #tpu.memory_space<vmem>>, vector<8x128xf32>,
    %39 = arith.index_cast %14 : i32 to index
    %c0_27 = arith.constant 0 : index
    %40 = vector.load %arg12[%39, %c0_27] : memref<64x128xf32, #tpu.memory_space<vmem>>, vector<8x128xf32>
    tpu.vector_store %arg12[%39, %c0_27], %36 {strides = array<i32>} : memref<64x128xf32, #tpu.memory_space<vmem>>, vector<8x128xf32>,
    %c1_i32 = arith.constant 1 : i32
    %c8_i32_28 = arith.constant 8 : i32
    %41 = arith.muli %c1_i32, %c8_i32_28 : i32
    %42 = tpu.assume_multiple %41, 8 : i32
    %43 = arith.index_cast %42 : i32 to index
    %c0_29 = arith.constant 0 : index
    %44 = vector.load %arg11[%43, %c0_29] : memref<64x512xf32, #tpu.memory_space<vmem>>, vector<8x512xf32>
    %c0_30 = arith.constant 0 : index
    %c0_31 = arith.constant 0 : index
    %45 = vector.load %arg13[%c0_30, %c0_31] : memref<8x128xf32, #tpu.memory_space<vmem>>, vector<8x128xf32>
    %cst_32 = arith.constant dense<0.000000e+00> : vector<8x512xf32>
    %46 = tpu.matmul %45, %12, %cst_32 {dimension_numbers = #tpu.dot_dimension_numbers<[1], [0], [0], [1], [0, 0, 1, 1], [], []>} : vector<8x128xf32>, vector<128x512xf32>, vector<8x512xf32> -> vector<8x512xf32>
    %47 = arith.addf %44, %46 : vector<8x512xf32>
    %48 = vector.extract_strided_slice %47 {offsets = [0, 0], sizes = [8, 384], strides = [1, 1]} : vector<8x512xf32> to vector<8x384xf32>
    %49 = arith.negf %48 : vector<8x384xf32>
    %50 = math.exp %49 : vector<8x384xf32>
    %cst_33 = arith.constant 1.000000e+00 : f32
    %51 = vector.broadcast %cst_33 : f32 to vector<8x384xf32>
    %52 = arith.addf %51, %50 : vector<8x384xf32>
    %53 = arith.divf %51, %52 : vector<8x384xf32>
    %54 = vector.extract_strided_slice %47 {offsets = [0, 384], sizes = [8, 128], strides = [1, 1]} : vector<8x512xf32> to vector<8x128xf32>
    %55 = math.tanh %54 : vector<8x128xf32>
    %56 = vector.extract_strided_slice %53 {offsets = [0, 0], sizes = [8, 128], strides = [1, 1]} : vector<8x384xf32> to vector<8x128xf32>
    %57 = vector.extract_strided_slice %53 {offsets = [0, 128], sizes = [8, 128], strides = [1, 1]} : vector<8x384xf32> to vector<8x128xf32>
    %58 = vector.extract_strided_slice %53 {offsets = [0, 256], sizes = [8, 128], strides = [1, 1]} : vector<8x384xf32> to vector<8x128xf32>
    %c0_34 = arith.constant 0 : index
    %c0_35 = arith.constant 0 : index
    %59 = vector.load %arg14[%c0_34, %c0_35] : memref<8x128xf32, #tpu.memory_space<vmem>>, vector<8x128xf32>
    %60 = arith.mulf %57, %59 : vector<8x128xf32>
    %61 = arith.mulf %56, %55 : vector<8x128xf32>
    %62 = arith.addf %60, %61 : vector<8x128xf32>
    %63 = math.tanh %62 : vector<8x128xf32>
    %64 = arith.mulf %58, %63 : vector<8x128xf32>
    %c0_36 = arith.constant 0 : index
    %c0_37 = arith.constant 0 : index
    %65 = vector.load %arg14[%c0_36, %c0_37] : memref<8x128xf32, #tpu.memory_space<vmem>>, vector<8x128xf32>
    tpu.vector_store %arg14[%c0_36, %c0_37], %62 {strides = array<i32>} : memref<8x128xf32, #tpu.memory_space<vmem>>, vector<8x128xf32>,
    %c0_38 = arith.constant 0 : index
    %c0_39 = arith.constant 0 : index
    %66 = vector.load %arg13[%c0_38, %c0_39] : memref<8x128xf32, #tpu.memory_space<vmem>>, vector<8x128xf32>
    tpu.vector_store %arg13[%c0_38, %c0_39], %64 {strides = array<i32>} : memref<8x128xf32, #tpu.memory_space<vmem>>, vector<8x128xf32>,
    %67 = arith.index_cast %42 : i32 to index
    %c0_40 = arith.constant 0 : index
    %68 = vector.load %arg12[%67, %c0_40] : memref<64x128xf32, #tpu.memory_space<vmem>>, vector<8x128xf32>
    tpu.vector_store %arg12[%67, %c0_40], %64 {strides = array<i32>} : memref<64x128xf32, #tpu.memory_space<vmem>>, vector<8x128xf32>,
    %c2_i32 = arith.constant 2 : i32
    %c8_i32_41 = arith.constant 8 : i32
    %69 = arith.muli %c2_i32, %c8_i32_41 : i32
    %70 = tpu.assume_multiple %69, 8 : i32
    %71 = arith.index_cast %70 : i32 to index
    %c0_42 = arith.constant 0 : index
    %72 = vector.load %arg11[%71, %c0_42] : memref<64x512xf32, #tpu.memory_space<vmem>>, vector<8x512xf32>
    %c0_43 = arith.constant 0 : index
    %c0_44 = arith.constant 0 : index
    %73 = vector.load %arg13[%c0_43, %c0_44] : memref<8x128xf32, #tpu.memory_space<vmem>>, vector<8x128xf32>
    %cst_45 = arith.constant dense<0.000000e+00> : vector<8x512xf32>
    %74 = tpu.matmul %73, %12, %cst_45 {dimension_numbers = #tpu.dot_dimension_numbers<[1], [0], [0], [1], [0, 0, 1, 1], [], []>} : vector<8x128xf32>, vector<128x512xf32>, vector<8x512xf32> -> vector<8x512xf32>
    %75 = arith.addf %72, %74 : vector<8x512xf32>
    %76 = vector.extract_strided_slice %75 {offsets = [0, 0], sizes = [8, 384], strides = [1, 1]} : vector<8x512xf32> to vector<8x384xf32>
    %77 = arith.negf %76 : vector<8x384xf32>
    %78 = math.exp %77 : vector<8x384xf32>
    %cst_46 = arith.constant 1.000000e+00 : f32
    %79 = vector.broadcast %cst_46 : f32 to vector<8x384xf32>
    %80 = arith.addf %79, %78 : vector<8x384xf32>
    %81 = arith.divf %79, %80 : vector<8x384xf32>
    %82 = vector.extract_strided_slice %75 {offsets = [0, 384], sizes = [8, 128], strides = [1, 1]} : vector<8x512xf32> to vector<8x128xf32>
    %83 = math.tanh %82 : vector<8x128xf32>
    %84 = vector.extract_strided_slice %81 {offsets = [0, 0], sizes = [8, 128], strides = [1, 1]} : vector<8x384xf32> to vector<8x128xf32>
    %85 = vector.extract_strided_slice %81 {offsets = [0, 128], sizes = [8, 128], strides = [1, 1]} : vector<8x384xf32> to vector<8x128xf32>
    %86 = vector.extract_strided_slice %81 {offsets = [0, 256], sizes = [8, 128], strides = [1, 1]} : vector<8x384xf32> to vector<8x128xf32>
    %c0_47 = arith.constant 0 : index
    %c0_48 = arith.constant 0 : index
    %87 = vector.load %arg14[%c0_47, %c0_48] : memref<8x128xf32, #tpu.memory_space<vmem>>, vector<8x128xf32>
    %88 = arith.mulf %85, %87 : vector<8x128xf32>
    %89 = arith.mulf %84, %83 : vector<8x128xf32>
    %90 = arith.addf %88, %89 : vector<8x128xf32>
    %91 = math.tanh %90 : vector<8x128xf32>
    %92 = arith.mulf %86, %91 : vector<8x128xf32>
    %c0_49 = arith.constant 0 : index
    %c0_50 = arith.constant 0 : index
    %93 = vector.load %arg14[%c0_49, %c0_50] : memref<8x128xf32, #tpu.memory_space<vmem>>, vector<8x128xf32>
    tpu.vector_store %arg14[%c0_49, %c0_50], %90 {strides = array<i32>} : memref<8x128xf32, #tpu.memory_space<vmem>>, vector<8x128xf32>,
    %c0_51 = arith.constant 0 : index
    %c0_52 = arith.constant 0 : index
    %94 = vector.load %arg13[%c0_51, %c0_52] : memref<8x128xf32, #tpu.memory_space<vmem>>, vector<8x128xf32>
    tpu.vector_store %arg13[%c0_51, %c0_52], %92 {strides = array<i32>} : memref<8x128xf32, #tpu.memory_space<vmem>>, vector<8x128xf32>,
    %95 = arith.index_cast %70 : i32 to index
    %c0_53 = arith.constant 0 : index
    %96 = vector.load %arg12[%95, %c0_53] : memref<64x128xf32, #tpu.memory_space<vmem>>, vector<8x128xf32>
    tpu.vector_store %arg12[%95, %c0_53], %92 {strides = array<i32>} : memref<64x128xf32, #tpu.memory_space<vmem>>, vector<8x128xf32>,
    %c3_i32 = arith.constant 3 : i32
    %c8_i32_54 = arith.constant 8 : i32
    %97 = arith.muli %c3_i32, %c8_i32_54 : i32
    %98 = tpu.assume_multiple %97, 8 : i32
    %99 = arith.index_cast %98 : i32 to index
    %c0_55 = arith.constant 0 : index
    %100 = vector.load %arg11[%99, %c0_55] : memref<64x512xf32, #tpu.memory_space<vmem>>, vector<8x512xf32>
    %c0_56 = arith.constant 0 : index
    %c0_57 = arith.constant 0 : index
    %101 = vector.load %arg13[%c0_56, %c0_57] : memref<8x128xf32, #tpu.memory_space<vmem>>, vector<8x128xf32>
    %cst_58 = arith.constant dense<0.000000e+00> : vector<8x512xf32>
    %102 = tpu.matmul %101, %12, %cst_58 {dimension_numbers = #tpu.dot_dimension_numbers<[1], [0], [0], [1], [0, 0, 1, 1], [], []>} : vector<8x128xf32>, vector<128x512xf32>, vector<8x512xf32> -> vector<8x512xf32>
    %103 = arith.addf %100, %102 : vector<8x512xf32>
    %104 = vector.extract_strided_slice %103 {offsets = [0, 0], sizes = [8, 384], strides = [1, 1]} : vector<8x512xf32> to vector<8x384xf32>
    %105 = arith.negf %104 : vector<8x384xf32>
    %106 = math.exp %105 : vector<8x384xf32>
    %cst_59 = arith.constant 1.000000e+00 : f32
    %107 = vector.broadcast %cst_59 : f32 to vector<8x384xf32>
    %108 = arith.addf %107, %106 : vector<8x384xf32>
    %109 = arith.divf %107, %108 : vector<8x384xf32>
    %110 = vector.extract_strided_slice %103 {offsets = [0, 384], sizes = [8, 128], strides = [1, 1]} : vector<8x512xf32> to vector<8x128xf32>
    %111 = math.tanh %110 : vector<8x128xf32>
    %112 = vector.extract_strided_slice %109 {offsets = [0, 0], sizes = [8, 128], strides = [1, 1]} : vector<8x384xf32> to vector<8x128xf32>
    %113 = vector.extract_strided_slice %109 {offsets = [0, 128], sizes = [8, 128], strides = [1, 1]} : vector<8x384xf32> to vector<8x128xf32>
    %114 = vector.extract_strided_slice %109 {offsets = [0, 256], sizes = [8, 128], strides = [1, 1]} : vector<8x384xf32> to vector<8x128xf32>
    %c0_60 = arith.constant 0 : index
    %c0_61 = arith.constant 0 : index
    %115 = vector.load %arg14[%c0_60, %c0_61] : memref<8x128xf32, #tpu.memory_space<vmem>>, vector<8x128xf32>
    %116 = arith.mulf %113, %115 : vector<8x128xf32>
    %117 = arith.mulf %112, %111 : vector<8x128xf32>
    %118 = arith.addf %116, %117 : vector<8x128xf32>
    %119 = math.tanh %118 : vector<8x128xf32>
    %120 = arith.mulf %114, %119 : vector<8x128xf32>
    %c0_62 = arith.constant 0 : index
    %c0_63 = arith.constant 0 : index
    %121 = vector.load %arg14[%c0_62, %c0_63] : memref<8x128xf32, #tpu.memory_space<vmem>>, vector<8x128xf32>
    tpu.vector_store %arg14[%c0_62, %c0_63], %118 {strides = array<i32>} : memref<8x128xf32, #tpu.memory_space<vmem>>, vector<8x128xf32>,
    %c0_64 = arith.constant 0 : index
    %c0_65 = arith.constant 0 : index
    %122 = vector.load %arg13[%c0_64, %c0_65] : memref<8x128xf32, #tpu.memory_space<vmem>>, vector<8x128xf32>
    tpu.vector_store %arg13[%c0_64, %c0_65], %120 {strides = array<i32>} : memref<8x128xf32, #tpu.memory_space<vmem>>, vector<8x128xf32>,
    %123 = arith.index_cast %98 : i32 to index
    %c0_66 = arith.constant 0 : index
    %124 = vector.load %arg12[%123, %c0_66] : memref<64x128xf32, #tpu.memory_space<vmem>>, vector<8x128xf32>
    tpu.vector_store %arg12[%123, %c0_66], %120 {strides = array<i32>} : memref<64x128xf32, #tpu.memory_space<vmem>>, vector<8x128xf32>,
    %c4_i32 = arith.constant 4 : i32
    %c8_i32_67 = arith.constant 8 : i32
    %125 = arith.muli %c4_i32, %c8_i32_67 : i32
    %126 = tpu.assume_multiple %125, 8 : i32
    %127 = arith.index_cast %126 : i32 to index
    %c0_68 = arith.constant 0 : index
    %128 = vector.load %arg11[%127, %c0_68] : memref<64x512xf32, #tpu.memory_space<vmem>>, vector<8x512xf32>
    %c0_69 = arith.constant 0 : index
    %c0_70 = arith.constant 0 : index
    %129 = vector.load %arg13[%c0_69, %c0_70] : memref<8x128xf32, #tpu.memory_space<vmem>>, vector<8x128xf32>
    %cst_71 = arith.constant dense<0.000000e+00> : vector<8x512xf32>
    %130 = tpu.matmul %129, %12, %cst_71 {dimension_numbers = #tpu.dot_dimension_numbers<[1], [0], [0], [1], [0, 0, 1, 1], [], []>} : vector<8x128xf32>, vector<128x512xf32>, vector<8x512xf32> -> vector<8x512xf32>
    %131 = arith.addf %128, %130 : vector<8x512xf32>
    %132 = vector.extract_strided_slice %131 {offsets = [0, 0], sizes = [8, 384], strides = [1, 1]} : vector<8x512xf32> to vector<8x384xf32>
    %133 = arith.negf %132 : vector<8x384xf32>
    %134 = math.exp %133 : vector<8x384xf32>
    %cst_72 = arith.constant 1.000000e+00 : f32
    %135 = vector.broadcast %cst_72 : f32 to vector<8x384xf32>
    %136 = arith.addf %135, %134 : vector<8x384xf32>
    %137 = arith.divf %135, %136 : vector<8x384xf32>
    %138 = vector.extract_strided_slice %131 {offsets = [0, 384], sizes = [8, 128], strides = [1, 1]} : vector<8x512xf32> to vector<8x128xf32>
    %139 = math.tanh %138 : vector<8x128xf32>
    %140 = vector.extract_strided_slice %137 {offsets = [0, 0], sizes = [8, 128], strides = [1, 1]} : vector<8x384xf32> to vector<8x128xf32>
    %141 = vector.extract_strided_slice %137 {offsets = [0, 128], sizes = [8, 128], strides = [1, 1]} : vector<8x384xf32> to vector<8x128xf32>
    %142 = vector.extract_strided_slice %137 {offsets = [0, 256], sizes = [8, 128], strides = [1, 1]} : vector<8x384xf32> to vector<8x128xf32>
    %c0_73 = arith.constant 0 : index
    %c0_74 = arith.constant 0 : index
    %143 = vector.load %arg14[%c0_73, %c0_74] : memref<8x128xf32, #tpu.memory_space<vmem>>, vector<8x128xf32>
    %144 = arith.mulf %141, %143 : vector<8x128xf32>
    %145 = arith.mulf %140, %139 : vector<8x128xf32>
    %146 = arith.addf %144, %145 : vector<8x128xf32>
    %147 = math.tanh %146 : vector<8x128xf32>
    %148 = arith.mulf %142, %147 : vector<8x128xf32>
    %c0_75 = arith.constant 0 : index
    %c0_76 = arith.constant 0 : index
    %149 = vector.load %arg14[%c0_75, %c0_76] : memref<8x128xf32, #tpu.memory_space<vmem>>, vector<8x128xf32>
    tpu.vector_store %arg14[%c0_75, %c0_76], %146 {strides = array<i32>} : memref<8x128xf32, #tpu.memory_space<vmem>>, vector<8x128xf32>,
    %c0_77 = arith.constant 0 : index
    %c0_78 = arith.constant 0 : index
    %150 = vector.load %arg13[%c0_77, %c0_78] : memref<8x128xf32, #tpu.memory_space<vmem>>, vector<8x128xf32>
    tpu.vector_store %arg13[%c0_77, %c0_78], %148 {strides = array<i32>} : memref<8x128xf32, #tpu.memory_space<vmem>>, vector<8x128xf32>,
    %151 = arith.index_cast %126 : i32 to index
    %c0_79 = arith.constant 0 : index
    %152 = vector.load %arg12[%151, %c0_79] : memref<64x128xf32, #tpu.memory_space<vmem>>, vector<8x128xf32>
    tpu.vector_store %arg12[%151, %c0_79], %148 {strides = array<i32>} : memref<64x128xf32, #tpu.memory_space<vmem>>, vector<8x128xf32>,
    %c5_i32 = arith.constant 5 : i32
    %c8_i32_80 = arith.constant 8 : i32
    %153 = arith.muli %c5_i32, %c8_i32_80 : i32
    %154 = tpu.assume_multiple %153, 8 : i32
    %155 = arith.index_cast %154 : i32 to index
    %c0_81 = arith.constant 0 : index
    %156 = vector.load %arg11[%155, %c0_81] : memref<64x512xf32, #tpu.memory_space<vmem>>, vector<8x512xf32>
    %c0_82 = arith.constant 0 : index
    %c0_83 = arith.constant 0 : index
    %157 = vector.load %arg13[%c0_82, %c0_83] : memref<8x128xf32, #tpu.memory_space<vmem>>, vector<8x128xf32>
    %cst_84 = arith.constant dense<0.000000e+00> : vector<8x512xf32>
    %158 = tpu.matmul %157, %12, %cst_84 {dimension_numbers = #tpu.dot_dimension_numbers<[1], [0], [0], [1], [0, 0, 1, 1], [], []>} : vector<8x128xf32>, vector<128x512xf32>, vector<8x512xf32> -> vector<8x512xf32>
    %159 = arith.addf %156, %158 : vector<8x512xf32>
    %160 = vector.extract_strided_slice %159 {offsets = [0, 0], sizes = [8, 384], strides = [1, 1]} : vector<8x512xf32> to vector<8x384xf32>
    %161 = arith.negf %160 : vector<8x384xf32>
    %162 = math.exp %161 : vector<8x384xf32>
    %cst_85 = arith.constant 1.000000e+00 : f32
    %163 = vector.broadcast %cst_85 : f32 to vector<8x384xf32>
    %164 = arith.addf %163, %162 : vector<8x384xf32>
    %165 = arith.divf %163, %164 : vector<8x384xf32>
    %166 = vector.extract_strided_slice %159 {offsets = [0, 384], sizes = [8, 128], strides = [1, 1]} : vector<8x512xf32> to vector<8x128xf32>
    %167 = math.tanh %166 : vector<8x128xf32>
    %168 = vector.extract_strided_slice %165 {offsets = [0, 0], sizes = [8, 128], strides = [1, 1]} : vector<8x384xf32> to vector<8x128xf32>
    %169 = vector.extract_strided_slice %165 {offsets = [0, 128], sizes = [8, 128], strides = [1, 1]} : vector<8x384xf32> to vector<8x128xf32>
    %170 = vector.extract_strided_slice %165 {offsets = [0, 256], sizes = [8, 128], strides = [1, 1]} : vector<8x384xf32> to vector<8x128xf32>
    %c0_86 = arith.constant 0 : index
    %c0_87 = arith.constant 0 : index
    %171 = vector.load %arg14[%c0_86, %c0_87] : memref<8x128xf32, #tpu.memory_space<vmem>>, vector<8x128xf32>
    %172 = arith.mulf %169, %171 : vector<8x128xf32>
    %173 = arith.mulf %168, %167 : vector<8x128xf32>
    %174 = arith.addf %172, %173 : vector<8x128xf32>
    %175 = math.tanh %174 : vector<8x128xf32>
    %176 = arith.mulf %170, %175 : vector<8x128xf32>
    %c0_88 = arith.constant 0 : index
    %c0_89 = arith.constant 0 : index
    %177 = vector.load %arg14[%c0_88, %c0_89] : memref<8x128xf32, #tpu.memory_space<vmem>>, vector<8x128xf32>
    tpu.vector_store %arg14[%c0_88, %c0_89], %174 {strides = array<i32>} : memref<8x128xf32, #tpu.memory_space<vmem>>, vector<8x128xf32>,
    %c0_90 = arith.constant 0 : index
    %c0_91 = arith.constant 0 : index
    %178 = vector.load %arg13[%c0_90, %c0_91] : memref<8x128xf32, #tpu.memory_space<vmem>>, vector<8x128xf32>
    tpu.vector_store %arg13[%c0_90, %c0_91], %176 {strides = array<i32>} : memref<8x128xf32, #tpu.memory_space<vmem>>, vector<8x128xf32>,
    %179 = arith.index_cast %154 : i32 to index
    %c0_92 = arith.constant 0 : index
    %180 = vector.load %arg12[%179, %c0_92] : memref<64x128xf32, #tpu.memory_space<vmem>>, vector<8x128xf32>
    tpu.vector_store %arg12[%179, %c0_92], %176 {strides = array<i32>} : memref<64x128xf32, #tpu.memory_space<vmem>>, vector<8x128xf32>,
    %c6_i32 = arith.constant 6 : i32
    %c8_i32_93 = arith.constant 8 : i32
    %181 = arith.muli %c6_i32, %c8_i32_93 : i32
    %182 = tpu.assume_multiple %181, 8 : i32
    %183 = arith.index_cast %182 : i32 to index
    %c0_94 = arith.constant 0 : index
    %184 = vector.load %arg11[%183, %c0_94] : memref<64x512xf32, #tpu.memory_space<vmem>>, vector<8x512xf32>
    %c0_95 = arith.constant 0 : index
    %c0_96 = arith.constant 0 : index
    %185 = vector.load %arg13[%c0_95, %c0_96] : memref<8x128xf32, #tpu.memory_space<vmem>>, vector<8x128xf32>
    %cst_97 = arith.constant dense<0.000000e+00> : vector<8x512xf32>
    %186 = tpu.matmul %185, %12, %cst_97 {dimension_numbers = #tpu.dot_dimension_numbers<[1], [0], [0], [1], [0, 0, 1, 1], [], []>} : vector<8x128xf32>, vector<128x512xf32>, vector<8x512xf32> -> vector<8x512xf32>
    %187 = arith.addf %184, %186 : vector<8x512xf32>
    %188 = vector.extract_strided_slice %187 {offsets = [0, 0], sizes = [8, 384], strides = [1, 1]} : vector<8x512xf32> to vector<8x384xf32>
    %189 = arith.negf %188 : vector<8x384xf32>
    %190 = math.exp %189 : vector<8x384xf32>
    %cst_98 = arith.constant 1.000000e+00 : f32
    %191 = vector.broadcast %cst_98 : f32 to vector<8x384xf32>
    %192 = arith.addf %191, %190 : vector<8x384xf32>
    %193 = arith.divf %191, %192 : vector<8x384xf32>
    %194 = vector.extract_strided_slice %187 {offsets = [0, 384], sizes = [8, 128], strides = [1, 1]} : vector<8x512xf32> to vector<8x128xf32>
    %195 = math.tanh %194 : vector<8x128xf32>
    %196 = vector.extract_strided_slice %193 {offsets = [0, 0], sizes = [8, 128], strides = [1, 1]} : vector<8x384xf32> to vector<8x128xf32>
    %197 = vector.extract_strided_slice %193 {offsets = [0, 128], sizes = [8, 128], strides = [1, 1]} : vector<8x384xf32> to vector<8x128xf32>
    %198 = vector.extract_strided_slice %193 {offsets = [0, 256], sizes = [8, 128], strides = [1, 1]} : vector<8x384xf32> to vector<8x128xf32>
    %c0_99 = arith.constant 0 : index
    %c0_100 = arith.constant 0 : index
    %199 = vector.load %arg14[%c0_99, %c0_100] : memref<8x128xf32, #tpu.memory_space<vmem>>, vector<8x128xf32>
    %200 = arith.mulf %197, %199 : vector<8x128xf32>
    %201 = arith.mulf %196, %195 : vector<8x128xf32>
    %202 = arith.addf %200, %201 : vector<8x128xf32>
    %203 = math.tanh %202 : vector<8x128xf32>
    %204 = arith.mulf %198, %203 : vector<8x128xf32>
    %c0_101 = arith.constant 0 : index
    %c0_102 = arith.constant 0 : index
    %205 = vector.load %arg14[%c0_101, %c0_102] : memref<8x128xf32, #tpu.memory_space<vmem>>, vector<8x128xf32>
    tpu.vector_store %arg14[%c0_101, %c0_102], %202 {strides = array<i32>} : memref<8x128xf32, #tpu.memory_space<vmem>>, vector<8x128xf32>,
    %c0_103 = arith.constant 0 : index
    %c0_104 = arith.constant 0 : index
    %206 = vector.load %arg13[%c0_103, %c0_104] : memref<8x128xf32, #tpu.memory_space<vmem>>, vector<8x128xf32>
    tpu.vector_store %arg13[%c0_103, %c0_104], %204 {strides = array<i32>} : memref<8x128xf32, #tpu.memory_space<vmem>>, vector<8x128xf32>,
    %207 = arith.index_cast %182 : i32 to index
    %c0_105 = arith.constant 0 : index
    %208 = vector.load %arg12[%207, %c0_105] : memref<64x128xf32, #tpu.memory_space<vmem>>, vector<8x128xf32>
    tpu.vector_store %arg12[%207, %c0_105], %204 {strides = array<i32>} : memref<64x128xf32, #tpu.memory_space<vmem>>, vector<8x128xf32>,
    %c7_i32 = arith.constant 7 : i32
    %c8_i32_106 = arith.constant 8 : i32
    %209 = arith.muli %c7_i32, %c8_i32_106 : i32
    %210 = tpu.assume_multiple %209, 8 : i32
    %211 = arith.index_cast %210 : i32 to index
    %c0_107 = arith.constant 0 : index
    %212 = vector.load %arg11[%211, %c0_107] : memref<64x512xf32, #tpu.memory_space<vmem>>, vector<8x512xf32>
    %c0_108 = arith.constant 0 : index
    %c0_109 = arith.constant 0 : index
    %213 = vector.load %arg13[%c0_108, %c0_109] : memref<8x128xf32, #tpu.memory_space<vmem>>, vector<8x128xf32>
    %cst_110 = arith.constant dense<0.000000e+00> : vector<8x512xf32>
    %214 = tpu.matmul %213, %12, %cst_110 {dimension_numbers = #tpu.dot_dimension_numbers<[1], [0], [0], [1], [0, 0, 1, 1], [], []>} : vector<8x128xf32>, vector<128x512xf32>, vector<8x512xf32> -> vector<8x512xf32>
    %215 = arith.addf %212, %214 : vector<8x512xf32>
    %216 = vector.extract_strided_slice %215 {offsets = [0, 0], sizes = [8, 384], strides = [1, 1]} : vector<8x512xf32> to vector<8x384xf32>
    %217 = arith.negf %216 : vector<8x384xf32>
    %218 = math.exp %217 : vector<8x384xf32>
    %cst_111 = arith.constant 1.000000e+00 : f32
    %219 = vector.broadcast %cst_111 : f32 to vector<8x384xf32>
    %220 = arith.addf %219, %218 : vector<8x384xf32>
    %221 = arith.divf %219, %220 : vector<8x384xf32>
    %222 = vector.extract_strided_slice %215 {offsets = [0, 384], sizes = [8, 128], strides = [1, 1]} : vector<8x512xf32> to vector<8x128xf32>
    %223 = math.tanh %222 : vector<8x128xf32>
    %224 = vector.extract_strided_slice %221 {offsets = [0, 0], sizes = [8, 128], strides = [1, 1]} : vector<8x384xf32> to vector<8x128xf32>
    %225 = vector.extract_strided_slice %221 {offsets = [0, 128], sizes = [8, 128], strides = [1, 1]} : vector<8x384xf32> to vector<8x128xf32>
    %226 = vector.extract_strided_slice %221 {offsets = [0, 256], sizes = [8, 128], strides = [1, 1]} : vector<8x384xf32> to vector<8x128xf32>
    %c0_112 = arith.constant 0 : index
    %c0_113 = arith.constant 0 : index
    %227 = vector.load %arg14[%c0_112, %c0_113] : memref<8x128xf32, #tpu.memory_space<vmem>>, vector<8x128xf32>
    %228 = arith.mulf %225, %227 : vector<8x128xf32>
    %229 = arith.mulf %224, %223 : vector<8x128xf32>
    %230 = arith.addf %228, %229 : vector<8x128xf32>
    %231 = math.tanh %230 : vector<8x128xf32>
    %232 = arith.mulf %226, %231 : vector<8x128xf32>
    %c0_114 = arith.constant 0 : index
    %c0_115 = arith.constant 0 : index
    %233 = vector.load %arg14[%c0_114, %c0_115] : memref<8x128xf32, #tpu.memory_space<vmem>>, vector<8x128xf32>
    tpu.vector_store %arg14[%c0_114, %c0_115], %230 {strides = array<i32>} : memref<8x128xf32, #tpu.memory_space<vmem>>, vector<8x128xf32>,
    %c0_116 = arith.constant 0 : index
    %c0_117 = arith.constant 0 : index
    %234 = vector.load %arg13[%c0_116, %c0_117] : memref<8x128xf32, #tpu.memory_space<vmem>>, vector<8x128xf32>
    tpu.vector_store %arg13[%c0_116, %c0_117], %232 {strides = array<i32>} : memref<8x128xf32, #tpu.memory_space<vmem>>, vector<8x128xf32>,
    %235 = arith.index_cast %210 : i32 to index
    %c0_118 = arith.constant 0 : index
    %236 = vector.load %arg12[%235, %c0_118] : memref<64x128xf32, #tpu.memory_space<vmem>>, vector<8x128xf32>
    tpu.vector_store %arg12[%235, %c0_118], %232 {strides = array<i32>} : memref<64x128xf32, #tpu.memory_space<vmem>>, vector<8x128xf32>,
    %c8_i32_119 = arith.constant 8 : i32
    %c0_120 = arith.constant 0 : index
    %c0_121 = arith.constant 0 : index
    %237 = vector.load %arg12[%c0_120, %c0_121] : memref<64x128xf32, #tpu.memory_space<vmem>>, vector<64x128xf32>
    %c0_122 = arith.constant 0 : index
    %c0_123 = arith.constant 0 : index
    %238 = vector.load %arg5[%c0_122, %c0_123] : memref<128x512xf32, #tpu.memory_space<vmem>>, vector<128x512xf32>
    %cst_124 = arith.constant dense<0.000000e+00> : vector<64x512xf32>
    %239 = tpu.matmul %237, %238, %cst_124 {dimension_numbers = #tpu.dot_dimension_numbers<[1], [0], [0], [1], [0, 0, 1, 1], [], []>} : vector<64x128xf32>, vector<128x512xf32>, vector<64x512xf32> -> vector<64x512xf32>
    %c0_125 = arith.constant 0 : index
    %c0_126 = arith.constant 0 : index
    %240 = vector.load %arg7[%c0_125, %c0_126] : memref<1x512xf32, #tpu.memory_space<vmem>>, vector<1x512xf32>
    %241 = vector.broadcast %240 : vector<1x512xf32> to vector<64x512xf32>
    %242 = arith.addf %239, %241 : vector<64x512xf32>
    %c0_127 = arith.constant 0 : index
    %c0_128 = arith.constant 0 : index
    %243 = vector.load %arg11[%c0_127, %c0_128] : memref<64x512xf32, #tpu.memory_space<vmem>>, vector<64x512xf32>
    tpu.vector_store %arg11[%c0_127, %c0_128], %242 {strides = array<i32>} : memref<64x512xf32, #tpu.memory_space<vmem>>, vector<64x512xf32>,
    %cst_129 = arith.constant 0.000000e+00 : f32
    %244 = vector.broadcast %cst_129 : f32 to vector<8x128xf32>
    %c0_130 = arith.constant 0 : index
    %c0_131 = arith.constant 0 : index
    %245 = vector.load %arg13[%c0_130, %c0_131] : memref<8x128xf32, #tpu.memory_space<vmem>>, vector<8x128xf32>
    tpu.vector_store %arg13[%c0_130, %c0_131], %244 {strides = array<i32>} : memref<8x128xf32, #tpu.memory_space<vmem>>, vector<8x128xf32>,
    %cst_132 = arith.constant 0.000000e+00 : f32
    %246 = vector.broadcast %cst_132 : f32 to vector<8x128xf32>
    %c0_133 = arith.constant 0 : index
    %c0_134 = arith.constant 0 : index
    %247 = vector.load %arg14[%c0_133, %c0_134] : memref<8x128xf32, #tpu.memory_space<vmem>>, vector<8x128xf32>
    tpu.vector_store %arg14[%c0_133, %c0_134], %246 {strides = array<i32>} : memref<8x128xf32, #tpu.memory_space<vmem>>, vector<8x128xf32>,
    %c0_135 = arith.constant 0 : index
    %c0_136 = arith.constant 0 : index
    %248 = vector.load %arg6[%c0_135, %c0_136] : memref<128x512xf32, #tpu.memory_space<vmem>>, vector<128x512xf32>
    %c0_i32_137 = arith.constant 0 : i32
    %c8_i32_138 = arith.constant 8 : i32
    %249 = arith.muli %c0_i32_137, %c8_i32_138 : i32
    %250 = tpu.assume_multiple %249, 8 : i32
    %251 = arith.index_cast %250 : i32 to index
    %c0_139 = arith.constant 0 : index
    %252 = vector.load %arg11[%251, %c0_139] : memref<64x512xf32, #tpu.memory_space<vmem>>, vector<8x512xf32>
    %c0_140 = arith.constant 0 : index
    %c0_141 = arith.constant 0 : index
    %253 = vector.load %arg13[%c0_140, %c0_141] : memref<8x128xf32, #tpu.memory_space<vmem>>, vector<8x128xf32>
    %cst_142 = arith.constant dense<0.000000e+00> : vector<8x512xf32>
    %254 = tpu.matmul %253, %248, %cst_142 {dimension_numbers = #tpu.dot_dimension_numbers<[1], [0], [0], [1], [0, 0, 1, 1], [], []>} : vector<8x128xf32>, vector<128x512xf32>, vector<8x512xf32> -> vector<8x512xf32>
    %255 = arith.addf %252, %254 : vector<8x512xf32>
    %256 = vector.extract_strided_slice %255 {offsets = [0, 0], sizes = [8, 384], strides = [1, 1]} : vector<8x512xf32> to vector<8x384xf32>
    %257 = arith.negf %256 : vector<8x384xf32>
    %258 = math.exp %257 : vector<8x384xf32>
    %cst_143 = arith.constant 1.000000e+00 : f32
    %259 = vector.broadcast %cst_143 : f32 to vector<8x384xf32>
    %260 = arith.addf %259, %258 : vector<8x384xf32>
    %261 = arith.divf %259, %260 : vector<8x384xf32>
    %262 = vector.extract_strided_slice %255 {offsets = [0, 384], sizes = [8, 128], strides = [1, 1]} : vector<8x512xf32> to vector<8x128xf32>
    %263 = math.tanh %262 : vector<8x128xf32>
    %264 = vector.extract_strided_slice %261 {offsets = [0, 0], sizes = [8, 128], strides = [1, 1]} : vector<8x384xf32> to vector<8x128xf32>
    %265 = vector.extract_strided_slice %261 {offsets = [0, 128], sizes = [8, 128], strides = [1, 1]} : vector<8x384xf32> to vector<8x128xf32>
    %266 = vector.extract_strided_slice %261 {offsets = [0, 256], sizes = [8, 128], strides = [1, 1]} : vector<8x384xf32> to vector<8x128xf32>
    %c0_144 = arith.constant 0 : index
    %c0_145 = arith.constant 0 : index
    %267 = vector.load %arg14[%c0_144, %c0_145] : memref<8x128xf32, #tpu.memory_space<vmem>>, vector<8x128xf32>
    %268 = arith.mulf %265, %267 : vector<8x128xf32>
    %269 = arith.mulf %264, %263 : vector<8x128xf32>
    %270 = arith.addf %268, %269 : vector<8x128xf32>
    %271 = math.tanh %270 : vector<8x128xf32>
    %272 = arith.mulf %266, %271 : vector<8x128xf32>
    %c0_146 = arith.constant 0 : index
    %c0_147 = arith.constant 0 : index
    %273 = vector.load %arg14[%c0_146, %c0_147] : memref<8x128xf32, #tpu.memory_space<vmem>>, vector<8x128xf32>
    tpu.vector_store %arg14[%c0_146, %c0_147], %270 {strides = array<i32>} : memref<8x128xf32, #tpu.memory_space<vmem>>, vector<8x128xf32>,
    %c0_148 = arith.constant 0 : index
    %c0_149 = arith.constant 0 : index
    %274 = vector.load %arg13[%c0_148, %c0_149] : memref<8x128xf32, #tpu.memory_space<vmem>>, vector<8x128xf32>
    tpu.vector_store %arg13[%c0_148, %c0_149], %272 {strides = array<i32>} : memref<8x128xf32, #tpu.memory_space<vmem>>, vector<8x128xf32>,
    %c1_i32_150 = arith.constant 1 : i32
    %c8_i32_151 = arith.constant 8 : i32
    %275 = arith.muli %c1_i32_150, %c8_i32_151 : i32
    %276 = tpu.assume_multiple %275, 8 : i32
    %277 = arith.index_cast %276 : i32 to index
    %c0_152 = arith.constant 0 : index
    %278 = vector.load %arg11[%277, %c0_152] : memref<64x512xf32, #tpu.memory_space<vmem>>, vector<8x512xf32>
    %c0_153 = arith.constant 0 : index
    %c0_154 = arith.constant 0 : index
    %279 = vector.load %arg13[%c0_153, %c0_154] : memref<8x128xf32, #tpu.memory_space<vmem>>, vector<8x128xf32>
    %cst_155 = arith.constant dense<0.000000e+00> : vector<8x512xf32>
    %280 = tpu.matmul %279, %248, %cst_155 {dimension_numbers = #tpu.dot_dimension_numbers<[1], [0], [0], [1], [0, 0, 1, 1], [], []>} : vector<8x128xf32>, vector<128x512xf32>, vector<8x512xf32> -> vector<8x512xf32>
    %281 = arith.addf %278, %280 : vector<8x512xf32>
    %282 = vector.extract_strided_slice %281 {offsets = [0, 0], sizes = [8, 384], strides = [1, 1]} : vector<8x512xf32> to vector<8x384xf32>
    %283 = arith.negf %282 : vector<8x384xf32>
    %284 = math.exp %283 : vector<8x384xf32>
    %cst_156 = arith.constant 1.000000e+00 : f32
    %285 = vector.broadcast %cst_156 : f32 to vector<8x384xf32>
    %286 = arith.addf %285, %284 : vector<8x384xf32>
    %287 = arith.divf %285, %286 : vector<8x384xf32>
    %288 = vector.extract_strided_slice %281 {offsets = [0, 384], sizes = [8, 128], strides = [1, 1]} : vector<8x512xf32> to vector<8x128xf32>
    %289 = math.tanh %288 : vector<8x128xf32>
    %290 = vector.extract_strided_slice %287 {offsets = [0, 0], sizes = [8, 128], strides = [1, 1]} : vector<8x384xf32> to vector<8x128xf32>
    %291 = vector.extract_strided_slice %287 {offsets = [0, 128], sizes = [8, 128], strides = [1, 1]} : vector<8x384xf32> to vector<8x128xf32>
    %292 = vector.extract_strided_slice %287 {offsets = [0, 256], sizes = [8, 128], strides = [1, 1]} : vector<8x384xf32> to vector<8x128xf32>
    %c0_157 = arith.constant 0 : index
    %c0_158 = arith.constant 0 : index
    %293 = vector.load %arg14[%c0_157, %c0_158] : memref<8x128xf32, #tpu.memory_space<vmem>>, vector<8x128xf32>
    %294 = arith.mulf %291, %293 : vector<8x128xf32>
    %295 = arith.mulf %290, %289 : vector<8x128xf32>
    %296 = arith.addf %294, %295 : vector<8x128xf32>
    %297 = math.tanh %296 : vector<8x128xf32>
    %298 = arith.mulf %292, %297 : vector<8x128xf32>
    %c0_159 = arith.constant 0 : index
    %c0_160 = arith.constant 0 : index
    %299 = vector.load %arg14[%c0_159, %c0_160] : memref<8x128xf32, #tpu.memory_space<vmem>>, vector<8x128xf32>
    tpu.vector_store %arg14[%c0_159, %c0_160], %296 {strides = array<i32>} : memref<8x128xf32, #tpu.memory_space<vmem>>, vector<8x128xf32>,
    %c0_161 = arith.constant 0 : index
    %c0_162 = arith.constant 0 : index
    %300 = vector.load %arg13[%c0_161, %c0_162] : memref<8x128xf32, #tpu.memory_space<vmem>>, vector<8x128xf32>
    tpu.vector_store %arg13[%c0_161, %c0_162], %298 {strides = array<i32>} : memref<8x128xf32, #tpu.memory_space<vmem>>, vector<8x128xf32>,
    %c2_i32_163 = arith.constant 2 : i32
    %c8_i32_164 = arith.constant 8 : i32
    %301 = arith.muli %c2_i32_163, %c8_i32_164 : i32
    %302 = tpu.assume_multiple %301, 8 : i32
    %303 = arith.index_cast %302 : i32 to index
    %c0_165 = arith.constant 0 : index
    %304 = vector.load %arg11[%303, %c0_165] : memref<64x512xf32, #tpu.memory_space<vmem>>, vector<8x512xf32>
    %c0_166 = arith.constant 0 : index
    %c0_167 = arith.constant 0 : index
    %305 = vector.load %arg13[%c0_166, %c0_167] : memref<8x128xf32, #tpu.memory_space<vmem>>, vector<8x128xf32>
    %cst_168 = arith.constant dense<0.000000e+00> : vector<8x512xf32>
    %306 = tpu.matmul %305, %248, %cst_168 {dimension_numbers = #tpu.dot_dimension_numbers<[1], [0], [0], [1], [0, 0, 1, 1], [], []>} : vector<8x128xf32>, vector<128x512xf32>, vector<8x512xf32> -> vector<8x512xf32>
    %307 = arith.addf %304, %306 : vector<8x512xf32>
    %308 = vector.extract_strided_slice %307 {offsets = [0, 0], sizes = [8, 384], strides = [1, 1]} : vector<8x512xf32> to vector<8x384xf32>
    %309 = arith.negf %308 : vector<8x384xf32>
    %310 = math.exp %309 : vector<8x384xf32>
    %cst_169 = arith.constant 1.000000e+00 : f32
    %311 = vector.broadcast %cst_169 : f32 to vector<8x384xf32>
    %312 = arith.addf %311, %310 : vector<8x384xf32>
    %313 = arith.divf %311, %312 : vector<8x384xf32>
    %314 = vector.extract_strided_slice %307 {offsets = [0, 384], sizes = [8, 128], strides = [1, 1]} : vector<8x512xf32> to vector<8x128xf32>
    %315 = math.tanh %314 : vector<8x128xf32>
    %316 = vector.extract_strided_slice %313 {offsets = [0, 0], sizes = [8, 128], strides = [1, 1]} : vector<8x384xf32> to vector<8x128xf32>
    %317 = vector.extract_strided_slice %313 {offsets = [0, 128], sizes = [8, 128], strides = [1, 1]} : vector<8x384xf32> to vector<8x128xf32>
    %318 = vector.extract_strided_slice %313 {offsets = [0, 256], sizes = [8, 128], strides = [1, 1]} : vector<8x384xf32> to vector<8x128xf32>
    %c0_170 = arith.constant 0 : index
    %c0_171 = arith.constant 0 : index
    %319 = vector.load %arg14[%c0_170, %c0_171] : memref<8x128xf32, #tpu.memory_space<vmem>>, vector<8x128xf32>
    %320 = arith.mulf %317, %319 : vector<8x128xf32>
    %321 = arith.mulf %316, %315 : vector<8x128xf32>
    %322 = arith.addf %320, %321 : vector<8x128xf32>
    %323 = math.tanh %322 : vector<8x128xf32>
    %324 = arith.mulf %318, %323 : vector<8x128xf32>
    %c0_172 = arith.constant 0 : index
    %c0_173 = arith.constant 0 : index
    %325 = vector.load %arg14[%c0_172, %c0_173] : memref<8x128xf32, #tpu.memory_space<vmem>>, vector<8x128xf32>
    tpu.vector_store %arg14[%c0_172, %c0_173], %322 {strides = array<i32>} : memref<8x128xf32, #tpu.memory_space<vmem>>, vector<8x128xf32>,
    %c0_174 = arith.constant 0 : index
    %c0_175 = arith.constant 0 : index
    %326 = vector.load %arg13[%c0_174, %c0_175] : memref<8x128xf32, #tpu.memory_space<vmem>>, vector<8x128xf32>
    tpu.vector_store %arg13[%c0_174, %c0_175], %324 {strides = array<i32>} : memref<8x128xf32, #tpu.memory_space<vmem>>, vector<8x128xf32>,
    %c3_i32_176 = arith.constant 3 : i32
    %c8_i32_177 = arith.constant 8 : i32
    %327 = arith.muli %c3_i32_176, %c8_i32_177 : i32
    %328 = tpu.assume_multiple %327, 8 : i32
    %329 = arith.index_cast %328 : i32 to index
    %c0_178 = arith.constant 0 : index
    %330 = vector.load %arg11[%329, %c0_178] : memref<64x512xf32, #tpu.memory_space<vmem>>, vector<8x512xf32>
    %c0_179 = arith.constant 0 : index
    %c0_180 = arith.constant 0 : index
    %331 = vector.load %arg13[%c0_179, %c0_180] : memref<8x128xf32, #tpu.memory_space<vmem>>, vector<8x128xf32>
    %cst_181 = arith.constant dense<0.000000e+00> : vector<8x512xf32>
    %332 = tpu.matmul %331, %248, %cst_181 {dimension_numbers = #tpu.dot_dimension_numbers<[1], [0], [0], [1], [0, 0, 1, 1], [], []>} : vector<8x128xf32>, vector<128x512xf32>, vector<8x512xf32> -> vector<8x512xf32>
    %333 = arith.addf %330, %332 : vector<8x512xf32>
    %334 = vector.extract_strided_slice %333 {offsets = [0, 0], sizes = [8, 384], strides = [1, 1]} : vector<8x512xf32> to vector<8x384xf32>
    %335 = arith.negf %334 : vector<8x384xf32>
    %336 = math.exp %335 : vector<8x384xf32>
    %cst_182 = arith.constant 1.000000e+00 : f32
    %337 = vector.broadcast %cst_182 : f32 to vector<8x384xf32>
    %338 = arith.addf %337, %336 : vector<8x384xf32>
    %339 = arith.divf %337, %338 : vector<8x384xf32>
    %340 = vector.extract_strided_slice %333 {offsets = [0, 384], sizes = [8, 128], strides = [1, 1]} : vector<8x512xf32> to vector<8x128xf32>
    %341 = math.tanh %340 : vector<8x128xf32>
    %342 = vector.extract_strided_slice %339 {offsets = [0, 0], sizes = [8, 128], strides = [1, 1]} : vector<8x384xf32> to vector<8x128xf32>
    %343 = vector.extract_strided_slice %339 {offsets = [0, 128], sizes = [8, 128], strides = [1, 1]} : vector<8x384xf32> to vector<8x128xf32>
    %344 = vector.extract_strided_slice %339 {offsets = [0, 256], sizes = [8, 128], strides = [1, 1]} : vector<8x384xf32> to vector<8x128xf32>
    %c0_183 = arith.constant 0 : index
    %c0_184 = arith.constant 0 : index
    %345 = vector.load %arg14[%c0_183, %c0_184] : memref<8x128xf32, #tpu.memory_space<vmem>>, vector<8x128xf32>
    %346 = arith.mulf %343, %345 : vector<8x128xf32>
    %347 = arith.mulf %342, %341 : vector<8x128xf32>
    %348 = arith.addf %346, %347 : vector<8x128xf32>
    %349 = math.tanh %348 : vector<8x128xf32>
    %350 = arith.mulf %344, %349 : vector<8x128xf32>
    %c0_185 = arith.constant 0 : index
    %c0_186 = arith.constant 0 : index
    %351 = vector.load %arg14[%c0_185, %c0_186] : memref<8x128xf32, #tpu.memory_space<vmem>>, vector<8x128xf32>
    tpu.vector_store %arg14[%c0_185, %c0_186], %348 {strides = array<i32>} : memref<8x128xf32, #tpu.memory_space<vmem>>, vector<8x128xf32>,
    %c0_187 = arith.constant 0 : index
    %c0_188 = arith.constant 0 : index
    %352 = vector.load %arg13[%c0_187, %c0_188] : memref<8x128xf32, #tpu.memory_space<vmem>>, vector<8x128xf32>
    tpu.vector_store %arg13[%c0_187, %c0_188], %350 {strides = array<i32>} : memref<8x128xf32, #tpu.memory_space<vmem>>, vector<8x128xf32>,
    %c4_i32_189 = arith.constant 4 : i32
    %c8_i32_190 = arith.constant 8 : i32
    %353 = arith.muli %c4_i32_189, %c8_i32_190 : i32
    %354 = tpu.assume_multiple %353, 8 : i32
    %355 = arith.index_cast %354 : i32 to index
    %c0_191 = arith.constant 0 : index
    %356 = vector.load %arg11[%355, %c0_191] : memref<64x512xf32, #tpu.memory_space<vmem>>, vector<8x512xf32>
    %c0_192 = arith.constant 0 : index
    %c0_193 = arith.constant 0 : index
    %357 = vector.load %arg13[%c0_192, %c0_193] : memref<8x128xf32, #tpu.memory_space<vmem>>, vector<8x128xf32>
    %cst_194 = arith.constant dense<0.000000e+00> : vector<8x512xf32>
    %358 = tpu.matmul %357, %248, %cst_194 {dimension_numbers = #tpu.dot_dimension_numbers<[1], [0], [0], [1], [0, 0, 1, 1], [], []>} : vector<8x128xf32>, vector<128x512xf32>, vector<8x512xf32> -> vector<8x512xf32>
    %359 = arith.addf %356, %358 : vector<8x512xf32>
    %360 = vector.extract_strided_slice %359 {offsets = [0, 0], sizes = [8, 384], strides = [1, 1]} : vector<8x512xf32> to vector<8x384xf32>
    %361 = arith.negf %360 : vector<8x384xf32>
    %362 = math.exp %361 : vector<8x384xf32>
    %cst_195 = arith.constant 1.000000e+00 : f32
    %363 = vector.broadcast %cst_195 : f32 to vector<8x384xf32>
    %364 = arith.addf %363, %362 : vector<8x384xf32>
    %365 = arith.divf %363, %364 : vector<8x384xf32>
    %366 = vector.extract_strided_slice %359 {offsets = [0, 384], sizes = [8, 128], strides = [1, 1]} : vector<8x512xf32> to vector<8x128xf32>
    %367 = math.tanh %366 : vector<8x128xf32>
    %368 = vector.extract_strided_slice %365 {offsets = [0, 0], sizes = [8, 128], strides = [1, 1]} : vector<8x384xf32> to vector<8x128xf32>
    %369 = vector.extract_strided_slice %365 {offsets = [0, 128], sizes = [8, 128], strides = [1, 1]} : vector<8x384xf32> to vector<8x128xf32>
    %370 = vector.extract_strided_slice %365 {offsets = [0, 256], sizes = [8, 128], strides = [1, 1]} : vector<8x384xf32> to vector<8x128xf32>
    %c0_196 = arith.constant 0 : index
    %c0_197 = arith.constant 0 : index
    %371 = vector.load %arg14[%c0_196, %c0_197] : memref<8x128xf32, #tpu.memory_space<vmem>>, vector<8x128xf32>
    %372 = arith.mulf %369, %371 : vector<8x128xf32>
    %373 = arith.mulf %368, %367 : vector<8x128xf32>
    %374 = arith.addf %372, %373 : vector<8x128xf32>
    %375 = math.tanh %374 : vector<8x128xf32>
    %376 = arith.mulf %370, %375 : vector<8x128xf32>
    %c0_198 = arith.constant 0 : index
    %c0_199 = arith.constant 0 : index
    %377 = vector.load %arg14[%c0_198, %c0_199] : memref<8x128xf32, #tpu.memory_space<vmem>>, vector<8x128xf32>
    tpu.vector_store %arg14[%c0_198, %c0_199], %374 {strides = array<i32>} : memref<8x128xf32, #tpu.memory_space<vmem>>, vector<8x128xf32>,
    %c0_200 = arith.constant 0 : index
    %c0_201 = arith.constant 0 : index
    %378 = vector.load %arg13[%c0_200, %c0_201] : memref<8x128xf32, #tpu.memory_space<vmem>>, vector<8x128xf32>
    tpu.vector_store %arg13[%c0_200, %c0_201], %376 {strides = array<i32>} : memref<8x128xf32, #tpu.memory_space<vmem>>, vector<8x128xf32>,
    %c5_i32_202 = arith.constant 5 : i32
    %c8_i32_203 = arith.constant 8 : i32
    %379 = arith.muli %c5_i32_202, %c8_i32_203 : i32
    %380 = tpu.assume_multiple %379, 8 : i32
    %381 = arith.index_cast %380 : i32 to index
    %c0_204 = arith.constant 0 : index
    %382 = vector.load %arg11[%381, %c0_204] : memref<64x512xf32, #tpu.memory_space<vmem>>, vector<8x512xf32>
    %c0_205 = arith.constant 0 : index
    %c0_206 = arith.constant 0 : index
    %383 = vector.load %arg13[%c0_205, %c0_206] : memref<8x128xf32, #tpu.memory_space<vmem>>, vector<8x128xf32>
    %cst_207 = arith.constant dense<0.000000e+00> : vector<8x512xf32>
    %384 = tpu.matmul %383, %248, %cst_207 {dimension_numbers = #tpu.dot_dimension_numbers<[1], [0], [0], [1], [0, 0, 1, 1], [], []>} : vector<8x128xf32>, vector<128x512xf32>, vector<8x512xf32> -> vector<8x512xf32>
    %385 = arith.addf %382, %384 : vector<8x512xf32>
    %386 = vector.extract_strided_slice %385 {offsets = [0, 0], sizes = [8, 384], strides = [1, 1]} : vector<8x512xf32> to vector<8x384xf32>
    %387 = arith.negf %386 : vector<8x384xf32>
    %388 = math.exp %387 : vector<8x384xf32>
    %cst_208 = arith.constant 1.000000e+00 : f32
    %389 = vector.broadcast %cst_208 : f32 to vector<8x384xf32>
    %390 = arith.addf %389, %388 : vector<8x384xf32>
    %391 = arith.divf %389, %390 : vector<8x384xf32>
    %392 = vector.extract_strided_slice %385 {offsets = [0, 384], sizes = [8, 128], strides = [1, 1]} : vector<8x512xf32> to vector<8x128xf32>
    %393 = math.tanh %392 : vector<8x128xf32>
    %394 = vector.extract_strided_slice %391 {offsets = [0, 0], sizes = [8, 128], strides = [1, 1]} : vector<8x384xf32> to vector<8x128xf32>
    %395 = vector.extract_strided_slice %391 {offsets = [0, 128], sizes = [8, 128], strides = [1, 1]} : vector<8x384xf32> to vector<8x128xf32>
    %396 = vector.extract_strided_slice %391 {offsets = [0, 256], sizes = [8, 128], strides = [1, 1]} : vector<8x384xf32> to vector<8x128xf32>
    %c0_209 = arith.constant 0 : index
    %c0_210 = arith.constant 0 : index
    %397 = vector.load %arg14[%c0_209, %c0_210] : memref<8x128xf32, #tpu.memory_space<vmem>>, vector<8x128xf32>
    %398 = arith.mulf %395, %397 : vector<8x128xf32>
    %399 = arith.mulf %394, %393 : vector<8x128xf32>
    %400 = arith.addf %398, %399 : vector<8x128xf32>
    %401 = math.tanh %400 : vector<8x128xf32>
    %402 = arith.mulf %396, %401 : vector<8x128xf32>
    %c0_211 = arith.constant 0 : index
    %c0_212 = arith.constant 0 : index
    %403 = vector.load %arg14[%c0_211, %c0_212] : memref<8x128xf32, #tpu.memory_space<vmem>>, vector<8x128xf32>
    tpu.vector_store %arg14[%c0_211, %c0_212], %400 {strides = array<i32>} : memref<8x128xf32, #tpu.memory_space<vmem>>, vector<8x128xf32>,
    %c0_213 = arith.constant 0 : index
    %c0_214 = arith.constant 0 : index
    %404 = vector.load %arg13[%c0_213, %c0_214] : memref<8x128xf32, #tpu.memory_space<vmem>>, vector<8x128xf32>
    tpu.vector_store %arg13[%c0_213, %c0_214], %402 {strides = array<i32>} : memref<8x128xf32, #tpu.memory_space<vmem>>, vector<8x128xf32>,
    %c6_i32_215 = arith.constant 6 : i32
    %c8_i32_216 = arith.constant 8 : i32
    %405 = arith.muli %c6_i32_215, %c8_i32_216 : i32
    %406 = tpu.assume_multiple %405, 8 : i32
    %407 = arith.index_cast %406 : i32 to index
    %c0_217 = arith.constant 0 : index
    %408 = vector.load %arg11[%407, %c0_217] : memref<64x512xf32, #tpu.memory_space<vmem>>, vector<8x512xf32>
    %c0_218 = arith.constant 0 : index
    %c0_219 = arith.constant 0 : index
    %409 = vector.load %arg13[%c0_218, %c0_219] : memref<8x128xf32, #tpu.memory_space<vmem>>, vector<8x128xf32>
    %cst_220 = arith.constant dense<0.000000e+00> : vector<8x512xf32>
    %410 = tpu.matmul %409, %248, %cst_220 {dimension_numbers = #tpu.dot_dimension_numbers<[1], [0], [0], [1], [0, 0, 1, 1], [], []>} : vector<8x128xf32>, vector<128x512xf32>, vector<8x512xf32> -> vector<8x512xf32>
    %411 = arith.addf %408, %410 : vector<8x512xf32>
    %412 = vector.extract_strided_slice %411 {offsets = [0, 0], sizes = [8, 384], strides = [1, 1]} : vector<8x512xf32> to vector<8x384xf32>
    %413 = arith.negf %412 : vector<8x384xf32>
    %414 = math.exp %413 : vector<8x384xf32>
    %cst_221 = arith.constant 1.000000e+00 : f32
    %415 = vector.broadcast %cst_221 : f32 to vector<8x384xf32>
    %416 = arith.addf %415, %414 : vector<8x384xf32>
    %417 = arith.divf %415, %416 : vector<8x384xf32>
    %418 = vector.extract_strided_slice %411 {offsets = [0, 384], sizes = [8, 128], strides = [1, 1]} : vector<8x512xf32> to vector<8x128xf32>
    %419 = math.tanh %418 : vector<8x128xf32>
    %420 = vector.extract_strided_slice %417 {offsets = [0, 0], sizes = [8, 128], strides = [1, 1]} : vector<8x384xf32> to vector<8x128xf32>
    %421 = vector.extract_strided_slice %417 {offsets = [0, 128], sizes = [8, 128], strides = [1, 1]} : vector<8x384xf32> to vector<8x128xf32>
    %422 = vector.extract_strided_slice %417 {offsets = [0, 256], sizes = [8, 128], strides = [1, 1]} : vector<8x384xf32> to vector<8x128xf32>
    %c0_222 = arith.constant 0 : index
    %c0_223 = arith.constant 0 : index
    %423 = vector.load %arg14[%c0_222, %c0_223] : memref<8x128xf32, #tpu.memory_space<vmem>>, vector<8x128xf32>
    %424 = arith.mulf %421, %423 : vector<8x128xf32>
    %425 = arith.mulf %420, %419 : vector<8x128xf32>
    %426 = arith.addf %424, %425 : vector<8x128xf32>
    %427 = math.tanh %426 : vector<8x128xf32>
    %428 = arith.mulf %422, %427 : vector<8x128xf32>
    %c0_224 = arith.constant 0 : index
    %c0_225 = arith.constant 0 : index
    %429 = vector.load %arg14[%c0_224, %c0_225] : memref<8x128xf32, #tpu.memory_space<vmem>>, vector<8x128xf32>
    tpu.vector_store %arg14[%c0_224, %c0_225], %426 {strides = array<i32>} : memref<8x128xf32, #tpu.memory_space<vmem>>, vector<8x128xf32>,
    %c0_226 = arith.constant 0 : index
    %c0_227 = arith.constant 0 : index
    %430 = vector.load %arg13[%c0_226, %c0_227] : memref<8x128xf32, #tpu.memory_space<vmem>>, vector<8x128xf32>
    tpu.vector_store %arg13[%c0_226, %c0_227], %428 {strides = array<i32>} : memref<8x128xf32, #tpu.memory_space<vmem>>, vector<8x128xf32>,
    %c7_i32_228 = arith.constant 7 : i32
    %c8_i32_229 = arith.constant 8 : i32
    %431 = arith.muli %c7_i32_228, %c8_i32_229 : i32
    %432 = tpu.assume_multiple %431, 8 : i32
    %433 = arith.index_cast %432 : i32 to index
    %c0_230 = arith.constant 0 : index
    %434 = vector.load %arg11[%433, %c0_230] : memref<64x512xf32, #tpu.memory_space<vmem>>, vector<8x512xf32>
    %c0_231 = arith.constant 0 : index
    %c0_232 = arith.constant 0 : index
    %435 = vector.load %arg13[%c0_231, %c0_232] : memref<8x128xf32, #tpu.memory_space<vmem>>, vector<8x128xf32>
    %cst_233 = arith.constant dense<0.000000e+00> : vector<8x512xf32>
    %436 = tpu.matmul %435, %248, %cst_233 {dimension_numbers = #tpu.dot_dimension_numbers<[1], [0], [0], [1], [0, 0, 1, 1], [], []>} : vector<8x128xf32>, vector<128x512xf32>, vector<8x512xf32> -> vector<8x512xf32>
    %437 = arith.addf %434, %436 : vector<8x512xf32>
    %438 = vector.extract_strided_slice %437 {offsets = [0, 0], sizes = [8, 384], strides = [1, 1]} : vector<8x512xf32> to vector<8x384xf32>
    %439 = arith.negf %438 : vector<8x384xf32>
    %440 = math.exp %439 : vector<8x384xf32>
    %cst_234 = arith.constant 1.000000e+00 : f32
    %441 = vector.broadcast %cst_234 : f32 to vector<8x384xf32>
    %442 = arith.addf %441, %440 : vector<8x384xf32>
    %443 = arith.divf %441, %442 : vector<8x384xf32>
    %444 = vector.extract_strided_slice %437 {offsets = [0, 384], sizes = [8, 128], strides = [1, 1]} : vector<8x512xf32> to vector<8x128xf32>
    %445 = math.tanh %444 : vector<8x128xf32>
    %446 = vector.extract_strided_slice %443 {offsets = [0, 0], sizes = [8, 128], strides = [1, 1]} : vector<8x384xf32> to vector<8x128xf32>
    %447 = vector.extract_strided_slice %443 {offsets = [0, 128], sizes = [8, 128], strides = [1, 1]} : vector<8x384xf32> to vector<8x128xf32>
    %448 = vector.extract_strided_slice %443 {offsets = [0, 256], sizes = [8, 128], strides = [1, 1]} : vector<8x384xf32> to vector<8x128xf32>
    %c0_235 = arith.constant 0 : index
    %c0_236 = arith.constant 0 : index
    %449 = vector.load %arg14[%c0_235, %c0_236] : memref<8x128xf32, #tpu.memory_space<vmem>>, vector<8x128xf32>
    %450 = arith.mulf %447, %449 : vector<8x128xf32>
    %451 = arith.mulf %446, %445 : vector<8x128xf32>
    %452 = arith.addf %450, %451 : vector<8x128xf32>
    %453 = math.tanh %452 : vector<8x128xf32>
    %454 = arith.mulf %448, %453 : vector<8x128xf32>
    %c0_237 = arith.constant 0 : index
    %c0_238 = arith.constant 0 : index
    %455 = vector.load %arg14[%c0_237, %c0_238] : memref<8x128xf32, #tpu.memory_space<vmem>>, vector<8x128xf32>
    tpu.vector_store %arg14[%c0_237, %c0_238], %452 {strides = array<i32>} : memref<8x128xf32, #tpu.memory_space<vmem>>, vector<8x128xf32>,
    %c0_239 = arith.constant 0 : index
    %c0_240 = arith.constant 0 : index
    %456 = vector.load %arg13[%c0_239, %c0_240] : memref<8x128xf32, #tpu.memory_space<vmem>>, vector<8x128xf32>
    tpu.vector_store %arg13[%c0_239, %c0_240], %454 {strides = array<i32>} : memref<8x128xf32, #tpu.memory_space<vmem>>, vector<8x128xf32>,
    %c8_i32_241 = arith.constant 8 : i32
    %c0_242 = arith.constant 0 : index
    %c0_243 = arith.constant 0 : index
    %457 = vector.load %arg13[%c0_242, %c0_243] : memref<8x128xf32, #tpu.memory_space<vmem>>, vector<8x128xf32>
    %c0_244 = arith.constant 0 : index
    %c0_245 = arith.constant 0 : index
    %458 = vector.load %arg8[%c0_244, %c0_245] : memref<128x4xf32, #tpu.memory_space<vmem>>, vector<128x4xf32>
    %cst_246 = arith.constant dense<0.000000e+00> : vector<8x4xf32>
    %459 = tpu.matmul %457, %458, %cst_246 {dimension_numbers = #tpu.dot_dimension_numbers<[1], [0], [0], [1], [0, 0, 1, 1], [], []>} : vector<8x128xf32>, vector<128x4xf32>, vector<8x4xf32> -> vector<8x4xf32>
    %c0_247 = arith.constant 0 : index
    %c0_248 = arith.constant 0 : index
    %460 = vector.load %arg9[%c0_247, %c0_248] : memref<1x4xf32, #tpu.memory_space<vmem>>, vector<1x4xf32>
    %461 = vector.broadcast %460 : vector<1x4xf32> to vector<8x4xf32>
    %462 = arith.addf %459, %461 : vector<8x4xf32>
    %c0_249 = arith.constant 0 : index
    %c0_250 = arith.constant 0 : index
    %463 = vector.load %arg10[%c0_249, %c0_250] : memref<8x4xf32, #tpu.memory_space<vmem>>, vector<8x4xf32>
    tpu.vector_store %arg10[%c0_249, %c0_250], %462 {strides = array<i32>} : memref<8x4xf32, #tpu.memory_space<vmem>>, vector<8x4xf32>,
    return
  }
  func.func @transform_0(%arg0: i32) -> (i32, i32, i32) {
    %c0_i32 = arith.constant 0 : i32
    %c0_i32_0 = arith.constant 0 : i32
    %c0_i32_1 = arith.constant 0 : i32
    return %c0_i32, %arg0, %c0_i32_0 : i32, i32, i32
  }
  func.func @transform_1(%arg0: i32) -> (i32, i32) {
    %c0_i32 = arith.constant 0 : i32
    %c0_i32_0 = arith.constant 0 : i32
    %c0_i32_1 = arith.constant 0 : i32
    return %c0_i32, %c0_i32_0 : i32, i32
  }
  func.func @transform_2(%arg0: i32) -> (i32, i32) {
    %c0_i32 = arith.constant 0 : i32
    %c0_i32_0 = arith.constant 0 : i32
    %c0_i32_1 = arith.constant 0 : i32
    return %c0_i32, %c0_i32_0 : i32, i32
  }
  func.func @transform_3(%arg0: i32) -> (i32, i32) {
    %c0_i32 = arith.constant 0 : i32
    %c0_i32_0 = arith.constant 0 : i32
    %c0_i32_1 = arith.constant 0 : i32
    return %c0_i32, %c0_i32_0 : i32, i32
  }
  func.func @transform_4(%arg0: i32) -> (i32, i32) {
    %c0_i32 = arith.constant 0 : i32
    %c0_i32_0 = arith.constant 0 : i32
    %c0_i32_1 = arith.constant 0 : i32
    return %c0_i32, %c0_i32_0 : i32, i32
  }
  func.func @transform_5(%arg0: i32) -> (i32, i32) {
    %c0_i32 = arith.constant 0 : i32
    %c0_i32_0 = arith.constant 0 : i32
    %c0_i32_1 = arith.constant 0 : i32
    return %c0_i32, %c0_i32_0 : i32, i32
  }
  func.func @transform_6(%arg0: i32) -> (i32, i32) {
    %c0_i32 = arith.constant 0 : i32
    %c0_i32_0 = arith.constant 0 : i32
    %c0_i32_1 = arith.constant 0 : i32
    return %c0_i32, %c0_i32_0 : i32, i32
  }
  func.func @transform_7(%arg0: i32) -> (i32, i32) {
    %c0_i32 = arith.constant 0 : i32
    %c0_i32_0 = arith.constant 0 : i32
    %c0_i32_1 = arith.constant 0 : i32
    return %c0_i32, %c0_i32_0 : i32, i32
  }
  func.func @transform_8(%arg0: i32) -> (i32, i32) {
    %c0_i32 = arith.constant 0 : i32
    %c0_i32_0 = arith.constant 0 : i32
    %c0_i32_1 = arith.constant 0 : i32
    return %c0_i32, %c0_i32_0 : i32, i32
  }
  func.func @transform_9(%arg0: i32) -> (i32, i32) {
    %c0_i32 = arith.constant 0 : i32
    %c0_i32_0 = arith.constant 0 : i32
    return %arg0, %c0_i32 : i32, i32
  }
}

</mosaic_0001>

<llo_original>
// kernel: lstm_model_forward.1
$region0: #{lstm_model_forward.1}
  #allocation0 [shape = 'u32[]', space=smem, size = 0x4, offset = 0x4, fixed_abs, tag = 'smem constant byte address 0x4 - core index']
  #allocation1 [shape = 'u32[144,128]{1,0:T(1,128)}', space=vmem, size = 0x12000, scoped, tag = 'internal scratch']
  #allocation2 [shape = 'f32[64,512]{1,0:T(8,128)}', space=vmem, size = 0x20000, scoped, tag = 'scratch operand']
  #allocation3 [shape = 'f32[64,128]{1,0:T(8,128)}', space=vmem, size = 0x8000, scoped, tag = 'scratch operand']
  #allocation4 [shape = 'f32[8,128]{1,0:T(8,128)}', space=vmem, size = 0x1000, scoped, tag = 'scratch operand']
  #allocation5 [shape = 'f32[8,128]{1,0:T(8,128)}', space=vmem, size = 0x1000, scoped, tag = 'scratch operand']
  %s0 = inlined_call_operand.vmem [shape: f32[8,8,8], index: 0, kind: input, shape index: {}]
  %s1 = inlined_call_operand.vmem [shape: f32[8,512], index: 1, kind: input, shape index: {}]
  %s2 = inlined_call_operand.hbm [shape: f32[128,512], index: 2, kind: input, shape index: {}]
  %s3 = inlined_call_operand.vmem [shape: f32[1,512], index: 3, kind: input, shape index: {}]
  %s4 = inlined_call_operand.hbm [shape: f32[128,512], index: 4, kind: input, shape index: {}]
  %s5 = inlined_call_operand.hbm [shape: f32[128,512], index: 5, kind: input, shape index: {}]
  %s6 = inlined_call_operand.vmem [shape: f32[1,512], index: 6, kind: input, shape index: {}]
  %s7 = inlined_call_operand.vmem [shape: f32[128,4], index: 7, kind: input, shape index: {}]
  %s8 = inlined_call_operand.vmem [shape: f32[1,4], index: 8, kind: input, shape index: {}]
  %s9 = inlined_call_operand.vmem [shape: f32[8,4], index: 9, kind: output, shape index: {}]
  %s10 = sld [smem:[#allocation0]]
  $region58: #{lstm_model_forward.1} parent=0
    _
  %s12 = ssub.s32 1, %s10
  %s13 = scalar_select 0, %s12, %s10
  $region1: #{lstm_model_forward.1} parent=0
    #allocation6 [shape = 'u8[262144]{0}', space=vmem, size = 0x40000, scoped, tag = 'input window, operand 2, single buffered']
    #allocation7 [shape = 's32[1]{0}', space=sflag, size = 0x4, scoped, tag = 'scoped memory for lstm_model_forward.1']
    #allocation8 [shape = 'u8[262144]{0}', space=vmem, size = 0x40000, scoped, tag = 'input window, operand 4, single buffered']
    #allocation9 [shape = 's32[1]{0}', space=sflag, size = 0x4, scoped, tag = 'scoped memory for lstm_model_forward.1']
    #allocation10 [shape = 'u8[262144]{0}', space=vmem, size = 0x40000, scoped, tag = 'input window, operand 5, single buffered']
    %14 = vsyncpa [#allocation7], 0
    %15 = vsyncpa [#allocation9], 0
    // Predicated region
    $region2: #{lstm_model_forward.1} parent=1 // pred_check
      _
    $region3: #{lstm_model_forward.1} parent=1 // pred_check_branch
      %17 = sbr.rel (0) target = $region5
    $region4: #{lstm_model_forward.1} parent=1 // pred_region
      _
    $region5: #{lstm_model_forward.1} parent=1 // pred_fallthru
      _
    // Predicated region
    $region6: #{lstm_model_forward.1} parent=1 // pred_check
      _
    $region7: #{lstm_model_forward.1} parent=1 // pred_check_branch
      %19 = sbr.rel (0) target = $region9
    $region8: #{lstm_model_forward.1} parent=1 // pred_region
      _
    $region9: #{lstm_model_forward.1} parent=1 // pred_fallthru
      _
    // Predicated region
    $region10: #{lstm_model_forward.1} parent=1 // pred_check
      _
    $region11: #{lstm_model_forward.1} parent=1 // pred_check_branch
      %21 = sbr.rel (0) target = $region13
    $region12: #{lstm_model_forward.1} parent=1 // pred_region
      %s23 = ssub.s32 8192, 8192
      %24 = vsyncadd [#allocation7], %s23
      %s25 = sshll.u32 [#allocation6], 4
      %s26 = int_to_ptr.vmem [resolvable:$true] %s25
      %31 = dma.hbm_to_vmem [thread:$0]  %s2, 8192, %s26, [#allocation7], 512, 512, 32
    $region13: #{lstm_model_forward.1} parent=1 // pred_fallthru
      _
    // Predicated region
    $region14: #{lstm_model_forward.1} parent=1 // pred_check
      _
    $region15: #{lstm_model_forward.1} parent=1 // pred_check_branch
      %33 = sbr.rel (0) target = $region17
    $region16: #{lstm_model_forward.1} parent=1 // pred_region
      _
    $region17: #{lstm_model_forward.1} parent=1 // pred_fallthru
      _
    // Predicated region
    $region18: #{lstm_model_forward.1} parent=1 // pred_check
      _
    $region19: #{lstm_model_forward.1} parent=1 // pred_check_branch
      %35 = sbr.rel (0) target = $region21
    $region20: #{lstm_model_forward.1} parent=1 // pred_region
      %s37 = ssub.s32 8192, 8192
      %38 = vsyncadd [#allocation9], %s37
      %s39 = sshll.u32 [#allocation8], 4
      %s40 = int_to_ptr.vmem [resolvable:$true] %s39
      %45 = dma.hbm_to_vmem [thread:$0]  %s4, 8192, %s40, [#allocation9], 512, 512, 32
    $region21: #{lstm_model_forward.1} parent=1 // pred_fallthru
      _
    // Predicated region
    $region22: #{lstm_model_forward.1} parent=1 // pred_check
      _
    $region23: #{lstm_model_forward.1} parent=1 // pred_check_branch
      %47 = sbr.rel (0) target = $region25
    $region24: #{lstm_model_forward.1} parent=1 // pred_region
      %s49 = ssub.s32 8192, 8192
      %50 = vsyncadd [#allocation9], %s49
      %s51 = sshll.u32 [#allocation10], 4
      %s52 = int_to_ptr.vmem [resolvable:$true] %s51
      %57 = dma.hbm_to_vmem [thread:$0]  %s5, 8192, %s52, [#allocation9], 512, 512, 32
    $region25: #{lstm_model_forward.1} parent=1 // pred_fallthru
      _
    // Predicated region
    $region26: #{lstm_model_forward.1} parent=1 // pred_check
      _
    $region27: #{lstm_model_forward.1} parent=1 // pred_check_branch
      %59 = sbr.rel (0) target = $region29
    $region28: #{lstm_model_forward.1} parent=1 // pred_region
      _
    $region29: #{lstm_model_forward.1} parent=1 // pred_fallthru
      _
    // Predicated region
    $region30: #{lstm_model_forward.1} parent=1 // pred_check
      _
    $region31: #{lstm_model_forward.1} parent=1 // pred_check_branch
      %61 = sbr.rel (0) target = $region33
    $region32: #{lstm_model_forward.1} parent=1 // pred_region
      _
    $region33: #{lstm_model_forward.1} parent=1 // pred_fallthru
      _
    // Predicated region
    $region34: #{lstm_model_forward.1} parent=1 // pred_check
      _
    $region35: #{lstm_model_forward.1} parent=1 // pred_check_branch
      %63 = sbr.rel (0) target = $region37
    $region36: #{lstm_model_forward.1} parent=1 // pred_region
      _
    $region37: #{lstm_model_forward.1} parent=1 // pred_fallthru
      _
    // Predicated region
    $region38: #{lstm_model_forward.1} parent=1 // pred_check
      _
    $region39: #{lstm_model_forward.1} parent=1 // pred_check_branch
      %65 = sbr.rel (0) target = $region41
    $region40: #{lstm_model_forward.1} parent=1 // pred_region
      %66 = dma.done [#allocation7], 8192
    $region41: #{lstm_model_forward.1} parent=1 // pred_fallthru
      _
    // Predicated region
    $region42: #{lstm_model_forward.1} parent=1 // pred_check
      _
    $region43: #{lstm_model_forward.1} parent=1 // pred_check_branch
      %68 = sbr.rel (0) target = $region45
    $region44: #{lstm_model_forward.1} parent=1 // pred_region
      %69 = dma.done [#allocation9], 8192
    $region45: #{lstm_model_forward.1} parent=1 // pred_fallthru
      _
    // Predicated region
    $region46: #{lstm_model_forward.1} parent=1 // pred_check
      _
    $region47: #{lstm_model_forward.1} parent=1 // pred_check_branch
      %71 = sbr.rel (0) target = $region49
    $region48: #{lstm_model_forward.1} parent=1 // pred_region
      %72 = dma.done [#allocation9], 8192
    $region49: #{lstm_model_forward.1} parent=1 // pred_fallthru
      _
    %v73 = vld [vmem:[%s0] sm:$0xff]
    %v74 = vld [vmem:[%s0 + $0x8] sm:$0xff]
    %v75 = vld [vmem:[%s0 + $0x10] sm:$0xff]
    %v76 = vld [vmem:[%s0 + $0x18] sm:$0xff]
    %v77 = vld [vmem:[%s0 + $0x20] sm:$0xff]
    %v78 = vld [vmem:[%s0 + $0x28] sm:$0xff]
    %v79 = vld [vmem:[%s0 + $0x30] sm:$0xff]
    %v80 = vld [vmem:[%s0 + $0x38] sm:$0xff]
    %v81 = vld [vmem:[%s1] sm:$0xff]
    %v82 = vld [vmem:[%s1 + $0x8] sm:$0xff]
    %v83 = vld [vmem:[%s1 + $0x10] sm:$0xff]
    %v84 = vld [vmem:[%s1 + $0x18] sm:$0xff]
    %v85 = vld [vmem:[%s3] sm:$0xf]
    %v87 = vlaneseq
    %v88 = vshrl.u32 %v87, 7
    %v89 = vsub.s32 0, %v88
    %v90 = vrot.slane %v85, %v89
    %v91 = vlaneseq
    %v92 = vshrl.u32 %v91, 7
    %v93 = vsub.s32 1, %v92
    %v94 = vrot.slane %v85, %v93
    %v95 = vlaneseq
    %v96 = vshrl.u32 %v95, 7
    %v97 = vsub.s32 2, %v96
    %v98 = vrot.slane %v85, %v97
    %v99 = vlaneseq
    %v100 = vshrl.u32 %v99, 7
    %v101 = vsub.s32 3, %v100
    %v102 = vrot.slane %v85, %v101
    %vm107 = vcmask 64512
    %v109 = vsel %vm107, %v73, 0
    %v112 = vsel %vm107, %v74, 0
    %v115 = vsel %vm107, %v75, 0
    %v118 = vsel %vm107, %v76, 0
    %v121 = vsel %vm107, %v77, 0
    %v124 = vsel %vm107, %v78, 0
    %v127 = vsel %vm107, %v79, 0
    %v130 = vsel %vm107, %v80, 0
    %132 = vmatprep.subr.mxu0 %v82
    %133 = vmatpush1.msra.mxu0 %v81
    %134 = vmatprep.subr.mxu0 0.0
    %135 = vmatpush1.msra.mxu0 0.0
    %136 = vmatprep.subr.mxu0 0.0
    %137 = vmatpush1.msra.mxu0 0.0
    %138 = vmatprep.subr.mxu0 0.0
    %139 = vmatpush1.msra.mxu0 0.0
    %140 = vmatprep.subr.mxu0 0.0
    %141 = vmatpush1.msra.mxu0 0.0
    %142 = vmatprep.subr.mxu0 0.0
    %143 = vmatpush1.msra.mxu0 0.0
    %144 = vmatprep.subr.mxu0 0.0
    %145 = vmatpush1.msra.mxu0 0.0
    %146 = vmatprep.subr.mxu0 0.0
    %147 = vmatpush1.msra.mxu0 0.0
    %148 = vmatprep.subr.mxu0 0.0
    %149 = vmatpush1.msra.mxu0 0.0
    %150 = vmatprep.subr.mxu0 0.0
    %151 = vmatpush1.msra.mxu0 0.0
    %152 = vmatprep.subr.mxu0 0.0
    %153 = vmatpush1.msra.mxu0 0.0
    %154 = vmatprep.subr.mxu0 0.0
    %155 = vmatpush1.msra.mxu0 0.0
    %156 = vmatprep.subr.mxu0 0.0
    %157 = vmatpush1.msra.mxu0 0.0
    %158 = vmatprep.subr.mxu0 0.0
    %159 = vmatpush1.msra.mxu0 0.0
    %160 = vmatprep.subr.mxu0 0.0
    %161 = vmatpush1.msra.mxu0 0.0
    %162 = vmatprep.subr.mxu0 0.0
    %163 = vmatpush1.msra.mxu0 0.0
    %164 = vmatprep.subr.mxu0 0.0
    %165 = vmatpush1.msra.mxu0 0.0
    %166 = vmatprep.subr.mxu0 0.0
    %167 = vmatpush1.msra.mxu0 0.0
    %168 = vmatprep.subr.mxu0 0.0
    %169 = vmatpush1.msra.mxu0 0.0
    %170 = vmatprep.subr.mxu0 0.0
    %171 = vmatpush1.msra.mxu0 0.0
    %172 = vmatprep.subr.mxu0 0.0
    %173 = vmatpush1.msra.mxu0 0.0
    %174 = vmatprep.subr.mxu0 0.0
    %175 = vmatpush1.msra.mxu0 0.0
    %176 = vmatprep.subr.mxu0 0.0
    %177 = vmatpush1.msra.mxu0 0.0
    %178 = vmatprep.subr.mxu0 0.0
    %179 = vmatpush1.msra.mxu0 0.0
    %180 = vmatprep.subr.mxu0 0.0
    %181 = vmatpush1.msra.mxu0 0.0
    %182 = vmatprep.subr.mxu0 0.0
    %183 = vmatpush1.msra.mxu0 0.0
    %184 = vmatprep.subr.mxu0 0.0
    %185 = vmatpush1.msra.mxu0 0.0
    %186 = vmatprep.subr.mxu0 0.0
    %187 = vmatpush1.msra.mxu0 0.0
    %188 = vmatprep.subr.mxu0 0.0
    %189 = vmatpush1.msra.mxu0 0.0
    %190 = vmatprep.subr.mxu0 0.0
    %191 = vmatpush1.msra.mxu0 0.0
    %192 = vmatprep.subr.mxu0 0.0
    %193 = vmatpush1.msra.mxu0 0.0
    %194 = vmatprep.subr.mxu0 0.0
    %195 = vmatpush1.msra.mxu0 0.0
    %196 = vmatprep.mubr.f32.mxu0 0.0
    %197 = vmatmul.mubr.f32.gmra.mrb[0].mxu0 %v109
    %v198 = vpop.f32.mrb[0].mxu0
    %v199 = vadd.f32 %v90, %v198
    %v200 = vpop.f32.mrb[0].mxu0
    %v201 = vadd.f32 %v94, %v200
    %202 = vmatprep.mubr.f32.mxu0 0.0
    %203 = vmatmul.mubr.f32.gmra.mrb[0].mxu0 %v112
    %v204 = vpop.f32.mrb[0].mxu0
    %v205 = vadd.f32 %v90, %v204
    %v206 = vpop.f32.mrb[0].mxu0
    %v207 = vadd.f32 %v94, %v206
    %208 = vmatprep.mubr.f32.mxu0 0.0
    %209 = vmatmul.mubr.f32.gmra.mrb[0].mxu0 %v115
    %v210 = vpop.f32.mrb[0].mxu0
    %v211 = vadd.f32 %v90, %v210
    %v212 = vpop.f32.mrb[0].mxu0
    %v213 = vadd.f32 %v94, %v212
    %214 = vmatprep.mubr.f32.mxu0 0.0
    %215 = vmatmul.mubr.f32.gmra.mrb[0].mxu0 %v118
    %v216 = vpop.f32.mrb[0].mxu0
    %v217 = vadd.f32 %v90, %v216
    %v218 = vpop.f32.mrb[0].mxu0
    %v219 = vadd.f32 %v94, %v218
    %220 = vmatprep.mubr.f32.mxu0 0.0
    %221 = vmatmul.mubr.f32.gmra.mrb[0].mxu0 %v121
    %v222 = vpop.f32.mrb[0].mxu0
    %v223 = vadd.f32 %v90, %v222
    %v224 = vpop.f32.mrb[0].mxu0
    %v225 = vadd.f32 %v94, %v224
    %226 = vmatprep.mubr.f32.mxu0 0.0
    %227 = vmatmul.mubr.f32.gmra.mrb[0].mxu0 %v124
    %v228 = vpop.f32.mrb[0].mxu0
    %v229 = vadd.f32 %v90, %v228
    %v230 = vpop.f32.mrb[0].mxu0
    %v231 = vadd.f32 %v94, %v230
    %232 = vmatprep.mubr.f32.mxu0 0.0
    %233 = vmatmul.mubr.f32.gmra.mrb[0].mxu0 %v127
    %v234 = vpop.f32.mrb[0].mxu0
    %v235 = vadd.f32 %v90, %v234
    %v236 = vpop.f32.mrb[0].mxu0
    %v237 = vadd.f32 %v94, %v236
    %238 = vmatprep.mubr.f32.mxu0 0.0
    %239 = vmatmul.mubr.f32.gmra.mrb[0].mxu0 %v130
    %v240 = vpop.f32.mrb[0].mxu0
    %v241 = vadd.f32 %v90, %v240
    %v242 = vpop.f32.mrb[0].mxu0
    %v243 = vadd.f32 %v94, %v242
    %244 = vdwg.mxu0
    %245 = vmatprep.subr.mxu0 %v84
    %246 = vmatpush1.msra.mxu0 %v83
    %247 = vmatprep.subr.mxu0 0.0
    %248 = vmatpush1.msra.mxu0 0.0
    %249 = vmatprep.subr.mxu0 0.0
    %250 = vmatpush1.msra.mxu0 0.0
    %251 = vmatprep.subr.mxu0 0.0
    %252 = vmatpush1.msra.mxu0 0.0
    %253 = vmatprep.subr.mxu0 0.0
    %254 = vmatpush1.msra.mxu0 0.0
    %255 = vmatprep.subr.mxu0 0.0
    %256 = vmatpush1.msra.mxu0 0.0
    %257 = vmatprep.subr.mxu0 0.0
    %258 = vmatpush1.msra.mxu0 0.0
    %259 = vmatprep.subr.mxu0 0.0
    %260 = vmatpush1.msra.mxu0 0.0
    %261 = vmatprep.subr.mxu0 0.0
    %262 = vmatpush1.msra.mxu0 0.0
    %263 = vmatprep.subr.mxu0 0.0
    %264 = vmatpush1.msra.mxu0 0.0
    %265 = vmatprep.subr.mxu0 0.0
    %266 = vmatpush1.msra.mxu0 0.0
    %267 = vmatprep.subr.mxu0 0.0
    %268 = vmatpush1.msra.mxu0 0.0
    %269 = vmatprep.subr.mxu0 0.0
    %270 = vmatpush1.msra.mxu0 0.0
    %271 = vmatprep.subr.mxu0 0.0
    %272 = vmatpush1.msra.mxu0 0.0
    %273 = vmatprep.subr.mxu0 0.0
    %274 = vmatpush1.msra.mxu0 0.0
    %275 = vmatprep.subr.mxu0 0.0
    %276 = vmatpush1.msra.mxu0 0.0
    %277 = vmatprep.subr.mxu0 0.0
    %278 = vmatpush1.msra.mxu0 0.0
    %279 = vmatprep.subr.mxu0 0.0
    %280 = vmatpush1.msra.mxu0 0.0
    %281 = vmatprep.subr.mxu0 0.0
    %282 = vmatpush1.msra.mxu0 0.0
    %283 = vmatprep.subr.mxu0 0.0
    %284 = vmatpush1.msra.mxu0 0.0
    %285 = vmatprep.subr.mxu0 0.0
    %286 = vmatpush1.msra.mxu0 0.0
    %287 = vmatprep.subr.mxu0 0.0
    %288 = vmatpush1.msra.mxu0 0.0
    %289 = vmatprep.subr.mxu0 0.0
    %290 = vmatpush1.msra.mxu0 0.0
    %291 = vmatprep.subr.mxu0 0.0
    %292 = vmatpush1.msra.mxu0 0.0
    %293 = vmatprep.subr.mxu0 0.0
    %294 = vmatpush1.msra.mxu0 0.0
    %295 = vmatprep.subr.mxu0 0.0
    %296 = vmatpush1.msra.mxu0 0.0
    %297 = vmatprep.subr.mxu0 0.0
    %298 = vmatpush1.msra.mxu0 0.0
    %299 = vmatprep.subr.mxu0 0.0
    %300 = vmatpush1.msra.mxu0 0.0
    %301 = vmatprep.subr.mxu0 0.0
    %302 = vmatpush1.msra.mxu0 0.0
    %303 = vmatprep.subr.mxu0 0.0
    %304 = vmatpush1.msra.mxu0 0.0
    %305 = vmatprep.subr.mxu0 0.0
    %306 = vmatpush1.msra.mxu0 0.0
    %307 = vmatprep.subr.mxu0 0.0
    %308 = vmatpush1.msra.mxu0 0.0
    %309 = vmatprep.mubr.f32.mxu0 0.0
    %310 = vmatmul.mubr.f32.gmra.mrb[0].mxu0 %v109
    %v311 = vpop.f32.mrb[0].mxu0
    %v312 = vadd.f32 %v98, %v311
    %v313 = vpop.f32.mrb[0].mxu0
    %v314 = vadd.f32 %v102, %v313
    %315 = vmatprep.mubr.f32.mxu0 0.0
    %316 = vmatmul.mubr.f32.gmra.mrb[0].mxu0 %v112
    %v317 = vpop.f32.mrb[0].mxu0
    %v318 = vadd.f32 %v98, %v317
    %v319 = vpop.f32.mrb[0].mxu0
    %v320 = vadd.f32 %v102, %v319
    %321 = vmatprep.mubr.f32.mxu0 0.0
    %322 = vmatmul.mubr.f32.gmra.mrb[0].mxu0 %v115
    %v323 = vpop.f32.mrb[0].mxu0
    %v324 = vadd.f32 %v98, %v323
    %v325 = vpop.f32.mrb[0].mxu0
    %v326 = vadd.f32 %v102, %v325
    %327 = vmatprep.mubr.f32.mxu0 0.0
    %328 = vmatmul.mubr.f32.gmra.mrb[0].mxu0 %v118
    %v329 = vpop.f32.mrb[0].mxu0
    %v330 = vadd.f32 %v98, %v329
    %v331 = vpop.f32.mrb[0].mxu0
    %v332 = vadd.f32 %v102, %v331
    %333 = vmatprep.mubr.f32.mxu0 0.0
    %334 = vmatmul.mubr.f32.gmra.mrb[0].mxu0 %v121
    %v335 = vpop.f32.mrb[0].mxu0
    %v336 = vadd.f32 %v98, %v335
    %v337 = vpop.f32.mrb[0].mxu0
    %v338 = vadd.f32 %v102, %v337
    %339 = vmatprep.mubr.f32.mxu0 0.0
    %340 = vmatmul.mubr.f32.gmra.mrb[0].mxu0 %v124
    %v341 = vpop.f32.mrb[0].mxu0
    %v342 = vadd.f32 %v98, %v341
    %v343 = vpop.f32.mrb[0].mxu0
    %v344 = vadd.f32 %v102, %v343
    %345 = vmatprep.mubr.f32.mxu0 0.0
    %346 = vmatmul.mubr.f32.gmra.mrb[0].mxu0 %v127
    %v347 = vpop.f32.mrb[0].mxu0
    %v348 = vadd.f32 %v98, %v347
    %v349 = vpop.f32.mrb[0].mxu0
    %v350 = vadd.f32 %v102, %v349
    %351 = vmatprep.mubr.f32.mxu0 0.0
    %352 = vmatmul.mubr.f32.gmra.mrb[0].mxu0 %v130
    %v353 = vpop.f32.mrb[0].mxu0
    %v354 = vadd.f32 %v98, %v353
    %v355 = vpop.f32.mrb[0].mxu0
    %v356 = vadd.f32 %v102, %v355
    %357 = vdwg.mxu0
    %358 = vst [vmem:[#allocation2] sm:$0xff] %v199
    %359 = vst [vmem:[#allocation2 + $0x8] sm:$0xff] %v201
    %360 = vst [vmem:[#allocation2 + $0x10] sm:$0xff] %v312
    %361 = vst [vmem:[#allocation2 + $0x18] sm:$0xff] %v314
    %362 = vst [vmem:[#allocation2 + $0x20] sm:$0xff] %v205
    %363 = vst [vmem:[#allocation2 + $0x28] sm:$0xff] %v207
    %364 = vst [vmem:[#allocation2 + $0x30] sm:$0xff] %v318
    %365 = vst [vmem:[#allocation2 + $0x38] sm:$0xff] %v320
    %366 = vst [vmem:[#allocation2 + $0x40] sm:$0xff] %v211
    %367 = vst [vmem:[#allocation2 + $0x48] sm:$0xff] %v213
    %368 = vst [vmem:[#allocation2 + $0x50] sm:$0xff] %v324
    %369 = vst [vmem:[#allocation2 + $0x58] sm:$0xff] %v326
    %370 = vst [vmem:[#allocation2 + $0x60] sm:$0xff] %v217
    %371 = vst [vmem:[#allocation2 + $0x68] sm:$0xff] %v219
    %372 = vst [vmem:[#allocation2 + $0x70] sm:$0xff] %v330
    %373 = vst [vmem:[#allocation2 + $0x78] sm:$0xff] %v332
    %374 = vst [vmem:[#allocation2 + $0x80] sm:$0xff] %v223
    %375 = vst [vmem:[#allocation2 + $0x88] sm:$0xff] %v225
    %376 = vst [vmem:[#allocation2 + $0x90] sm:$0xff] %v336
    %377 = vst [vmem:[#allocation2 + $0x98] sm:$0xff] %v338
    %378 = vst [vmem:[#allocation2 + $0xa0] sm:$0xff] %v229
    %379 = vst [vmem:[#allocation2 + $0xa8] sm:$0xff] %v231
    %380 = vst [vmem:[#allocation2 + $0xb0] sm:$0xff] %v342
    %381 = vst [vmem:[#allocation2 + $0xb8] sm:$0xff] %v344
    %382 = vst [vmem:[#allocation2 + $0xc0] sm:$0xff] %v235
    %383 = vst [vmem:[#allocation2 + $0xc8] sm:$0xff] %v237
    %384 = vst [vmem:[#allocation2 + $0xd0] sm:$0xff] %v348
    %385 = vst [vmem:[#allocation2 + $0xd8] sm:$0xff] %v350
    %386 = vst [vmem:[#allocation2 + $0xe0] sm:$0xff] %v241
    %387 = vst [vmem:[#allocation2 + $0xe8] sm:$0xff] %v243
    %388 = vst [vmem:[#allocation2 + $0xf0] sm:$0xff] %v354
    %389 = vst [vmem:[#allocation2 + $0xf8] sm:$0xff] %v356
    %390 = vst [vmem:[#allocation4] sm:$0xff] 0.0
    %391 = vst [vmem:[#allocation5] sm:$0xff] 0.0
    %v392 = vld [vmem:[#allocation6] sm:$0xff]
    %v393 = vld [vmem:[#allocation6 + $0x8] sm:$0xff]
    %v394 = vld [vmem:[#allocation6 + $0x10] sm:$0xff]
    %v395 = vld [vmem:[#allocation6 + $0x18] sm:$0xff]
    %v396 = vld [vmem:[#allocation6 + $0x20] sm:$0xff]
    %v397 = vld [vmem:[#allocation6 + $0x28] sm:$0xff]
    %v398 = vld [vmem:[#allocation6 + $0x30] sm:$0xff]
    %v399 = vld [vmem:[#allocation6 + $0x38] sm:$0xff]
    %v400 = vld [vmem:[#allocation6 + $0x40] sm:$0xff]
    %v401 = vld [vmem:[#allocation6 + $0x48] sm:$0xff]
    %v402 = vld [vmem:[#allocation6 + $0x50] sm:$0xff]
    %v403 = vld [vmem:[#allocation6 + $0x58] sm:$0xff]
    %v404 = vld [vmem:[#allocation6 + $0x60] sm:$0xff]
    %v405 = vld [vmem:[#allocation6 + $0x68] sm:$0xff]
    %v406 = vld [vmem:[#allocation6 + $0x70] sm:$0xff]
    %v407 = vld [vmem:[#allocation6 + $0x78] sm:$0xff]
    %v408 = vld [vmem:[#allocation6 + $0x80] sm:$0xff]
    %v409 = vld [vmem:[#allocation6 + $0x88] sm:$0xff]
    %v410 = vld [vmem:[#allocation6 + $0x90] sm:$0xff]
    %v411 = vld [vmem:[#allocation6 + $0x98] sm:$0xff]
    %v412 = vld [vmem:[#allocation6 + $0xa0] sm:$0xff]
    %v413 = vld [vmem:[#allocation6 + $0xa8] sm:$0xff]
    %v414 = vld [vmem:[#allocation6 + $0xb0] sm:$0xff]
    %v415 = vld [vmem:[#allocation6 + $0xb8] sm:$0xff]
    %v416 = vld [vmem:[#allocation6 + $0xc0] sm:$0xff]
    %v417 = vld [vmem:[#allocation6 + $0xc8] sm:$0xff]
    %v418 = vld [vmem:[#allocation6 + $0xd0] sm:$0xff]
    %v419 = vld [vmem:[#allocation6 + $0xd8] sm:$0xff]
    %v420 = vld [vmem:[#allocation6 + $0xe0] sm:$0xff]
    %v421 = vld [vmem:[#allocation6 + $0xe8] sm:$0xff]
    %v422 = vld [vmem:[#allocation6 + $0xf0] sm:$0xff]
    %v423 = vld [vmem:[#allocation6 + $0xf8] sm:$0xff]
    %v424 = vld [vmem:[#allocation6 + $0x100] sm:$0xff]
    %v425 = vld [vmem:[#allocation6 + $0x108] sm:$0xff]
    %v426 = vld [vmem:[#allocation6 + $0x110] sm:$0xff]
    %v427 = vld [vmem:[#allocation6 + $0x118] sm:$0xff]
    %v428 = vld [vmem:[#allocation6 + $0x120] sm:$0xff]
    %v429 = vld [vmem:[#allocation6 + $0x128] sm:$0xff]
    %v430 = vld [vmem:[#allocation6 + $0x130] sm:$0xff]
    %v431 = vld [vmem:[#allocation6 + $0x138] sm:$0xff]
    %v432 = vld [vmem:[#allocation6 + $0x140] sm:$0xff]
    %v433 = vld [vmem:[#allocation6 + $0x148] sm:$0xff]
    %v434 = vld [vmem:[#allocation6 + $0x150] sm:$0xff]
    %v435 = vld [vmem:[#allocation6 + $0x158] sm:$0xff]
    %v436 = vld [vmem:[#allocation6 + $0x160] sm:$0xff]
    %v437 = vld [vmem:[#allocation6 + $0x168] sm:$0xff]
    %v438 = vld [vmem:[#allocation6 + $0x170] sm:$0xff]
    %v439 = vld [vmem:[#allocation6 + $0x178] sm:$0xff]
    %v440 = vld [vmem:[#allocation6 + $0x180] sm:$0xff]
    %v441 = vld [vmem:[#allocation6 + $0x188] sm:$0xff]
    %v442 = vld [vmem:[#allocation6 + $0x190] sm:$0xff]
    %v443 = vld [vmem:[#allocation6 + $0x198] sm:$0xff]
    %v444 = vld [vmem:[#allocation6 + $0x1a0] sm:$0xff]
    %v445 = vld [vmem:[#allocation6 + $0x1a8] sm:$0xff]
    %v446 = vld [vmem:[#allocation6 + $0x1b0] sm:$0xff]
    %v447 = vld [vmem:[#allocation6 + $0x1b8] sm:$0xff]
    %v448 = vld [vmem:[#allocation6 + $0x1c0] sm:$0xff]
    %v449 = vld [vmem:[#allocation6 + $0x1c8] sm:$0xff]
    %v450 = vld [vmem:[#allocation6 + $0x1d0] sm:$0xff]
    %v451 = vld [vmem:[#allocation6 + $0x1d8] sm:$0xff]
    %v452 = vld [vmem:[#allocation6 + $0x1e0] sm:$0xff]
    %v453 = vld [vmem:[#allocation6 + $0x1e8] sm:$0xff]
    %v454 = vld [vmem:[#allocation6 + $0x1f0] sm:$0xff]
    %v455 = vld [vmem:[#allocation6 + $0x1f8] sm:$0xff]
    %s456 = smul.u32 0, 4
    %s457 = smul.addr %s456, 8
    %s458 = scalar_lea.vmem [#allocation2], %s457
    %v459 = vld [vmem:[%s458] sm:$0xff]
    %v460 = vld [vmem:[%s458 + $0x8] sm:$0xff]
    %v461 = vld [vmem:[%s458 + $0x10] sm:$0xff]
    %v462 = vld [vmem:[%s458 + $0x18] sm:$0xff]
    %v463 = vld [vmem:[#allocation4] sm:$0xff]
    %464 = vmatprep.subr.mxu0 %v393
    %465 = vmatpush1.msra.mxu0 %v392
    %466 = vmatprep.subr.mxu0 %v397
    %467 = vmatpush1.msra.mxu0 %v396
    %468 = vmatprep.subr.mxu0 %v401
    %469 = vmatpush1.msra.mxu0 %v400
    %470 = vmatprep.subr.mxu0 %v405
    %471 = vmatpush1.msra.mxu0 %v404
    %472 = vmatprep.subr.mxu0 %v409
    %473 = vmatpush1.msra.mxu0 %v408
    %474 = vmatprep.subr.mxu0 %v413
    %475 = vmatpush1.msra.mxu0 %v412
    %476 = vmatprep.subr.mxu0 %v417
    %477 = vmatpush1.msra.mxu0 %v416
    %478 = vmatprep.subr.mxu0 %v421
    %479 = vmatpush1.msra.mxu0 %v420
    %480 = vmatprep.subr.mxu0 %v425
    %481 = vmatpush1.msra.mxu0 %v424
    %482 = vmatprep.subr.mxu0 %v429
    %483 = vmatpush1.msra.mxu0 %v428
    %484 = vmatprep.subr.mxu0 %v433
    %485 = vmatpush1.msra.mxu0 %v432
    %486 = vmatprep.subr.mxu0 %v437
    %487 = vmatpush1.msra.mxu0 %v436
    %488 = vmatprep.subr.mxu0 %v441
    %489 = vmatpush1.msra.mxu0 %v440
    %490 = vmatprep.subr.mxu0 %v445
    %491 = vmatpush1.msra.mxu0 %v444
    %492 = vmatprep.subr.mxu0 %v449
    %493 = vmatpush1.msra.mxu0 %v448
    %494 = vmatprep.subr.mxu0 %v453
    %495 = vmatpush1.msra.mxu0 %v452
    %496 = vmatprep.subr.mxu0 0.0
    %497 = vmatpush1.msra.mxu0 0.0
    %498 = vmatprep.subr.mxu0 0.0
    %499 = vmatpush1.msra.mxu0 0.0
    %500 = vmatprep.subr.mxu0 0.0
    %501 = vmatpush1.msra.mxu0 0.0
    %502 = vmatprep.subr.mxu0 0.0
    %503 = vmatpush1.msra.mxu0 0.0
    %504 = vmatprep.subr.mxu0 0.0
    %505 = vmatpush1.msra.mxu0 0.0
    %506 = vmatprep.subr.mxu0 0.0
    %507 = vmatpush1.msra.mxu0 0.0
    %508 = vmatprep.subr.mxu0 0.0
    %509 = vmatpush1.msra.mxu0 0.0
    %510 = vmatprep.subr.mxu0 0.0
    %511 = vmatpush1.msra.mxu0 0.0
    %512 = vmatprep.subr.mxu0 0.0
    %513 = vmatpush1.msra.mxu0 0.0
    %514 = vmatprep.subr.mxu0 0.0
    %515 = vmatpush1.msra.mxu0 0.0
    %516 = vmatprep.subr.mxu0 0.0
    %517 = vmatpush1.msra.mxu0 0.0
    %518 = vmatprep.subr.mxu0 0.0
    %519 = vmatpush1.msra.mxu0 0.0
    %520 = vmatprep.subr.mxu0 0.0
    %521 = vmatpush1.msra.mxu0 0.0
    %522 = vmatprep.subr.mxu0 0.0
    %523 = vmatpush1.msra.mxu0 0.0
    %524 = vmatprep.subr.mxu0 0.0
    %525 = vmatpush1.msra.mxu0 0.0
    %526 = vmatprep.subr.mxu0 0.0
    %527 = vmatpush1.msra.mxu0 0.0
    %528 = vmatprep.mubr.f32.mxu0 0.0
    %529 = vmatmul.mubr.f32.gmra.mrb[0].mxu0 %v463
    %v530 = vpop.f32.mrb[0].mxu0
    %v531 = vadd.f32 0.0, %v530
    %v532 = vpop.f32.mrb[0].mxu0
    %v533 = vadd.f32 0.0, %v532
    %534 = vdwg.mxu0
    %535 = vmatprep.subr.mxu0 %v395
    %536 = vmatpush1.msra.mxu0 %v394
    %537 = vmatprep.subr.mxu0 %v399
    %538 = vmatpush1.msra.mxu0 %v398
    %539 = vmatprep.subr.mxu0 %v403
    %540 = vmatpush1.msra.mxu0 %v402
    %541 = vmatprep.subr.mxu0 %v407
    %542 = vmatpush1.msra.mxu0 %v406
    %543 = vmatprep.subr.mxu0 %v411
    %544 = vmatpush1.msra.mxu0 %v410
    %545 = vmatprep.subr.mxu0 %v415
    %546 = vmatpush1.msra.mxu0 %v414
    %547 = vmatprep.subr.mxu0 %v419
    %548 = vmatpush1.msra.mxu0 %v418
    %549 = vmatprep.subr.mxu0 %v423
    %550 = vmatpush1.msra.mxu0 %v422
    %551 = vmatprep.subr.mxu0 %v427
    %552 = vmatpush1.msra.mxu0 %v426
    %553 = vmatprep.subr.mxu0 %v431
    %554 = vmatpush1.msra.mxu0 %v430
    %555 = vmatprep.subr.mxu0 %v435
    %556 = vmatpush1.msra.mxu0 %v434
    %557 = vmatprep.subr.mxu0 %v439
    %558 = vmatpush1.msra.mxu0 %v438
    %559 = vmatprep.subr.mxu0 %v443
    %560 = vmatpush1.msra.mxu0 %v442
    %561 = vmatprep.subr.mxu0 %v447
    %562 = vmatpush1.msra.mxu0 %v446
    %563 = vmatprep.subr.mxu0 %v451
    %564 = vmatpush1.msra.mxu0 %v450
    %565 = vmatprep.subr.mxu0 %v455
    %566 = vmatpush1.msra.mxu0 %v454
    %567 = vmatprep.subr.mxu0 0.0
    %568 = vmatpush1.msra.mxu0 0.0
    %569 = vmatprep.subr.mxu0 0.0
    %570 = vmatpush1.msra.mxu0 0.0
    %571 = vmatprep.subr.mxu0 0.0
    %572 = vmatpush1.msra.mxu0 0.0
    %573 = vmatprep.subr.mxu0 0.0
    %574 = vmatpush1.msra.mxu0 0.0
    %575 = vmatprep.subr.mxu0 0.0
    %576 = vmatpush1.msra.mxu0 0.0
    %577 = vmatprep.subr.mxu0 0.0
    %578 = vmatpush1.msra.mxu0 0.0
    %579 = vmatprep.subr.mxu0 0.0
    %580 = vmatpush1.msra.mxu0 0.0
    %581 = vmatprep.subr.mxu0 0.0
    %582 = vmatpush1.msra.mxu0 0.0
    %583 = vmatprep.subr.mxu0 0.0
    %584 = vmatpush1.msra.mxu0 0.0
    %585 = vmatprep.subr.mxu0 0.0
    %586 = vmatpush1.msra.mxu0 0.0
    %587 = vmatprep.subr.mxu0 0.0
    %588 = vmatpush1.msra.mxu0 0.0
    %589 = vmatprep.subr.mxu0 0.0
    %590 = vmatpush1.msra.mxu0 0.0
    %591 = vmatprep.subr.mxu0 0.0
    %592 = vmatpush1.msra.mxu0 0.0
    %593 = vmatprep.subr.mxu0 0.0
    %594 = vmatpush1.msra.mxu0 0.0
    %595 = vmatprep.subr.mxu0 0.0
    %596 = vmatpush1.msra.mxu0 0.0
    %597 = vmatprep.subr.mxu0 0.0
    %598 = vmatpush1.msra.mxu0 0.0
    %599 = vmatprep.mubr.f32.mxu0 0.0
    %600 = vmatmul.mubr.f32.gmra.mrb[0].mxu0 %v463
    %v601 = vpop.f32.mrb[0].mxu0
    %v602 = vadd.f32 0.0, %v601
    %v603 = vpop.f32.mrb[0].mxu0
    %v604 = vadd.f32 0.0, %v603
    %605 = vdwg.mxu0
    %v606 = vadd.f32 %v459, %v531
    %v607 = vadd.f32 %v460, %v533
    %v608 = vadd.f32 %v461, %v602
    %v609 = vadd.f32 %v462, %v604
    %v610 = vxor.u32 %v606, 2147483648
    %v611 = vxor.u32 %v607, 2147483648
    %v612 = vxor.u32 %v608, 2147483648
    %v613 = vmul.f32 %v610, 1.442695
    %v614 = vpow.pop %v613
    %v615 = vmul.f32 %v611, 1.442695
    %v616 = vpow.pop %v615
    %v617 = vmul.f32 %v612, 1.442695
    %v618 = vpow.pop %v617
    %v619 = vadd.f32 %v614, 1.0
    %v620 = vadd.f32 %v616, 1.0
    %v621 = vadd.f32 %v618, 1.0
    %v622 = vrcp.pop %v619
    %v623 = vmul.f32 1.0, %v622
    %v624 = vrcp.pop %v620
    %v625 = vmul.f32 1.0, %v624
    %v626 = vrcp.pop %v621
    %v627 = vmul.f32 1.0, %v626
    %v628 = vtanh.pop %v609
    %v629 = vld [vmem:[#allocation5] sm:$0xff]
    %v630 = vmul.f32 %v625, %v629
    %v631 = vmul.f32 %v623, %v628
    %v632 = vadd.f32 %v630, %v631
    %v633 = vtanh.pop %v632
    %v634 = vmul.f32 %v627, %v633
    %635 = vst [vmem:[#allocation5] sm:$0xff] %v632
    %636 = vst [vmem:[#allocation4] sm:$0xff] %v634
    %637 = vst [vmem:[#allocation3] sm:$0xff] %v634
    %s638 = smul.u32 1, 4
    %s639 = smul.addr %s638, 8
    %s640 = scalar_lea.vmem [#allocation2], %s639
    %v641 = vld [vmem:[%s640] sm:$0xff]
    %v642 = vld [vmem:[%s640 + $0x8] sm:$0xff]
    %v643 = vld [vmem:[%s640 + $0x10] sm:$0xff]
    %v644 = vld [vmem:[%s640 + $0x18] sm:$0xff]
    %v645 = vld [vmem:[#allocation4] sm:$0xff]
    %646 = vmatprep.subr.mxu0 %v393
    %647 = vmatpush1.msra.mxu0 %v392
    %648 = vmatprep.subr.mxu0 %v397
    %649 = vmatpush1.msra.mxu0 %v396
    %650 = vmatprep.subr.mxu0 %v401
    %651 = vmatpush1.msra.mxu0 %v400
    %652 = vmatprep.subr.mxu0 %v405
    %653 = vmatpush1.msra.mxu0 %v404
    %654 = vmatprep.subr.mxu0 %v409
    %655 = vmatpush1.msra.mxu0 %v408
    %656 = vmatprep.subr.mxu0 %v413
    %657 = vmatpush1.msra.mxu0 %v412
    %658 = vmatprep.subr.mxu0 %v417
    %659 = vmatpush1.msra.mxu0 %v416
    %660 = vmatprep.subr.mxu0 %v421
    %661 = vmatpush1.msra.mxu0 %v420
    %662 = vmatprep.subr.mxu0 %v425
    %663 = vmatpush1.msra.mxu0 %v424
    %664 = vmatprep.subr.mxu0 %v429
    %665 = vmatpush1.msra.mxu0 %v428
    %666 = vmatprep.subr.mxu0 %v433
    %667 = vmatpush1.msra.mxu0 %v432
    %668 = vmatprep.subr.mxu0 %v437
    %669 = vmatpush1.msra.mxu0 %v436
    %670 = vmatprep.subr.mxu0 %v441
    %671 = vmatpush1.msra.mxu0 %v440
    %672 = vmatprep.subr.mxu0 %v445
    %673 = vmatpush1.msra.mxu0 %v444
    %674 = vmatprep.subr.mxu0 %v449
    %675 = vmatpush1.msra.mxu0 %v448
    %676 = vmatprep.subr.mxu0 %v453
    %677 = vmatpush1.msra.mxu0 %v452
    %678 = vmatprep.subr.mxu0 0.0
    %679 = vmatpush1.msra.mxu0 0.0
    %680 = vmatprep.subr.mxu0 0.0
    %681 = vmatpush1.msra.mxu0 0.0
    %682 = vmatprep.subr.mxu0 0.0
    %683 = vmatpush1.msra.mxu0 0.0
    %684 = vmatprep.subr.mxu0 0.0
    %685 = vmatpush1.msra.mxu0 0.0
    %686 = vmatprep.subr.mxu0 0.0
    %687 = vmatpush1.msra.mxu0 0.0
    %688 = vmatprep.subr.mxu0 0.0
    %689 = vmatpush1.msra.mxu0 0.0
    %690 = vmatprep.subr.mxu0 0.0
    %691 = vmatpush1.msra.mxu0 0.0
    %692 = vmatprep.subr.mxu0 0.0
    %693 = vmatpush1.msra.mxu0 0.0
    %694 = vmatprep.subr.mxu0 0.0
    %695 = vmatpush1.msra.mxu0 0.0
    %696 = vmatprep.subr.mxu0 0.0
    %697 = vmatpush1.msra.mxu0 0.0
    %698 = vmatprep.subr.mxu0 0.0
    %699 = vmatpush1.msra.mxu0 0.0
    %700 = vmatprep.subr.mxu0 0.0
    %701 = vmatpush1.msra.mxu0 0.0
    %702 = vmatprep.subr.mxu0 0.0
    %703 = vmatpush1.msra.mxu0 0.0
    %704 = vmatprep.subr.mxu0 0.0
    %705 = vmatpush1.msra.mxu0 0.0
    %706 = vmatprep.subr.mxu0 0.0
    %707 = vmatpush1.msra.mxu0 0.0
    %708 = vmatprep.subr.mxu0 0.0
    %709 = vmatpush1.msra.mxu0 0.0
    %710 = vmatprep.mubr.f32.mxu0 0.0
    %711 = vmatmul.mubr.f32.gmra.mrb[0].mxu0 %v645
    %v712 = vpop.f32.mrb[0].mxu0
    %v713 = vadd.f32 0.0, %v712
    %v714 = vpop.f32.mrb[0].mxu0
    %v715 = vadd.f32 0.0, %v714
    %716 = vdwg.mxu0
    %717 = vmatprep.subr.mxu0 %v395
    %718 = vmatpush1.msra.mxu0 %v394
    %719 = vmatprep.subr.mxu0 %v399
    %720 = vmatpush1.msra.mxu0 %v398
    %721 = vmatprep.subr.mxu0 %v403
    %722 = vmatpush1.msra.mxu0 %v402
    %723 = vmatprep.subr.mxu0 %v407
    %724 = vmatpush1.msra.mxu0 %v406
    %725 = vmatprep.subr.mxu0 %v411
    %726 = vmatpush1.msra.mxu0 %v410
    %727 = vmatprep.subr.mxu0 %v415
    %728 = vmatpush1.msra.mxu0 %v414
    %729 = vmatprep.subr.mxu0 %v419
    %730 = vmatpush1.msra.mxu0 %v418
    %731 = vmatprep.subr.mxu0 %v423
    %732 = vmatpush1.msra.mxu0 %v422
    %733 = vmatprep.subr.mxu0 %v427
    %734 = vmatpush1.msra.mxu0 %v426
    %735 = vmatprep.subr.mxu0 %v431
    %736 = vmatpush1.msra.mxu0 %v430
    %737 = vmatprep.subr.mxu0 %v435
    %738 = vmatpush1.msra.mxu0 %v434
    %739 = vmatprep.subr.mxu0 %v439
    %740 = vmatpush1.msra.mxu0 %v438
    %741 = vmatprep.subr.mxu0 %v443
    %742 = vmatpush1.msra.mxu0 %v442
    %743 = vmatprep.subr.mxu0 %v447
    %744 = vmatpush1.msra.mxu0 %v446
    %745 = vmatprep.subr.mxu0 %v451
    %746 = vmatpush1.msra.mxu0 %v450
    %747 = vmatprep.subr.mxu0 %v455
    %748 = vmatpush1.msra.mxu0 %v454
    %749 = vmatprep.subr.mxu0 0.0
    %750 = vmatpush1.msra.mxu0 0.0
    %751 = vmatprep.subr.mxu0 0.0
    %752 = vmatpush1.msra.mxu0 0.0
    %753 = vmatprep.subr.mxu0 0.0
    %754 = vmatpush1.msra.mxu0 0.0
    %755 = vmatprep.subr.mxu0 0.0
    %756 = vmatpush1.msra.mxu0 0.0
    %757 = vmatprep.subr.mxu0 0.0
    %758 = vmatpush1.msra.mxu0 0.0
    %759 = vmatprep.subr.mxu0 0.0
    %760 = vmatpush1.msra.mxu0 0.0
    %761 = vmatprep.subr.mxu0 0.0
    %762 = vmatpush1.msra.mxu0 0.0
    %763 = vmatprep.subr.mxu0 0.0
    %764 = vmatpush1.msra.mxu0 0.0
    %765 = vmatprep.subr.mxu0 0.0
    %766 = vmatpush1.msra.mxu0 0.0
    %767 = vmatprep.subr.mxu0 0.0
    %768 = vmatpush1.msra.mxu0 0.0
    %769 = vmatprep.subr.mxu0 0.0
    %770 = vmatpush1.msra.mxu0 0.0
    %771 = vmatprep.subr.mxu0 0.0
    %772 = vmatpush1.msra.mxu0 0.0
    %773 = vmatprep.subr.mxu0 0.0
    %774 = vmatpush1.msra.mxu0 0.0
    %775 = vmatprep.subr.mxu0 0.0
    %776 = vmatpush1.msra.mxu0 0.0
    %777 = vmatprep.subr.mxu0 0.0
    %778 = vmatpush1.msra.mxu0 0.0
    %779 = vmatprep.subr.mxu0 0.0
    %780 = vmatpush1.msra.mxu0 0.0
    %781 = vmatprep.mubr.f32.mxu0 0.0
    %782 = vmatmul.mubr.f32.gmra.mrb[0].mxu0 %v645
    %v783 = vpop.f32.mrb[0].mxu0
    %v784 = vadd.f32 0.0, %v783
    %v785 = vpop.f32.mrb[0].mxu0
    %v786 = vadd.f32 0.0, %v785
    %787 = vdwg.mxu0
    %v788 = vadd.f32 %v641, %v713
    %v789 = vadd.f32 %v642, %v715
    %v790 = vadd.f32 %v643, %v784
    %v791 = vadd.f32 %v644, %v786
    %v792 = vxor.u32 %v788, 2147483648
    %v793 = vxor.u32 %v789, 2147483648
    %v794 = vxor.u32 %v790, 2147483648
    %v795 = vmul.f32 %v792, 1.442695
    %v796 = vpow.pop %v795
    %v797 = vmul.f32 %v793, 1.442695
    %v798 = vpow.pop %v797
    %v799 = vmul.f32 %v794, 1.442695
    %v800 = vpow.pop %v799
    %v801 = vadd.f32 %v796, 1.0
    %v802 = vadd.f32 %v798, 1.0
    %v803 = vadd.f32 %v800, 1.0
    %v804 = vrcp.pop %v801
    %v805 = vmul.f32 1.0, %v804
    %v806 = vrcp.pop %v802
    %v807 = vmul.f32 1.0, %v806
    %v808 = vrcp.pop %v803
    %v809 = vmul.f32 1.0, %v808
    %v810 = vtanh.pop %v791
    %v811 = vld [vmem:[#allocation5] sm:$0xff]
    %v812 = vmul.f32 %v807, %v811
    %v813 = vmul.f32 %v805, %v810
    %v814 = vadd.f32 %v812, %v813
    %v815 = vtanh.pop %v814
    %v816 = vmul.f32 %v809, %v815
    %817 = vst [vmem:[#allocation5] sm:$0xff] %v814
    %818 = vst [vmem:[#allocation4] sm:$0xff] %v816
    %s819 = scalar_lea.vmem [#allocation3], 8
    %820 = vst [vmem:[%s819] sm:$0xff] %v816
    %s821 = smul.u32 2, 4
    %s822 = smul.addr %s821, 8
    %s823 = scalar_lea.vmem [#allocation2], %s822
    %v824 = vld [vmem:[%s823] sm:$0xff]
    %v825 = vld [vmem:[%s823 + $0x8] sm:$0xff]
    %v826 = vld [vmem:[%s823 + $0x10] sm:$0xff]
    %v827 = vld [vmem:[%s823 + $0x18] sm:$0xff]
    %v828 = vld [vmem:[#allocation4] sm:$0xff]
    %829 = vmatprep.subr.mxu0 %v393
    %830 = vmatpush1.msra.mxu0 %v392
    %831 = vmatprep.subr.mxu0 %v397
    %832 = vmatpush1.msra.mxu0 %v396
    %833 = vmatprep.subr.mxu0 %v401
    %834 = vmatpush1.msra.mxu0 %v400
    %835 = vmatprep.subr.mxu0 %v405
    %836 = vmatpush1.msra.mxu0 %v404
    %837 = vmatprep.subr.mxu0 %v409
    %838 = vmatpush1.msra.mxu0 %v408
    %839 = vmatprep.subr.mxu0 %v413
    %840 = vmatpush1.msra.mxu0 %v412
    %841 = vmatprep.subr.mxu0 %v417
    %842 = vmatpush1.msra.mxu0 %v416
    %843 = vmatprep.subr.mxu0 %v421
    %844 = vmatpush1.msra.mxu0 %v420
    %845 = vmatprep.subr.mxu0 %v425
    %846 = vmatpush1.msra.mxu0 %v424
    %847 = vmatprep.subr.mxu0 %v429
    %848 = vmatpush1.msra.mxu0 %v428
    %849 = vmatprep.subr.mxu0 %v433
    %850 = vmatpush1.msra.mxu0 %v432
    %851 = vmatprep.subr.mxu0 %v437
    %852 = vmatpush1.msra.mxu0 %v436
    %853 = vmatprep.subr.mxu0 %v441
    %854 = vmatpush1.msra.mxu0 %v440
    %855 = vmatprep.subr.mxu0 %v445
    %856 = vmatpush1.msra.mxu0 %v444
    %857 = vmatprep.subr.mxu0 %v449
    %858 = vmatpush1.msra.mxu0 %v448
    %859 = vmatprep.subr.mxu0 %v453
    %860 = vmatpush1.msra.mxu0 %v452
    %861 = vmatprep.subr.mxu0 0.0
    %862 = vmatpush1.msra.mxu0 0.0
    %863 = vmatprep.subr.mxu0 0.0
    %864 = vmatpush1.msra.mxu0 0.0
    %865 = vmatprep.subr.mxu0 0.0
    %866 = vmatpush1.msra.mxu0 0.0
    %867 = vmatprep.subr.mxu0 0.0
    %868 = vmatpush1.msra.mxu0 0.0
    %869 = vmatprep.subr.mxu0 0.0
    %870 = vmatpush1.msra.mxu0 0.0
    %871 = vmatprep.subr.mxu0 0.0
    %872 = vmatpush1.msra.mxu0 0.0
    %873 = vmatprep.subr.mxu0 0.0
    %874 = vmatpush1.msra.mxu0 0.0
    %875 = vmatprep.subr.mxu0 0.0
    %876 = vmatpush1.msra.mxu0 0.0
    %877 = vmatprep.subr.mxu0 0.0
    %878 = vmatpush1.msra.mxu0 0.0
    %879 = vmatprep.subr.mxu0 0.0
    %880 = vmatpush1.msra.mxu0 0.0
    %881 = vmatprep.subr.mxu0 0.0
    %882 = vmatpush1.msra.mxu0 0.0
    %883 = vmatprep.subr.mxu0 0.0
    %884 = vmatpush1.msra.mxu0 0.0
    %885 = vmatprep.subr.mxu0 0.0
    %886 = vmatpush1.msra.mxu0 0.0
    %887 = vmatprep.subr.mxu0 0.0
    %888 = vmatpush1.msra.mxu0 0.0
    %889 = vmatprep.subr.mxu0 0.0
    %890 = vmatpush1.msra.mxu0 0.0
    %891 = vmatprep.subr.mxu0 0.0
    %892 = vmatpush1.msra.mxu0 0.0
    %893 = vmatprep.mubr.f32.mxu0 0.0
    %894 = vmatmul.mubr.f32.gmra.mrb[0].mxu0 %v828
    %v895 = vpop.f32.mrb[0].mxu0
    %v896 = vadd.f32 0.0, %v895
    %v897 = vpop.f32.mrb[0].mxu0
    %v898 = vadd.f32 0.0, %v897
    %899 = vdwg.mxu0
    %900 = vmatprep.subr.mxu0 %v395
    %901 = vmatpush1.msra.mxu0 %v394
    %902 = vmatprep.subr.mxu0 %v399
    %903 = vmatpush1.msra.mxu0 %v398
    %904 = vmatprep.subr.mxu0 %v403
    %905 = vmatpush1.msra.mxu0 %v402
    %906 = vmatprep.subr.mxu0 %v407
    %907 = vmatpush1.msra.mxu0 %v406
    %908 = vmatprep.subr.mxu0 %v411
    %909 = vmatpush1.msra.mxu0 %v410
    %910 = vmatprep.subr.mxu0 %v415
    %911 = vmatpush1.msra.mxu0 %v414
    %912 = vmatprep.subr.mxu0 %v419
    %913 = vmatpush1.msra.mxu0 %v418
    %914 = vmatprep.subr.mxu0 %v423
    %915 = vmatpush1.msra.mxu0 %v422
    %916 = vmatprep.subr.mxu0 %v427
    %917 = vmatpush1.msra.mxu0 %v426
    %918 = vmatprep.subr.mxu0 %v431
    %919 = vmatpush1.msra.mxu0 %v430
    %920 = vmatprep.subr.mxu0 %v435
    %921 = vmatpush1.msra.mxu0 %v434
    %922 = vmatprep.subr.mxu0 %v439
    %923 = vmatpush1.msra.mxu0 %v438
    %924 = vmatprep.subr.mxu0 %v443
    %925 = vmatpush1.msra.mxu0 %v442
    %926 = vmatprep.subr.mxu0 %v447
    %927 = vmatpush1.msra.mxu0 %v446
    %928 = vmatprep.subr.mxu0 %v451
    %929 = vmatpush1.msra.mxu0 %v450
    %930 = vmatprep.subr.mxu0 %v455
    %931 = vmatpush1.msra.mxu0 %v454
    %932 = vmatprep.subr.mxu0 0.0
    %933 = vmatpush1.msra.mxu0 0.0
    %934 = vmatprep.subr.mxu0 0.0
    %935 = vmatpush1.msra.mxu0 0.0
    %936 = vmatprep.subr.mxu0 0.0
    %937 = vmatpush1.msra.mxu0 0.0
    %938 = vmatprep.subr.mxu0 0.0
    %939 = vmatpush1.msra.mxu0 0.0
    %940 = vmatprep.subr.mxu0 0.0
    %941 = vmatpush1.msra.mxu0 0.0
    %942 = vmatprep.subr.mxu0 0.0
    %943 = vmatpush1.msra.mxu0 0.0
    %944 = vmatprep.subr.mxu0 0.0
    %945 = vmatpush1.msra.mxu0 0.0
    %946 = vmatprep.subr.mxu0 0.0
    %947 = vmatpush1.msra.mxu0 0.0
    %948 = vmatprep.subr.mxu0 0.0
    %949 = vmatpush1.msra.mxu0 0.0
    %950 = vmatprep.subr.mxu0 0.0
    %951 = vmatpush1.msra.mxu0 0.0
    %952 = vmatprep.subr.mxu0 0.0
    %953 = vmatpush1.msra.mxu0 0.0
    %954 = vmatprep.subr.mxu0 0.0
    %955 = vmatpush1.msra.mxu0 0.0
    %956 = vmatprep.subr.mxu0 0.0
    %957 = vmatpush1.msra.mxu0 0.0
    %958 = vmatprep.subr.mxu0 0.0
    %959 = vmatpush1.msra.mxu0 0.0
    %960 = vmatprep.subr.mxu0 0.0
    %961 = vmatpush1.msra.mxu0 0.0
    %962 = vmatprep.subr.mxu0 0.0
    %963 = vmatpush1.msra.mxu0 0.0
    %964 = vmatprep.mubr.f32.mxu0 0.0
    %965 = vmatmul.mubr.f32.gmra.mrb[0].mxu0 %v828
    %v966 = vpop.f32.mrb[0].mxu0
    %v967 = vadd.f32 0.0, %v966
    %v968 = vpop.f32.mrb[0].mxu0
    %v969 = vadd.f32 0.0, %v968
    %970 = vdwg.mxu0
    %v971 = vadd.f32 %v824, %v896
    %v972 = vadd.f32 %v825, %v898
    %v973 = vadd.f32 %v826, %v967
    %v974 = vadd.f32 %v827, %v969
    %v975 = vxor.u32 %v971, 2147483648
    %v976 = vxor.u32 %v972, 2147483648
    %v977 = vxor.u32 %v973, 2147483648
    %v978 = vmul.f32 %v975, 1.442695
    %v979 = vpow.pop %v978
    %v980 = vmul.f32 %v976, 1.442695
    %v981 = vpow.pop %v980
    %v982 = vmul.f32 %v977, 1.442695
    %v983 = vpow.pop %v982
    %v984 = vadd.f32 %v979, 1.0
    %v985 = vadd.f32 %v981, 1.0
    %v986 = vadd.f32 %v983, 1.0
    %v987 = vrcp.pop %v984
    %v988 = vmul.f32 1.0, %v987
    %v989 = vrcp.pop %v985
    %v990 = vmul.f32 1.0, %v989
    %v991 = vrcp.pop %v986
    %v992 = vmul.f32 1.0, %v991
    %v993 = vtanh.pop %v974
    %v994 = vld [vmem:[#allocation5] sm:$0xff]
    %v995 = vmul.f32 %v990, %v994
    %v996 = vmul.f32 %v988, %v993
    %v997 = vadd.f32 %v995, %v996
    %v998 = vtanh.pop %v997
    %v999 = vmul.f32 %v992, %v998
    %1000 = vst [vmem:[#allocation5] sm:$0xff] %v997
    %1001 = vst [vmem:[#allocation4] sm:$0xff] %v999
    %s1002 = scalar_lea.vmem [#allocation3], 16
    %1003 = vst [vmem:[%s1002] sm:$0xff] %v999
    %s1004 = smul.u32 3, 4
    %s1005 = smul.addr %s1004, 8
    %s1006 = scalar_lea.vmem [#allocation2], %s1005
    %v1007 = vld [vmem:[%s1006] sm:$0xff]
    %v1008 = vld [vmem:[%s1006 + $0x8] sm:$0xff]
    %v1009 = vld [vmem:[%s1006 + $0x10] sm:$0xff]
    %v1010 = vld [vmem:[%s1006 + $0x18] sm:$0xff]
    %v1011 = vld [vmem:[#allocation4] sm:$0xff]
    %1012 = vmatprep.subr.mxu0 %v393
    %1013 = vmatpush1.msra.mxu0 %v392
    %1014 = vmatprep.subr.mxu0 %v397
    %1015 = vmatpush1.msra.mxu0 %v396
    %1016 = vmatprep.subr.mxu0 %v401
    %1017 = vmatpush1.msra.mxu0 %v400
    %1018 = vmatprep.subr.mxu0 %v405
    %1019 = vmatpush1.msra.mxu0 %v404
    %1020 = vmatprep.subr.mxu0 %v409
    %1021 = vmatpush1.msra.mxu0 %v408
    %1022 = vmatprep.subr.mxu0 %v413
    %1023 = vmatpush1.msra.mxu0 %v412
    %1024 = vmatprep.subr.mxu0 %v417
    %1025 = vmatpush1.msra.mxu0 %v416
    %1026 = vmatprep.subr.mxu0 %v421
    %1027 = vmatpush1.msra.mxu0 %v420
    %1028 = vmatprep.subr.mxu0 %v425
    %1029 = vmatpush1.msra.mxu0 %v424
    %1030 = vmatprep.subr.mxu0 %v429
    %1031 = vmatpush1.msra.mxu0 %v428
    %1032 = vmatprep.subr.mxu0 %v433
    %1033 = vmatpush1.msra.mxu0 %v432
    %1034 = vmatprep.subr.mxu0 %v437
    %1035 = vmatpush1.msra.mxu0 %v436
    %1036 = vmatprep.subr.mxu0 %v441
    %1037 = vmatpush1.msra.mxu0 %v440
    %1038 = vmatprep.subr.mxu0 %v445
    %1039 = vmatpush1.msra.mxu0 %v444
    %1040 = vmatprep.subr.mxu0 %v449
    %1041 = vmatpush1.msra.mxu0 %v448
    %1042 = vmatprep.subr.mxu0 %v453
    %1043 = vmatpush1.msra.mxu0 %v452
    %1044 = vmatprep.subr.mxu0 0.0
    %1045 = vmatpush1.msra.mxu0 0.0
    %1046 = vmatprep.subr.mxu0 0.0
    %1047 = vmatpush1.msra.mxu0 0.0
    %1048 = vmatprep.subr.mxu0 0.0
    %1049 = vmatpush1.msra.mxu0 0.0
    %1050 = vmatprep.subr.mxu0 0.0
    %1051 = vmatpush1.msra.mxu0 0.0
    %1052 = vmatprep.subr.mxu0 0.0
    %1053 = vmatpush1.msra.mxu0 0.0
    %1054 = vmatprep.subr.mxu0 0.0
    %1055 = vmatpush1.msra.mxu0 0.0
    %1056 = vmatprep.subr.mxu0 0.0
    %1057 = vmatpush1.msra.mxu0 0.0
    %1058 = vmatprep.subr.mxu0 0.0
    %1059 = vmatpush1.msra.mxu0 0.0
    %1060 = vmatprep.subr.mxu0 0.0
    %1061 = vmatpush1.msra.mxu0 0.0
    %1062 = vmatprep.subr.mxu0 0.0
    %1063 = vmatpush1.msra.mxu0 0.0
    %1064 = vmatprep.subr.mxu0 0.0
    %1065 = vmatpush1.msra.mxu0 0.0
    %1066 = vmatprep.subr.mxu0 0.0
    %1067 = vmatpush1.msra.mxu0 0.0
    %1068 = vmatprep.subr.mxu0 0.0
    %1069 = vmatpush1.msra.mxu0 0.0
    %1070 = vmatprep.subr.mxu0 0.0
    %1071 = vmatpush1.msra.mxu0 0.0
    %1072 = vmatprep.subr.mxu0 0.0
    %1073 = vmatpush1.msra.mxu0 0.0
    %1074 = vmatprep.subr.mxu0 0.0
    %1075 = vmatpush1.msra.mxu0 0.0
    %1076 = vmatprep.mubr.f32.mxu0 0.0
    %1077 = vmatmul.mubr.f32.gmra.mrb[0].mxu0 %v1011
    %v1078 = vpop.f32.mrb[0].mxu0
    %v1079 = vadd.f32 0.0, %v1078
    %v1080 = vpop.f32.mrb[0].mxu0
    %v1081 = vadd.f32 0.0, %v1080
    %1082 = vdwg.mxu0
    %1083 = vmatprep.subr.mxu0 %v395
    %1084 = vmatpush1.msra.mxu0 %v394
    %1085 = vmatprep.subr.mxu0 %v399
    %1086 = vmatpush1.msra.mxu0 %v398
    %1087 = vmatprep.subr.mxu0 %v403
    %1088 = vmatpush1.msra.mxu0 %v402
    %1089 = vmatprep.subr.mxu0 %v407
    %1090 = vmatpush1.msra.mxu0 %v406
    %1091 = vmatprep.subr.mxu0 %v411
    %1092 = vmatpush1.msra.mxu0 %v410
    %1093 = vmatprep.subr.mxu0 %v415
    %1094 = vmatpush1.msra.mxu0 %v414
    %1095 = vmatprep.subr.mxu0 %v419
    %1096 = vmatpush1.msra.mxu0 %v418
    %1097 = vmatprep.subr.mxu0 %v423
    %1098 = vmatpush1.msra.mxu0 %v422
    %1099 = vmatprep.subr.mxu0 %v427
    %1100 = vmatpush1.msra.mxu0 %v426
    %1101 = vmatprep.subr.mxu0 %v431
    %1102 = vmatpush1.msra.mxu0 %v430
    %1103 = vmatprep.subr.mxu0 %v435
    %1104 = vmatpush1.msra.mxu0 %v434
    %1105 = vmatprep.subr.mxu0 %v439
    %1106 = vmatpush1.msra.mxu0 %v438
    %1107 = vmatprep.subr.mxu0 %v443
    %1108 = vmatpush1.msra.mxu0 %v442
    %1109 = vmatprep.subr.mxu0 %v447
    %1110 = vmatpush1.msra.mxu0 %v446
    %1111 = vmatprep.subr.mxu0 %v451
    %1112 = vmatpush1.msra.mxu0 %v450
    %1113 = vmatprep.subr.mxu0 %v455
    %1114 = vmatpush1.msra.mxu0 %v454
    %1115 = vmatprep.subr.mxu0 0.0
    %1116 = vmatpush1.msra.mxu0 0.0
    %1117 = vmatprep.subr.mxu0 0.0
    %1118 = vmatpush1.msra.mxu0 0.0
    %1119 = vmatprep.subr.mxu0 0.0
    %1120 = vmatpush1.msra.mxu0 0.0
    %1121 = vmatprep.subr.mxu0 0.0
    %1122 = vmatpush1.msra.mxu0 0.0
    %1123 = vmatprep.subr.mxu0 0.0
    %1124 = vmatpush1.msra.mxu0 0.0
    %1125 = vmatprep.subr.mxu0 0.0
    %1126 = vmatpush1.msra.mxu0 0.0
    %1127 = vmatprep.subr.mxu0 0.0
    %1128 = vmatpush1.msra.mxu0 0.0
    %1129 = vmatprep.subr.mxu0 0.0
    %1130 = vmatpush1.msra.mxu0 0.0
    %1131 = vmatprep.subr.mxu0 0.0
    %1132 = vmatpush1.msra.mxu0 0.0
    %1133 = vmatprep.subr.mxu0 0.0
    %1134 = vmatpush1.msra.mxu0 0.0
    %1135 = vmatprep.subr.mxu0 0.0
    %1136 = vmatpush1.msra.mxu0 0.0
    %1137 = vmatprep.subr.mxu0 0.0
    %1138 = vmatpush1.msra.mxu0 0.0
    %1139 = vmatprep.subr.mxu0 0.0
    %1140 = vmatpush1.msra.mxu0 0.0
    %1141 = vmatprep.subr.mxu0 0.0
    %1142 = vmatpush1.msra.mxu0 0.0
    %1143 = vmatprep.subr.mxu0 0.0
    %1144 = vmatpush1.msra.mxu0 0.0
    %1145 = vmatprep.subr.mxu0 0.0
    %1146 = vmatpush1.msra.mxu0 0.0
    %1147 = vmatprep.mubr.f32.mxu0 0.0
    %1148 = vmatmul.mubr.f32.gmra.mrb[0].mxu0 %v1011
    %v1149 = vpop.f32.mrb[0].mxu0
    %v1150 = vadd.f32 0.0, %v1149
    %v1151 = vpop.f32.mrb[0].mxu0
    %v1152 = vadd.f32 0.0, %v1151
    %1153 = vdwg.mxu0
    %v1154 = vadd.f32 %v1007, %v1079
    %v1155 = vadd.f32 %v1008, %v1081
    %v1156 = vadd.f32 %v1009, %v1150
    %v1157 = vadd.f32 %v1010, %v1152
    %v1158 = vxor.u32 %v1154, 2147483648
    %v1159 = vxor.u32 %v1155, 2147483648
    %v1160 = vxor.u32 %v1156, 2147483648
    %v1161 = vmul.f32 %v1158, 1.442695
    %v1162 = vpow.pop %v1161
    %v1163 = vmul.f32 %v1159, 1.442695
    %v1164 = vpow.pop %v1163
    %v1165 = vmul.f32 %v1160, 1.442695
    %v1166 = vpow.pop %v1165
    %v1167 = vadd.f32 %v1162, 1.0
    %v1168 = vadd.f32 %v1164, 1.0
    %v1169 = vadd.f32 %v1166, 1.0
    %v1170 = vrcp.pop %v1167
    %v1171 = vmul.f32 1.0, %v1170
    %v1172 = vrcp.pop %v1168
    %v1173 = vmul.f32 1.0, %v1172
    %v1174 = vrcp.pop %v1169
    %v1175 = vmul.f32 1.0, %v1174
    %v1176 = vtanh.pop %v1157
    %v1177 = vld [vmem:[#allocation5] sm:$0xff]
    %v1178 = vmul.f32 %v1173, %v1177
    %v1179 = vmul.f32 %v1171, %v1176
    %v1180 = vadd.f32 %v1178, %v1179
    %v1181 = vtanh.pop %v1180
    %v1182 = vmul.f32 %v1175, %v1181
    %1183 = vst [vmem:[#allocation5] sm:$0xff] %v1180
    %1184 = vst [vmem:[#allocation4] sm:$0xff] %v1182
    %s1185 = scalar_lea.vmem [#allocation3], 24
    %1186 = vst [vmem:[%s1185] sm:$0xff] %v1182
    %s1187 = smul.u32 4, 4
    %s1188 = smul.addr %s1187, 8
    %s1189 = scalar_lea.vmem [#allocation2], %s1188
    %v1190 = vld [vmem:[%s1189] sm:$0xff]
    %v1191 = vld [vmem:[%s1189 + $0x8] sm:$0xff]
    %v1192 = vld [vmem:[%s1189 + $0x10] sm:$0xff]
    %v1193 = vld [vmem:[%s1189 + $0x18] sm:$0xff]
    %v1194 = vld [vmem:[#allocation4] sm:$0xff]
    %1195 = vmatprep.subr.mxu0 %v393
    %1196 = vmatpush1.msra.mxu0 %v392
    %1197 = vmatprep.subr.mxu0 %v397
    %1198 = vmatpush1.msra.mxu0 %v396
    %1199 = vmatprep.subr.mxu0 %v401
    %1200 = vmatpush1.msra.mxu0 %v400
    %1201 = vmatprep.subr.mxu0 %v405
    %1202 = vmatpush1.msra.mxu0 %v404
    %1203 = vmatprep.subr.mxu0 %v409
    %1204 = vmatpush1.msra.mxu0 %v408
    %1205 = vmatprep.subr.mxu0 %v413
    %1206 = vmatpush1.msra.mxu0 %v412
    %1207 = vmatprep.subr.mxu0 %v417
    %1208 = vmatpush1.msra.mxu0 %v416
    %1209 = vmatprep.subr.mxu0 %v421
    %1210 = vmatpush1.msra.mxu0 %v420
    %1211 = vmatprep.subr.mxu0 %v425
    %1212 = vmatpush1.msra.mxu0 %v424
    %1213 = vmatprep.subr.mxu0 %v429
    %1214 = vmatpush1.msra.mxu0 %v428
    %1215 = vmatprep.subr.mxu0 %v433
    %1216 = vmatpush1.msra.mxu0 %v432
    %1217 = vmatprep.subr.mxu0 %v437
    %1218 = vmatpush1.msra.mxu0 %v436
    %1219 = vmatprep.subr.mxu0 %v441
    %1220 = vmatpush1.msra.mxu0 %v440
    %1221 = vmatprep.subr.mxu0 %v445
    %1222 = vmatpush1.msra.mxu0 %v444
    %1223 = vmatprep.subr.mxu0 %v449
    %1224 = vmatpush1.msra.mxu0 %v448
    %1225 = vmatprep.subr.mxu0 %v453
    %1226 = vmatpush1.msra.mxu0 %v452
    %1227 = vmatprep.subr.mxu0 0.0
    %1228 = vmatpush1.msra.mxu0 0.0
    %1229 = vmatprep.subr.mxu0 0.0
    %1230 = vmatpush1.msra.mxu0 0.0
    %1231 = vmatprep.subr.mxu0 0.0
    %1232 = vmatpush1.msra.mxu0 0.0
    %1233 = vmatprep.subr.mxu0 0.0
    %1234 = vmatpush1.msra.mxu0 0.0
    %1235 = vmatprep.subr.mxu0 0.0
    %1236 = vmatpush1.msra.mxu0 0.0
    %1237 = vmatprep.subr.mxu0 0.0
    %1238 = vmatpush1.msra.mxu0 0.0
    %1239 = vmatprep.subr.mxu0 0.0
    %1240 = vmatpush1.msra.mxu0 0.0
    %1241 = vmatprep.subr.mxu0 0.0
    %1242 = vmatpush1.msra.mxu0 0.0
    %1243 = vmatprep.subr.mxu0 0.0
    %1244 = vmatpush1.msra.mxu0 0.0
    %1245 = vmatprep.subr.mxu0 0.0
    %1246 = vmatpush1.msra.mxu0 0.0
    %1247 = vmatprep.subr.mxu0 0.0
    %1248 = vmatpush1.msra.mxu0 0.0
    %1249 = vmatprep.subr.mxu0 0.0
    %1250 = vmatpush1.msra.mxu0 0.0
    %1251 = vmatprep.subr.mxu0 0.0
    %1252 = vmatpush1.msra.mxu0 0.0
    %1253 = vmatprep.subr.mxu0 0.0
    %1254 = vmatpush1.msra.mxu0 0.0
    %1255 = vmatprep.subr.mxu0 0.0
    %1256 = vmatpush1.msra.mxu0 0.0
    %1257 = vmatprep.subr.mxu0 0.0
    %1258 = vmatpush1.msra.mxu0 0.0
    %1259 = vmatprep.mubr.f32.mxu0 0.0
    %1260 = vmatmul.mubr.f32.gmra.mrb[0].mxu0 %v1194
    %v1261 = vpop.f32.mrb[0].mxu0
    %v1262 = vadd.f32 0.0, %v1261
    %v1263 = vpop.f32.mrb[0].mxu0
    %v1264 = vadd.f32 0.0, %v1263
    %1265 = vdwg.mxu0
    %1266 = vmatprep.subr.mxu0 %v395
    %1267 = vmatpush1.msra.mxu0 %v394
    %1268 = vmatprep.subr.mxu0 %v399
    %1269 = vmatpush1.msra.mxu0 %v398
    %1270 = vmatprep.subr.mxu0 %v403
    %1271 = vmatpush1.msra.mxu0 %v402
    %1272 = vmatprep.subr.mxu0 %v407
    %1273 = vmatpush1.msra.mxu0 %v406
    %1274 = vmatprep.subr.mxu0 %v411
    %1275 = vmatpush1.msra.mxu0 %v410
    %1276 = vmatprep.subr.mxu0 %v415
    %1277 = vmatpush1.msra.mxu0 %v414
    %1278 = vmatprep.subr.mxu0 %v419
    %1279 = vmatpush1.msra.mxu0 %v418
    %1280 = vmatprep.subr.mxu0 %v423
    %1281 = vmatpush1.msra.mxu0 %v422
    %1282 = vmatprep.subr.mxu0 %v427
    %1283 = vmatpush1.msra.mxu0 %v426
    %1284 = vmatprep.subr.mxu0 %v431
    %1285 = vmatpush1.msra.mxu0 %v430
    %1286 = vmatprep.subr.mxu0 %v435
    %1287 = vmatpush1.msra.mxu0 %v434
    %1288 = vmatprep.subr.mxu0 %v439
    %1289 = vmatpush1.msra.mxu0 %v438
    %1290 = vmatprep.subr.mxu0 %v443
    %1291 = vmatpush1.msra.mxu0 %v442
    %1292 = vmatprep.subr.mxu0 %v447
    %1293 = vmatpush1.msra.mxu0 %v446
    %1294 = vmatprep.subr.mxu0 %v451
    %1295 = vmatpush1.msra.mxu0 %v450
    %1296 = vmatprep.subr.mxu0 %v455
    %1297 = vmatpush1.msra.mxu0 %v454
    %1298 = vmatprep.subr.mxu0 0.0
    %1299 = vmatpush1.msra.mxu0 0.0
    %1300 = vmatprep.subr.mxu0 0.0
    %1301 = vmatpush1.msra.mxu0 0.0
    %1302 = vmatprep.subr.mxu0 0.0
    %1303 = vmatpush1.msra.mxu0 0.0
    %1304 = vmatprep.subr.mxu0 0.0
    %1305 = vmatpush1.msra.mxu0 0.0
    %1306 = vmatprep.subr.mxu0 0.0
    %1307 = vmatpush1.msra.mxu0 0.0
    %1308 = vmatprep.subr.mxu0 0.0
    %1309 = vmatpush1.msra.mxu0 0.0
    %1310 = vmatprep.subr.mxu0 0.0
    %1311 = vmatpush1.msra.mxu0 0.0
    %1312 = vmatprep.subr.mxu0 0.0
    %1313 = vmatpush1.msra.mxu0 0.0
    %1314 = vmatprep.subr.mxu0 0.0
    %1315 = vmatpush1.msra.mxu0 0.0
    %1316 = vmatprep.subr.mxu0 0.0
    %1317 = vmatpush1.msra.mxu0 0.0
    %1318 = vmatprep.subr.mxu0 0.0
    %1319 = vmatpush1.msra.mxu0 0.0
    %1320 = vmatprep.subr.mxu0 0.0
    %1321 = vmatpush1.msra.mxu0 0.0
    %1322 = vmatprep.subr.mxu0 0.0
    %1323 = vmatpush1.msra.mxu0 0.0
    %1324 = vmatprep.subr.mxu0 0.0
    %1325 = vmatpush1.msra.mxu0 0.0
    %1326 = vmatprep.subr.mxu0 0.0
    %1327 = vmatpush1.msra.mxu0 0.0
    %1328 = vmatprep.subr.mxu0 0.0
    %1329 = vmatpush1.msra.mxu0 0.0
    %1330 = vmatprep.mubr.f32.mxu0 0.0
    %1331 = vmatmul.mubr.f32.gmra.mrb[0].mxu0 %v1194
    %v1332 = vpop.f32.mrb[0].mxu0
    %v1333 = vadd.f32 0.0, %v1332
    %v1334 = vpop.f32.mrb[0].mxu0
    %v1335 = vadd.f32 0.0, %v1334
    %1336 = vdwg.mxu0
    %v1337 = vadd.f32 %v1190, %v1262
    %v1338 = vadd.f32 %v1191, %v1264
    %v1339 = vadd.f32 %v1192, %v1333
    %v1340 = vadd.f32 %v1193, %v1335
    %v1341 = vxor.u32 %v1337, 2147483648
    %v1342 = vxor.u32 %v1338, 2147483648
    %v1343 = vxor.u32 %v1339, 2147483648
    %v1344 = vmul.f32 %v1341, 1.442695
    %v1345 = vpow.pop %v1344
    %v1346 = vmul.f32 %v1342, 1.442695
    %v1347 = vpow.pop %v1346
    %v1348 = vmul.f32 %v1343, 1.442695
    %v1349 = vpow.pop %v1348
    %v1350 = vadd.f32 %v1345, 1.0
    %v1351 = vadd.f32 %v1347, 1.0
    %v1352 = vadd.f32 %v1349, 1.0
    %v1353 = vrcp.pop %v1350
    %v1354 = vmul.f32 1.0, %v1353
    %v1355 = vrcp.pop %v1351
    %v1356 = vmul.f32 1.0, %v1355
    %v1357 = vrcp.pop %v1352
    %v1358 = vmul.f32 1.0, %v1357
    %v1359 = vtanh.pop %v1340
    %v1360 = vld [vmem:[#allocation5] sm:$0xff]
    %v1361 = vmul.f32 %v1356, %v1360
    %v1362 = vmul.f32 %v1354, %v1359
    %v1363 = vadd.f32 %v1361, %v1362
    %v1364 = vtanh.pop %v1363
    %v1365 = vmul.f32 %v1358, %v1364
    %1366 = vst [vmem:[#allocation5] sm:$0xff] %v1363
    %1367 = vst [vmem:[#allocation4] sm:$0xff] %v1365
    %s1368 = scalar_lea.vmem [#allocation3], 32
    %1369 = vst [vmem:[%s1368] sm:$0xff] %v1365
    %s1370 = smul.u32 5, 4
    %s1371 = smul.addr %s1370, 8
    %s1372 = scalar_lea.vmem [#allocation2], %s1371
    %v1373 = vld [vmem:[%s1372] sm:$0xff]
    %v1374 = vld [vmem:[%s1372 + $0x8] sm:$0xff]
    %v1375 = vld [vmem:[%s1372 + $0x10] sm:$0xff]
    %v1376 = vld [vmem:[%s1372 + $0x18] sm:$0xff]
    %v1377 = vld [vmem:[#allocation4] sm:$0xff]
    %1378 = vmatprep.subr.mxu0 %v393
    %1379 = vmatpush1.msra.mxu0 %v392
    %1380 = vmatprep.subr.mxu0 %v397
    %1381 = vmatpush1.msra.mxu0 %v396
    %1382 = vmatprep.subr.mxu0 %v401
    %1383 = vmatpush1.msra.mxu0 %v400
    %1384 = vmatprep.subr.mxu0 %v405
    %1385 = vmatpush1.msra.mxu0 %v404
    %1386 = vmatprep.subr.mxu0 %v409
    %1387 = vmatpush1.msra.mxu0 %v408
    %1388 = vmatprep.subr.mxu0 %v413
    %1389 = vmatpush1.msra.mxu0 %v412
    %1390 = vmatprep.subr.mxu0 %v417
    %1391 = vmatpush1.msra.mxu0 %v416
    %1392 = vmatprep.subr.mxu0 %v421
    %1393 = vmatpush1.msra.mxu0 %v420
    %1394 = vmatprep.subr.mxu0 %v425
    %1395 = vmatpush1.msra.mxu0 %v424
    %1396 = vmatprep.subr.mxu0 %v429
    %1397 = vmatpush1.msra.mxu0 %v428
    %1398 = vmatprep.subr.mxu0 %v433
    %1399 = vmatpush1.msra.mxu0 %v432
    %1400 = vmatprep.subr.mxu0 %v437
    %1401 = vmatpush1.msra.mxu0 %v436
    %1402 = vmatprep.subr.mxu0 %v441
    %1403 = vmatpush1.msra.mxu0 %v440
    %1404 = vmatprep.subr.mxu0 %v445
    %1405 = vmatpush1.msra.mxu0 %v444
    %1406 = vmatprep.subr.mxu0 %v449
    %1407 = vmatpush1.msra.mxu0 %v448
    %1408 = vmatprep.subr.mxu0 %v453
    %1409 = vmatpush1.msra.mxu0 %v452
    %1410 = vmatprep.subr.mxu0 0.0
    %1411 = vmatpush1.msra.mxu0 0.0
    %1412 = vmatprep.subr.mxu0 0.0
    %1413 = vmatpush1.msra.mxu0 0.0
    %1414 = vmatprep.subr.mxu0 0.0
    %1415 = vmatpush1.msra.mxu0 0.0
    %1416 = vmatprep.subr.mxu0 0.0
    %1417 = vmatpush1.msra.mxu0 0.0
    %1418 = vmatprep.subr.mxu0 0.0
    %1419 = vmatpush1.msra.mxu0 0.0
    %1420 = vmatprep.subr.mxu0 0.0
    %1421 = vmatpush1.msra.mxu0 0.0
    %1422 = vmatprep.subr.mxu0 0.0
    %1423 = vmatpush1.msra.mxu0 0.0
    %1424 = vmatprep.subr.mxu0 0.0
    %1425 = vmatpush1.msra.mxu0 0.0
    %1426 = vmatprep.subr.mxu0 0.0
    %1427 = vmatpush1.msra.mxu0 0.0
    %1428 = vmatprep.subr.mxu0 0.0
    %1429 = vmatpush1.msra.mxu0 0.0
    %1430 = vmatprep.subr.mxu0 0.0
    %1431 = vmatpush1.msra.mxu0 0.0
    %1432 = vmatprep.subr.mxu0 0.0
    %1433 = vmatpush1.msra.mxu0 0.0
    %1434 = vmatprep.subr.mxu0 0.0
    %1435 = vmatpush1.msra.mxu0 0.0
    %1436 = vmatprep.subr.mxu0 0.0
    %1437 = vmatpush1.msra.mxu0 0.0
    %1438 = vmatprep.subr.mxu0 0.0
    %1439 = vmatpush1.msra.mxu0 0.0
    %1440 = vmatprep.subr.mxu0 0.0
    %1441 = vmatpush1.msra.mxu0 0.0
    %1442 = vmatprep.mubr.f32.mxu0 0.0
    %1443 = vmatmul.mubr.f32.gmra.mrb[0].mxu0 %v1377
    %v1444 = vpop.f32.mrb[0].mxu0
    %v1445 = vadd.f32 0.0, %v1444
    %v1446 = vpop.f32.mrb[0].mxu0
    %v1447 = vadd.f32 0.0, %v1446
    %1448 = vdwg.mxu0
    %1449 = vmatprep.subr.mxu0 %v395
    %1450 = vmatpush1.msra.mxu0 %v394
    %1451 = vmatprep.subr.mxu0 %v399
    %1452 = vmatpush1.msra.mxu0 %v398
    %1453 = vmatprep.subr.mxu0 %v403
    %1454 = vmatpush1.msra.mxu0 %v402
    %1455 = vmatprep.subr.mxu0 %v407
    %1456 = vmatpush1.msra.mxu0 %v406
    %1457 = vmatprep.subr.mxu0 %v411
    %1458 = vmatpush1.msra.mxu0 %v410
    %1459 = vmatprep.subr.mxu0 %v415
    %1460 = vmatpush1.msra.mxu0 %v414
    %1461 = vmatprep.subr.mxu0 %v419
    %1462 = vmatpush1.msra.mxu0 %v418
    %1463 = vmatprep.subr.mxu0 %v423
    %1464 = vmatpush1.msra.mxu0 %v422
    %1465 = vmatprep.subr.mxu0 %v427
    %1466 = vmatpush1.msra.mxu0 %v426
    %1467 = vmatprep.subr.mxu0 %v431
    %1468 = vmatpush1.msra.mxu0 %v430
    %1469 = vmatprep.subr.mxu0 %v435
    %1470 = vmatpush1.msra.mxu0 %v434
    %1471 = vmatprep.subr.mxu0 %v439
    %1472 = vmatpush1.msra.mxu0 %v438
    %1473 = vmatprep.subr.mxu0 %v443
    %1474 = vmatpush1.msra.mxu0 %v442
    %1475 = vmatprep.subr.mxu0 %v447
    %1476 = vmatpush1.msra.mxu0 %v446
    %1477 = vmatprep.subr.mxu0 %v451
    %1478 = vmatpush1.msra.mxu0 %v450
    %1479 = vmatprep.subr.mxu0 %v455
    %1480 = vmatpush1.msra.mxu0 %v454
    %1481 = vmatprep.subr.mxu0 0.0
    %1482 = vmatpush1.msra.mxu0 0.0
    %1483 = vmatprep.subr.mxu0 0.0
    %1484 = vmatpush1.msra.mxu0 0.0
    %1485 = vmatprep.subr.mxu0 0.0
    %1486 = vmatpush1.msra.mxu0 0.0
    %1487 = vmatprep.subr.mxu0 0.0
    %1488 = vmatpush1.msra.mxu0 0.0
    %1489 = vmatprep.subr.mxu0 0.0
    %1490 = vmatpush1.msra.mxu0 0.0
    %1491 = vmatprep.subr.mxu0 0.0
    %1492 = vmatpush1.msra.mxu0 0.0
    %1493 = vmatprep.subr.mxu0 0.0
    %1494 = vmatpush1.msra.mxu0 0.0
    %1495 = vmatprep.subr.mxu0 0.0
    %1496 = vmatpush1.msra.mxu0 0.0
    %1497 = vmatprep.subr.mxu0 0.0
    %1498 = vmatpush1.msra.mxu0 0.0
    %1499 = vmatprep.subr.mxu0 0.0
    %1500 = vmatpush1.msra.mxu0 0.0
    %1501 = vmatprep.subr.mxu0 0.0
    %1502 = vmatpush1.msra.mxu0 0.0
    %1503 = vmatprep.subr.mxu0 0.0
    %1504 = vmatpush1.msra.mxu0 0.0
    %1505 = vmatprep.subr.mxu0 0.0
    %1506 = vmatpush1.msra.mxu0 0.0
    %1507 = vmatprep.subr.mxu0 0.0
    %1508 = vmatpush1.msra.mxu0 0.0
    %1509 = vmatprep.subr.mxu0 0.0
    %1510 = vmatpush1.msra.mxu0 0.0
    %1511 = vmatprep.subr.mxu0 0.0
    %1512 = vmatpush1.msra.mxu0 0.0
    %1513 = vmatprep.mubr.f32.mxu0 0.0
    %1514 = vmatmul.mubr.f32.gmra.mrb[0].mxu0 %v1377
    %v1515 = vpop.f32.mrb[0].mxu0
    %v1516 = vadd.f32 0.0, %v1515
    %v1517 = vpop.f32.mrb[0].mxu0
    %v1518 = vadd.f32 0.0, %v1517
    %1519 = vdwg.mxu0
    %v1520 = vadd.f32 %v1373, %v1445
    %v1521 = vadd.f32 %v1374, %v1447
    %v1522 = vadd.f32 %v1375, %v1516
    %v1523 = vadd.f32 %v1376, %v1518
    %v1524 = vxor.u32 %v1520, 2147483648
    %v1525 = vxor.u32 %v1521, 2147483648
    %v1526 = vxor.u32 %v1522, 2147483648
    %v1527 = vmul.f32 %v1524, 1.442695
    %v1528 = vpow.pop %v1527
    %v1529 = vmul.f32 %v1525, 1.442695
    %v1530 = vpow.pop %v1529
    %v1531 = vmul.f32 %v1526, 1.442695
    %v1532 = vpow.pop %v1531
    %v1533 = vadd.f32 %v1528, 1.0
    %v1534 = vadd.f32 %v1530, 1.0
    %v1535 = vadd.f32 %v1532, 1.0
    %v1536 = vrcp.pop %v1533
    %v1537 = vmul.f32 1.0, %v1536
    %v1538 = vrcp.pop %v1534
    %v1539 = vmul.f32 1.0, %v1538
    %v1540 = vrcp.pop %v1535
    %v1541 = vmul.f32 1.0, %v1540
    %v1542 = vtanh.pop %v1523
    %v1543 = vld [vmem:[#allocation5] sm:$0xff]
    %v1544 = vmul.f32 %v1539, %v1543
    %v1545 = vmul.f32 %v1537, %v1542
    %v1546 = vadd.f32 %v1544, %v1545
    %v1547 = vtanh.pop %v1546
    %v1548 = vmul.f32 %v1541, %v1547
    %1549 = vst [vmem:[#allocation5] sm:$0xff] %v1546
    %1550 = vst [vmem:[#allocation4] sm:$0xff] %v1548
    %s1551 = scalar_lea.vmem [#allocation3], 40
    %1552 = vst [vmem:[%s1551] sm:$0xff] %v1548
    %s1553 = smul.u32 6, 4
    %s1554 = smul.addr %s1553, 8
    %s1555 = scalar_lea.vmem [#allocation2], %s1554
    %v1556 = vld [vmem:[%s1555] sm:$0xff]
    %v1557 = vld [vmem:[%s1555 + $0x8] sm:$0xff]
    %v1558 = vld [vmem:[%s1555 + $0x10] sm:$0xff]
    %v1559 = vld [vmem:[%s1555 + $0x18] sm:$0xff]
    %v1560 = vld [vmem:[#allocation4] sm:$0xff]
    %1561 = vmatprep.subr.mxu0 %v393
    %1562 = vmatpush1.msra.mxu0 %v392
    %1563 = vmatprep.subr.mxu0 %v397
    %1564 = vmatpush1.msra.mxu0 %v396
    %1565 = vmatprep.subr.mxu0 %v401
    %1566 = vmatpush1.msra.mxu0 %v400
    %1567 = vmatprep.subr.mxu0 %v405
    %1568 = vmatpush1.msra.mxu0 %v404
    %1569 = vmatprep.subr.mxu0 %v409
    %1570 = vmatpush1.msra.mxu0 %v408
    %1571 = vmatprep.subr.mxu0 %v413
    %1572 = vmatpush1.msra.mxu0 %v412
    %1573 = vmatprep.subr.mxu0 %v417
    %1574 = vmatpush1.msra.mxu0 %v416
    %1575 = vmatprep.subr.mxu0 %v421
    %1576 = vmatpush1.msra.mxu0 %v420
    %1577 = vmatprep.subr.mxu0 %v425
    %1578 = vmatpush1.msra.mxu0 %v424
    %1579 = vmatprep.subr.mxu0 %v429
    %1580 = vmatpush1.msra.mxu0 %v428
    %1581 = vmatprep.subr.mxu0 %v433
    %1582 = vmatpush1.msra.mxu0 %v432
    %1583 = vmatprep.subr.mxu0 %v437
    %1584 = vmatpush1.msra.mxu0 %v436
    %1585 = vmatprep.subr.mxu0 %v441
    %1586 = vmatpush1.msra.mxu0 %v440
    %1587 = vmatprep.subr.mxu0 %v445
    %1588 = vmatpush1.msra.mxu0 %v444
    %1589 = vmatprep.subr.mxu0 %v449
    %1590 = vmatpush1.msra.mxu0 %v448
    %1591 = vmatprep.subr.mxu0 %v453
    %1592 = vmatpush1.msra.mxu0 %v452
    %1593 = vmatprep.subr.mxu0 0.0
    %1594 = vmatpush1.msra.mxu0 0.0
    %1595 = vmatprep.subr.mxu0 0.0
    %1596 = vmatpush1.msra.mxu0 0.0
    %1597 = vmatprep.subr.mxu0 0.0
    %1598 = vmatpush1.msra.mxu0 0.0
    %1599 = vmatprep.subr.mxu0 0.0
    %1600 = vmatpush1.msra.mxu0 0.0
    %1601 = vmatprep.subr.mxu0 0.0
    %1602 = vmatpush1.msra.mxu0 0.0
    %1603 = vmatprep.subr.mxu0 0.0
    %1604 = vmatpush1.msra.mxu0 0.0
    %1605 = vmatprep.subr.mxu0 0.0
    %1606 = vmatpush1.msra.mxu0 0.0
    %1607 = vmatprep.subr.mxu0 0.0
    %1608 = vmatpush1.msra.mxu0 0.0
    %1609 = vmatprep.subr.mxu0 0.0
    %1610 = vmatpush1.msra.mxu0 0.0
    %1611 = vmatprep.subr.mxu0 0.0
    %1612 = vmatpush1.msra.mxu0 0.0
    %1613 = vmatprep.subr.mxu0 0.0
    %1614 = vmatpush1.msra.mxu0 0.0
    %1615 = vmatprep.subr.mxu0 0.0
    %1616 = vmatpush1.msra.mxu0 0.0
    %1617 = vmatprep.subr.mxu0 0.0
    %1618 = vmatpush1.msra.mxu0 0.0
    %1619 = vmatprep.subr.mxu0 0.0
    %1620 = vmatpush1.msra.mxu0 0.0
    %1621 = vmatprep.subr.mxu0 0.0
    %1622 = vmatpush1.msra.mxu0 0.0
    %1623 = vmatprep.subr.mxu0 0.0
    %1624 = vmatpush1.msra.mxu0 0.0
    %1625 = vmatprep.mubr.f32.mxu0 0.0
    %1626 = vmatmul.mubr.f32.gmra.mrb[0].mxu0 %v1560
    %v1627 = vpop.f32.mrb[0].mxu0
    %v1628 = vadd.f32 0.0, %v1627
    %v1629 = vpop.f32.mrb[0].mxu0
    %v1630 = vadd.f32 0.0, %v1629
    %1631 = vdwg.mxu0
    %1632 = vmatprep.subr.mxu0 %v395
    %1633 = vmatpush1.msra.mxu0 %v394
    %1634 = vmatprep.subr.mxu0 %v399
    %1635 = vmatpush1.msra.mxu0 %v398
    %1636 = vmatprep.subr.mxu0 %v403
    %1637 = vmatpush1.msra.mxu0 %v402
    %1638 = vmatprep.subr.mxu0 %v407
    %1639 = vmatpush1.msra.mxu0 %v406
    %1640 = vmatprep.subr.mxu0 %v411
    %1641 = vmatpush1.msra.mxu0 %v410
    %1642 = vmatprep.subr.mxu0 %v415
    %1643 = vmatpush1.msra.mxu0 %v414
    %1644 = vmatprep.subr.mxu0 %v419
    %1645 = vmatpush1.msra.mxu0 %v418
    %1646 = vmatprep.subr.mxu0 %v423
    %1647 = vmatpush1.msra.mxu0 %v422
    %1648 = vmatprep.subr.mxu0 %v427
    %1649 = vmatpush1.msra.mxu0 %v426
    %1650 = vmatprep.subr.mxu0 %v431
    %1651 = vmatpush1.msra.mxu0 %v430
    %1652 = vmatprep.subr.mxu0 %v435
    %1653 = vmatpush1.msra.mxu0 %v434
    %1654 = vmatprep.subr.mxu0 %v439
    %1655 = vmatpush1.msra.mxu0 %v438
    %1656 = vmatprep.subr.mxu0 %v443
    %1657 = vmatpush1.msra.mxu0 %v442
    %1658 = vmatprep.subr.mxu0 %v447
    %1659 = vmatpush1.msra.mxu0 %v446
    %1660 = vmatprep.subr.mxu0 %v451
    %1661 = vmatpush1.msra.mxu0 %v450
    %1662 = vmatprep.subr.mxu0 %v455
    %1663 = vmatpush1.msra.mxu0 %v454
    %1664 = vmatprep.subr.mxu0 0.0
    %1665 = vmatpush1.msra.mxu0 0.0
    %1666 = vmatprep.subr.mxu0 0.0
    %1667 = vmatpush1.msra.mxu0 0.0
    %1668 = vmatprep.subr.mxu0 0.0
    %1669 = vmatpush1.msra.mxu0 0.0
    %1670 = vmatprep.subr.mxu0 0.0
    %1671 = vmatpush1.msra.mxu0 0.0
    %1672 = vmatprep.subr.mxu0 0.0
    %1673 = vmatpush1.msra.mxu0 0.0
    %1674 = vmatprep.subr.mxu0 0.0
    %1675 = vmatpush1.msra.mxu0 0.0
    %1676 = vmatprep.subr.mxu0 0.0
    %1677 = vmatpush1.msra.mxu0 0.0
    %1678 = vmatprep.subr.mxu0 0.0
    %1679 = vmatpush1.msra.mxu0 0.0
    %1680 = vmatprep.subr.mxu0 0.0
    %1681 = vmatpush1.msra.mxu0 0.0
    %1682 = vmatprep.subr.mxu0 0.0
    %1683 = vmatpush1.msra.mxu0 0.0
    %1684 = vmatprep.subr.mxu0 0.0
    %1685 = vmatpush1.msra.mxu0 0.0
    %1686 = vmatprep.subr.mxu0 0.0
    %1687 = vmatpush1.msra.mxu0 0.0
    %1688 = vmatprep.subr.mxu0 0.0
    %1689 = vmatpush1.msra.mxu0 0.0
    %1690 = vmatprep.subr.mxu0 0.0
    %1691 = vmatpush1.msra.mxu0 0.0
    %1692 = vmatprep.subr.mxu0 0.0
    %1693 = vmatpush1.msra.mxu0 0.0
    %1694 = vmatprep.subr.mxu0 0.0
    %1695 = vmatpush1.msra.mxu0 0.0
    %1696 = vmatprep.mubr.f32.mxu0 0.0
    %1697 = vmatmul.mubr.f32.gmra.mrb[0].mxu0 %v1560
    %v1698 = vpop.f32.mrb[0].mxu0
    %v1699 = vadd.f32 0.0, %v1698
    %v1700 = vpop.f32.mrb[0].mxu0
    %v1701 = vadd.f32 0.0, %v1700
    %1702 = vdwg.mxu0
    %v1703 = vadd.f32 %v1556, %v1628
    %v1704 = vadd.f32 %v1557, %v1630
    %v1705 = vadd.f32 %v1558, %v1699
    %v1706 = vadd.f32 %v1559, %v1701
    %v1707 = vxor.u32 %v1703, 2147483648
    %v1708 = vxor.u32 %v1704, 2147483648
    %v1709 = vxor.u32 %v1705, 2147483648
    %v1710 = vmul.f32 %v1707, 1.442695
    %v1711 = vpow.pop %v1710
    %v1712 = vmul.f32 %v1708, 1.442695
    %v1713 = vpow.pop %v1712
    %v1714 = vmul.f32 %v1709, 1.442695
    %v1715 = vpow.pop %v1714
    %v1716 = vadd.f32 %v1711, 1.0
    %v1717 = vadd.f32 %v1713, 1.0
    %v1718 = vadd.f32 %v1715, 1.0
    %v1719 = vrcp.pop %v1716
    %v1720 = vmul.f32 1.0, %v1719
    %v1721 = vrcp.pop %v1717
    %v1722 = vmul.f32 1.0, %v1721
    %v1723 = vrcp.pop %v1718
    %v1724 = vmul.f32 1.0, %v1723
    %v1725 = vtanh.pop %v1706
    %v1726 = vld [vmem:[#allocation5] sm:$0xff]
    %v1727 = vmul.f32 %v1722, %v1726
    %v1728 = vmul.f32 %v1720, %v1725
    %v1729 = vadd.f32 %v1727, %v1728
    %v1730 = vtanh.pop %v1729
    %v1731 = vmul.f32 %v1724, %v1730
    %1732 = vst [vmem:[#allocation5] sm:$0xff] %v1729
    %1733 = vst [vmem:[#allocation4] sm:$0xff] %v1731
    %s1734 = scalar_lea.vmem [#allocation3], 48
    %1735 = vst [vmem:[%s1734] sm:$0xff] %v1731
    %s1736 = smul.u32 7, 4
    %s1737 = smul.addr %s1736, 8
    %s1738 = scalar_lea.vmem [#allocation2], %s1737
    %v1739 = vld [vmem:[%s1738] sm:$0xff]
    %v1740 = vld [vmem:[%s1738 + $0x8] sm:$0xff]
    %v1741 = vld [vmem:[%s1738 + $0x10] sm:$0xff]
    %v1742 = vld [vmem:[%s1738 + $0x18] sm:$0xff]
    %v1743 = vld [vmem:[#allocation4] sm:$0xff]
    %1744 = vmatprep.subr.mxu0 %v393
    %1745 = vmatpush1.msra.mxu0 %v392
    %1746 = vmatprep.subr.mxu0 %v397
    %1747 = vmatpush1.msra.mxu0 %v396
    %1748 = vmatprep.subr.mxu0 %v401
    %1749 = vmatpush1.msra.mxu0 %v400
    %1750 = vmatprep.subr.mxu0 %v405
    %1751 = vmatpush1.msra.mxu0 %v404
    %1752 = vmatprep.subr.mxu0 %v409
    %1753 = vmatpush1.msra.mxu0 %v408
    %1754 = vmatprep.subr.mxu0 %v413
    %1755 = vmatpush1.msra.mxu0 %v412
    %1756 = vmatprep.subr.mxu0 %v417
    %1757 = vmatpush1.msra.mxu0 %v416
    %1758 = vmatprep.subr.mxu0 %v421
    %1759 = vmatpush1.msra.mxu0 %v420
    %1760 = vmatprep.subr.mxu0 %v425
    %1761 = vmatpush1.msra.mxu0 %v424
    %1762 = vmatprep.subr.mxu0 %v429
    %1763 = vmatpush1.msra.mxu0 %v428
    %1764 = vmatprep.subr.mxu0 %v433
    %1765 = vmatpush1.msra.mxu0 %v432
    %1766 = vmatprep.subr.mxu0 %v437
    %1767 = vmatpush1.msra.mxu0 %v436
    %1768 = vmatprep.subr.mxu0 %v441
    %1769 = vmatpush1.msra.mxu0 %v440
    %1770 = vmatprep.subr.mxu0 %v445
    %1771 = vmatpush1.msra.mxu0 %v444
    %1772 = vmatprep.subr.mxu0 %v449
    %1773 = vmatpush1.msra.mxu0 %v448
    %1774 = vmatprep.subr.mxu0 %v453
    %1775 = vmatpush1.msra.mxu0 %v452
    %1776 = vmatprep.subr.mxu0 0.0
    %1777 = vmatpush1.msra.mxu0 0.0
    %1778 = vmatprep.subr.mxu0 0.0
    %1779 = vmatpush1.msra.mxu0 0.0
    %1780 = vmatprep.subr.mxu0 0.0
    %1781 = vmatpush1.msra.mxu0 0.0
    %1782 = vmatprep.subr.mxu0 0.0
    %1783 = vmatpush1.msra.mxu0 0.0
    %1784 = vmatprep.subr.mxu0 0.0
    %1785 = vmatpush1.msra.mxu0 0.0
    %1786 = vmatprep.subr.mxu0 0.0
    %1787 = vmatpush1.msra.mxu0 0.0
    %1788 = vmatprep.subr.mxu0 0.0
    %1789 = vmatpush1.msra.mxu0 0.0
    %1790 = vmatprep.subr.mxu0 0.0
    %1791 = vmatpush1.msra.mxu0 0.0
    %1792 = vmatprep.subr.mxu0 0.0
    %1793 = vmatpush1.msra.mxu0 0.0
    %1794 = vmatprep.subr.mxu0 0.0
    %1795 = vmatpush1.msra.mxu0 0.0
    %1796 = vmatprep.subr.mxu0 0.0
    %1797 = vmatpush1.msra.mxu0 0.0
    %1798 = vmatprep.subr.mxu0 0.0
    %1799 = vmatpush1.msra.mxu0 0.0
    %1800 = vmatprep.subr.mxu0 0.0
    %1801 = vmatpush1.msra.mxu0 0.0
    %1802 = vmatprep.subr.mxu0 0.0
    %1803 = vmatpush1.msra.mxu0 0.0
    %1804 = vmatprep.subr.mxu0 0.0
    %1805 = vmatpush1.msra.mxu0 0.0
    %1806 = vmatprep.subr.mxu0 0.0
    %1807 = vmatpush1.msra.mxu0 0.0
    %1808 = vmatprep.mubr.f32.mxu0 0.0
    %1809 = vmatmul.mubr.f32.gmra.mrb[0].mxu0 %v1743
    %v1810 = vpop.f32.mrb[0].mxu0
    %v1811 = vadd.f32 0.0, %v1810
    %v1812 = vpop.f32.mrb[0].mxu0
    %v1813 = vadd.f32 0.0, %v1812
    %1814 = vdwg.mxu0
    %1815 = vmatprep.subr.mxu0 %v395
    %1816 = vmatpush1.msra.mxu0 %v394
    %1817 = vmatprep.subr.mxu0 %v399
    %1818 = vmatpush1.msra.mxu0 %v398
    %1819 = vmatprep.subr.mxu0 %v403
    %1820 = vmatpush1.msra.mxu0 %v402
    %1821 = vmatprep.subr.mxu0 %v407
    %1822 = vmatpush1.msra.mxu0 %v406
    %1823 = vmatprep.subr.mxu0 %v411
    %1824 = vmatpush1.msra.mxu0 %v410
    %1825 = vmatprep.subr.mxu0 %v415
    %1826 = vmatpush1.msra.mxu0 %v414
    %1827 = vmatprep.subr.mxu0 %v419
    %1828 = vmatpush1.msra.mxu0 %v418
    %1829 = vmatprep.subr.mxu0 %v423
    %1830 = vmatpush1.msra.mxu0 %v422
    %1831 = vmatprep.subr.mxu0 %v427
    %1832 = vmatpush1.msra.mxu0 %v426
    %1833 = vmatprep.subr.mxu0 %v431
    %1834 = vmatpush1.msra.mxu0 %v430
    %1835 = vmatprep.subr.mxu0 %v435
    %1836 = vmatpush1.msra.mxu0 %v434
    %1837 = vmatprep.subr.mxu0 %v439
    %1838 = vmatpush1.msra.mxu0 %v438
    %1839 = vmatprep.subr.mxu0 %v443
    %1840 = vmatpush1.msra.mxu0 %v442
    %1841 = vmatprep.subr.mxu0 %v447
    %1842 = vmatpush1.msra.mxu0 %v446
    %1843 = vmatprep.subr.mxu0 %v451
    %1844 = vmatpush1.msra.mxu0 %v450
    %1845 = vmatprep.subr.mxu0 %v455
    %1846 = vmatpush1.msra.mxu0 %v454
    %1847 = vmatprep.subr.mxu0 0.0
    %1848 = vmatpush1.msra.mxu0 0.0
    %1849 = vmatprep.subr.mxu0 0.0
    %1850 = vmatpush1.msra.mxu0 0.0
    %1851 = vmatprep.subr.mxu0 0.0
    %1852 = vmatpush1.msra.mxu0 0.0
    %1853 = vmatprep.subr.mxu0 0.0
    %1854 = vmatpush1.msra.mxu0 0.0
    %1855 = vmatprep.subr.mxu0 0.0
    %1856 = vmatpush1.msra.mxu0 0.0
    %1857 = vmatprep.subr.mxu0 0.0
    %1858 = vmatpush1.msra.mxu0 0.0
    %1859 = vmatprep.subr.mxu0 0.0
    %1860 = vmatpush1.msra.mxu0 0.0
    %1861 = vmatprep.subr.mxu0 0.0
    %1862 = vmatpush1.msra.mxu0 0.0
    %1863 = vmatprep.subr.mxu0 0.0
    %1864 = vmatpush1.msra.mxu0 0.0
    %1865 = vmatprep.subr.mxu0 0.0
    %1866 = vmatpush1.msra.mxu0 0.0
    %1867 = vmatprep.subr.mxu0 0.0
    %1868 = vmatpush1.msra.mxu0 0.0
    %1869 = vmatprep.subr.mxu0 0.0
    %1870 = vmatpush1.msra.mxu0 0.0
    %1871 = vmatprep.subr.mxu0 0.0
    %1872 = vmatpush1.msra.mxu0 0.0
    %1873 = vmatprep.subr.mxu0 0.0
    %1874 = vmatpush1.msra.mxu0 0.0
    %1875 = vmatprep.subr.mxu0 0.0
    %1876 = vmatpush1.msra.mxu0 0.0
    %1877 = vmatprep.subr.mxu0 0.0
    %1878 = vmatpush1.msra.mxu0 0.0
    %1879 = vmatprep.mubr.f32.mxu0 0.0
    %1880 = vmatmul.mubr.f32.gmra.mrb[0].mxu0 %v1743
    %v1881 = vpop.f32.mrb[0].mxu0
    %v1882 = vadd.f32 0.0, %v1881
    %v1883 = vpop.f32.mrb[0].mxu0
    %v1884 = vadd.f32 0.0, %v1883
    %1885 = vdwg.mxu0
    %v1886 = vadd.f32 %v1739, %v1811
    %v1887 = vadd.f32 %v1740, %v1813
    %v1888 = vadd.f32 %v1741, %v1882
    %v1889 = vadd.f32 %v1742, %v1884
    %v1890 = vxor.u32 %v1886, 2147483648
    %v1891 = vxor.u32 %v1887, 2147483648
    %v1892 = vxor.u32 %v1888, 2147483648
    %v1893 = vmul.f32 %v1890, 1.442695
    %v1894 = vpow.pop %v1893
    %v1895 = vmul.f32 %v1891, 1.442695
    %v1896 = vpow.pop %v1895
    %v1897 = vmul.f32 %v1892, 1.442695
    %v1898 = vpow.pop %v1897
    %v1899 = vadd.f32 %v1894, 1.0
    %v1900 = vadd.f32 %v1896, 1.0
    %v1901 = vadd.f32 %v1898, 1.0
    %v1902 = vrcp.pop %v1899
    %v1903 = vmul.f32 1.0, %v1902
    %v1904 = vrcp.pop %v1900
    %v1905 = vmul.f32 1.0, %v1904
    %v1906 = vrcp.pop %v1901
    %v1907 = vmul.f32 1.0, %v1906
    %v1908 = vtanh.pop %v1889
    %v1909 = vld [vmem:[#allocation5] sm:$0xff]
    %v1910 = vmul.f32 %v1905, %v1909
    %v1911 = vmul.f32 %v1903, %v1908
    %v1912 = vadd.f32 %v1910, %v1911
    %v1913 = vtanh.pop %v1912
    %v1914 = vmul.f32 %v1907, %v1913
    %1915 = vst [vmem:[#allocation5] sm:$0xff] %v1912
    %1916 = vst [vmem:[#allocation4] sm:$0xff] %v1914
    %s1917 = scalar_lea.vmem [#allocation3], 56
    %1918 = vst [vmem:[%s1917] sm:$0xff] %v1914
    %v1919 = vld [vmem:[#allocation3] sm:$0xff]
    %v1920 = vld [vmem:[#allocation3 + $0x8] sm:$0xff]
    %v1921 = vld [vmem:[#allocation3 + $0x10] sm:$0xff]
    %v1922 = vld [vmem:[#allocation3 + $0x18] sm:$0xff]
    %v1923 = vld [vmem:[#allocation3 + $0x20] sm:$0xff]
    %v1924 = vld [vmem:[#allocation3 + $0x28] sm:$0xff]
    %v1925 = vld [vmem:[#allocation3 + $0x30] sm:$0xff]
    %v1926 = vld [vmem:[#allocation3 + $0x38] sm:$0xff]
    %v1927 = vld [vmem:[#allocation8] sm:$0xff]
    %v1928 = vld [vmem:[#allocation8 + $0x8] sm:$0xff]
    %v1929 = vld [vmem:[#allocation8 + $0x10] sm:$0xff]
    %v1930 = vld [vmem:[#allocation8 + $0x18] sm:$0xff]
    %v1931 = vld [vmem:[#allocation8 + $0x20] sm:$0xff]
    %v1932 = vld [vmem:[#allocation8 + $0x28] sm:$0xff]
    %v1933 = vld [vmem:[#allocation8 + $0x30] sm:$0xff]
    %v1934 = vld [vmem:[#allocation8 + $0x38] sm:$0xff]
    %v1935 = vld [vmem:[#allocation8 + $0x40] sm:$0xff]
    %v1936 = vld [vmem:[#allocation8 + $0x48] sm:$0xff]
    %v1937 = vld [vmem:[#allocation8 + $0x50] sm:$0xff]
    %v1938 = vld [vmem:[#allocation8 + $0x58] sm:$0xff]
    %v1939 = vld [vmem:[#allocation8 + $0x60] sm:$0xff]
    %v1940 = vld [vmem:[#allocation8 + $0x68] sm:$0xff]
    %v1941 = vld [vmem:[#allocation8 + $0x70] sm:$0xff]
    %v1942 = vld [vmem:[#allocation8 + $0x78] sm:$0xff]
    %v1943 = vld [vmem:[#allocation8 + $0x80] sm:$0xff]
    %v1944 = vld [vmem:[#allocation8 + $0x88] sm:$0xff]
    %v1945 = vld [vmem:[#allocation8 + $0x90] sm:$0xff]
    %v1946 = vld [vmem:[#allocation8 + $0x98] sm:$0xff]
    %v1947 = vld [vmem:[#allocation8 + $0xa0] sm:$0xff]
    %v1948 = vld [vmem:[#allocation8 + $0xa8] sm:$0xff]
    %v1949 = vld [vmem:[#allocation8 + $0xb0] sm:$0xff]
    %v1950 = vld [vmem:[#allocation8 + $0xb8] sm:$0xff]
    %v1951 = vld [vmem:[#allocation8 + $0xc0] sm:$0xff]
    %v1952 = vld [vmem:[#allocation8 + $0xc8] sm:$0xff]
    %v1953 = vld [vmem:[#allocation8 + $0xd0] sm:$0xff]
    %v1954 = vld [vmem:[#allocation8 + $0xd8] sm:$0xff]
    %v1955 = vld [vmem:[#allocation8 + $0xe0] sm:$0xff]
    %v1956 = vld [vmem:[#allocation8 + $0xe8] sm:$0xff]
    %v1957 = vld [vmem:[#allocation8 + $0xf0] sm:$0xff]
    %v1958 = vld [vmem:[#allocation8 + $0xf8] sm:$0xff]
    %v1959 = vld [vmem:[#allocation8 + $0x100] sm:$0xff]
    %v1960 = vld [vmem:[#allocation8 + $0x108] sm:$0xff]
    %v1961 = vld [vmem:[#allocation8 + $0x110] sm:$0xff]
    %v1962 = vld [vmem:[#allocation8 + $0x118] sm:$0xff]
    %v1963 = vld [vmem:[#allocation8 + $0x120] sm:$0xff]
    %v1964 = vld [vmem:[#allocation8 + $0x128] sm:$0xff]
    %v1965 = vld [vmem:[#allocation8 + $0x130] sm:$0xff]
    %v1966 = vld [vmem:[#allocation8 + $0x138] sm:$0xff]
    %v1967 = vld [vmem:[#allocation8 + $0x140] sm:$0xff]
    %v1968 = vld [vmem:[#allocation8 + $0x148] sm:$0xff]
    %v1969 = vld [vmem:[#allocation8 + $0x150] sm:$0xff]
    %v1970 = vld [vmem:[#allocation8 + $0x158] sm:$0xff]
    %v1971 = vld [vmem:[#allocation8 + $0x160] sm:$0xff]
    %v1972 = vld [vmem:[#allocation8 + $0x168] sm:$0xff]
    %v1973 = vld [vmem:[#allocation8 + $0x170] sm:$0xff]
    %v1974 = vld [vmem:[#allocation8 + $0x178] sm:$0xff]
    %v1975 = vld [vmem:[#allocation8 + $0x180] sm:$0xff]
    %v1976 = vld [vmem:[#allocation8 + $0x188] sm:$0xff]
    %v1977 = vld [vmem:[#allocation8 + $0x190] sm:$0xff]
    %v1978 = vld [vmem:[#allocation8 + $0x198] sm:$0xff]
    %v1979 = vld [vmem:[#allocation8 + $0x1a0] sm:$0xff]
    %v1980 = vld [vmem:[#allocation8 + $0x1a8] sm:$0xff]
    %v1981 = vld [vmem:[#allocation8 + $0x1b0] sm:$0xff]
    %v1982 = vld [vmem:[#allocation8 + $0x1b8] sm:$0xff]
    %v1983 = vld [vmem:[#allocation8 + $0x1c0] sm:$0xff]
    %v1984 = vld [vmem:[#allocation8 + $0x1c8] sm:$0xff]
    %v1985 = vld [vmem:[#allocation8 + $0x1d0] sm:$0xff]
    %v1986 = vld [vmem:[#allocation8 + $0x1d8] sm:$0xff]
    %v1987 = vld [vmem:[#allocation8 + $0x1e0] sm:$0xff]
    %v1988 = vld [vmem:[#allocation8 + $0x1e8] sm:$0xff]
    %v1989 = vld [vmem:[#allocation8 + $0x1f0] sm:$0xff]
    %v1990 = vld [vmem:[#allocation8 + $0x1f8] sm:$0xff]
    %v1991 = vld [vmem:[%s6] sm:$0xf]
    %v1993 = vlaneseq
    %v1994 = vshrl.u32 %v1993, 7
    %v1995 = vsub.s32 0, %v1994
    %v1996 = vrot.slane %v1991, %v1995
    %v1997 = vlaneseq
    %v1998 = vshrl.u32 %v1997, 7
    %v1999 = vsub.s32 1, %v1998
    %v2000 = vrot.slane %v1991, %v1999
    %v2001 = vlaneseq
    %v2002 = vshrl.u32 %v2001, 7
    %v2003 = vsub.s32 2, %v2002
    %v2004 = vrot.slane %v1991, %v2003
    %v2005 = vlaneseq
    %v2006 = vshrl.u32 %v2005, 7
    %v2007 = vsub.s32 3, %v2006
    %v2008 = vrot.slane %v1991, %v2007
    %2013 = vmatprep.subr.mxu0 %v1928
    %2014 = vmatpush1.msra.mxu0 %v1927
    %2015 = vmatprep.subr.mxu0 %v1932
    %2016 = vmatpush1.msra.mxu0 %v1931
    %2017 = vmatprep.subr.mxu0 %v1936
    %2018 = vmatpush1.msra.mxu0 %v1935
    %2019 = vmatprep.subr.mxu0 %v1940
    %2020 = vmatpush1.msra.mxu0 %v1939
    %2021 = vmatprep.subr.mxu0 %v1944
    %2022 = vmatpush1.msra.mxu0 %v1943
    %2023 = vmatprep.subr.mxu0 %v1948
    %2024 = vmatpush1.msra.mxu0 %v1947
    %2025 = vmatprep.subr.mxu0 %v1952
    %2026 = vmatpush1.msra.mxu0 %v1951
    %2027 = vmatprep.subr.mxu0 %v1956
    %2028 = vmatpush1.msra.mxu0 %v1955
    %2029 = vmatprep.subr.mxu0 %v1960
    %2030 = vmatpush1.msra.mxu0 %v1959
    %2031 = vmatprep.subr.mxu0 %v1964
    %2032 = vmatpush1.msra.mxu0 %v1963
    %2033 = vmatprep.subr.mxu0 %v1968
    %2034 = vmatpush1.msra.mxu0 %v1967
    %2035 = vmatprep.subr.mxu0 %v1972
    %2036 = vmatpush1.msra.mxu0 %v1971
    %2037 = vmatprep.subr.mxu0 %v1976
    %2038 = vmatpush1.msra.mxu0 %v1975
    %2039 = vmatprep.subr.mxu0 %v1980
    %2040 = vmatpush1.msra.mxu0 %v1979
    %2041 = vmatprep.subr.mxu0 %v1984
    %2042 = vmatpush1.msra.mxu0 %v1983
    %2043 = vmatprep.subr.mxu0 %v1988
    %2044 = vmatpush1.msra.mxu0 %v1987
    %2045 = vmatprep.subr.mxu0 0.0
    %2046 = vmatpush1.msra.mxu0 0.0
    %2047 = vmatprep.subr.mxu0 0.0
    %2048 = vmatpush1.msra.mxu0 0.0
    %2049 = vmatprep.subr.mxu0 0.0
    %2050 = vmatpush1.msra.mxu0 0.0
    %2051 = vmatprep.subr.mxu0 0.0
    %2052 = vmatpush1.msra.mxu0 0.0
    %2053 = vmatprep.subr.mxu0 0.0
    %2054 = vmatpush1.msra.mxu0 0.0
    %2055 = vmatprep.subr.mxu0 0.0
    %2056 = vmatpush1.msra.mxu0 0.0
    %2057 = vmatprep.subr.mxu0 0.0
    %2058 = vmatpush1.msra.mxu0 0.0
    %2059 = vmatprep.subr.mxu0 0.0
    %2060 = vmatpush1.msra.mxu0 0.0
    %2061 = vmatprep.subr.mxu0 0.0
    %2062 = vmatpush1.msra.mxu0 0.0
    %2063 = vmatprep.subr.mxu0 0.0
    %2064 = vmatpush1.msra.mxu0 0.0
    %2065 = vmatprep.subr.mxu0 0.0
    %2066 = vmatpush1.msra.mxu0 0.0
    %2067 = vmatprep.subr.mxu0 0.0
    %2068 = vmatpush1.msra.mxu0 0.0
    %2069 = vmatprep.subr.mxu0 0.0
    %2070 = vmatpush1.msra.mxu0 0.0
    %2071 = vmatprep.subr.mxu0 0.0
    %2072 = vmatpush1.msra.mxu0 0.0
    %2073 = vmatprep.subr.mxu0 0.0
    %2074 = vmatpush1.msra.mxu0 0.0
    %2075 = vmatprep.subr.mxu0 0.0
    %2076 = vmatpush1.msra.mxu0 0.0
    %2077 = vmatprep.mubr.f32.mxu0 0.0
    %2078 = vmatmul.mubr.f32.gmra.mrb[0].mxu0 %v1919
    %v2079 = vpop.f32.mrb[0].mxu0
    %v2080 = vadd.f32 %v1996, %v2079
    %v2081 = vpop.f32.mrb[0].mxu0
    %v2082 = vadd.f32 %v2000, %v2081
    %2083 = vmatprep.mubr.f32.mxu0 0.0
    %2084 = vmatmul.mubr.f32.gmra.mrb[0].mxu0 %v1920
    %v2085 = vpop.f32.mrb[0].mxu0
    %v2086 = vadd.f32 %v1996, %v2085
    %v2087 = vpop.f32.mrb[0].mxu0
    %v2088 = vadd.f32 %v2000, %v2087
    %2089 = vmatprep.mubr.f32.mxu0 0.0
    %2090 = vmatmul.mubr.f32.gmra.mrb[0].mxu0 %v1921
    %v2091 = vpop.f32.mrb[0].mxu0
    %v2092 = vadd.f32 %v1996, %v2091
    %v2093 = vpop.f32.mrb[0].mxu0
    %v2094 = vadd.f32 %v2000, %v2093
    %2095 = vmatprep.mubr.f32.mxu0 0.0
    %2096 = vmatmul.mubr.f32.gmra.mrb[0].mxu0 %v1922
    %v2097 = vpop.f32.mrb[0].mxu0
    %v2098 = vadd.f32 %v1996, %v2097
    %v2099 = vpop.f32.mrb[0].mxu0
    %v2100 = vadd.f32 %v2000, %v2099
    %2101 = vmatprep.mubr.f32.mxu0 0.0
    %2102 = vmatmul.mubr.f32.gmra.mrb[0].mxu0 %v1923
    %v2103 = vpop.f32.mrb[0].mxu0
    %v2104 = vadd.f32 %v1996, %v2103
    %v2105 = vpop.f32.mrb[0].mxu0
    %v2106 = vadd.f32 %v2000, %v2105
    %2107 = vmatprep.mubr.f32.mxu0 0.0
    %2108 = vmatmul.mubr.f32.gmra.mrb[0].mxu0 %v1924
    %v2109 = vpop.f32.mrb[0].mxu0
    %v2110 = vadd.f32 %v1996, %v2109
    %v2111 = vpop.f32.mrb[0].mxu0
    %v2112 = vadd.f32 %v2000, %v2111
    %2113 = vmatprep.mubr.f32.mxu0 0.0
    %2114 = vmatmul.mubr.f32.gmra.mrb[0].mxu0 %v1925
    %v2115 = vpop.f32.mrb[0].mxu0
    %v2116 = vadd.f32 %v1996, %v2115
    %v2117 = vpop.f32.mrb[0].mxu0
    %v2118 = vadd.f32 %v2000, %v2117
    %2119 = vmatprep.mubr.f32.mxu0 0.0
    %2120 = vmatmul.mubr.f32.gmra.mrb[0].mxu0 %v1926
    %v2121 = vpop.f32.mrb[0].mxu0
    %v2122 = vadd.f32 %v1996, %v2121
    %v2123 = vpop.f32.mrb[0].mxu0
    %v2124 = vadd.f32 %v2000, %v2123
    %2125 = vdwg.mxu0
    %2126 = vmatprep.subr.mxu0 %v1930
    %2127 = vmatpush1.msra.mxu0 %v1929
    %2128 = vmatprep.subr.mxu0 %v1934
    %2129 = vmatpush1.msra.mxu0 %v1933
    %2130 = vmatprep.subr.mxu0 %v1938
    %2131 = vmatpush1.msra.mxu0 %v1937
    %2132 = vmatprep.subr.mxu0 %v1942
    %2133 = vmatpush1.msra.mxu0 %v1941
    %2134 = vmatprep.subr.mxu0 %v1946
    %2135 = vmatpush1.msra.mxu0 %v1945
    %2136 = vmatprep.subr.mxu0 %v1950
    %2137 = vmatpush1.msra.mxu0 %v1949
    %2138 = vmatprep.subr.mxu0 %v1954
    %2139 = vmatpush1.msra.mxu0 %v1953
    %2140 = vmatprep.subr.mxu0 %v1958
    %2141 = vmatpush1.msra.mxu0 %v1957
    %2142 = vmatprep.subr.mxu0 %v1962
    %2143 = vmatpush1.msra.mxu0 %v1961
    %2144 = vmatprep.subr.mxu0 %v1966
    %2145 = vmatpush1.msra.mxu0 %v1965
    %2146 = vmatprep.subr.mxu0 %v1970
    %2147 = vmatpush1.msra.mxu0 %v1969
    %2148 = vmatprep.subr.mxu0 %v1974
    %2149 = vmatpush1.msra.mxu0 %v1973
    %2150 = vmatprep.subr.mxu0 %v1978
    %2151 = vmatpush1.msra.mxu0 %v1977
    %2152 = vmatprep.subr.mxu0 %v1982
    %2153 = vmatpush1.msra.mxu0 %v1981
    %2154 = vmatprep.subr.mxu0 %v1986
    %2155 = vmatpush1.msra.mxu0 %v1985
    %2156 = vmatprep.subr.mxu0 %v1990
    %2157 = vmatpush1.msra.mxu0 %v1989
    %2158 = vmatprep.subr.mxu0 0.0
    %2159 = vmatpush1.msra.mxu0 0.0
    %2160 = vmatprep.subr.mxu0 0.0
    %2161 = vmatpush1.msra.mxu0 0.0
    %2162 = vmatprep.subr.mxu0 0.0
    %2163 = vmatpush1.msra.mxu0 0.0
    %2164 = vmatprep.subr.mxu0 0.0
    %2165 = vmatpush1.msra.mxu0 0.0
    %2166 = vmatprep.subr.mxu0 0.0
    %2167 = vmatpush1.msra.mxu0 0.0
    %2168 = vmatprep.subr.mxu0 0.0
    %2169 = vmatpush1.msra.mxu0 0.0
    %2170 = vmatprep.subr.mxu0 0.0
    %2171 = vmatpush1.msra.mxu0 0.0
    %2172 = vmatprep.subr.mxu0 0.0
    %2173 = vmatpush1.msra.mxu0 0.0
    %2174 = vmatprep.subr.mxu0 0.0
    %2175 = vmatpush1.msra.mxu0 0.0
    %2176 = vmatprep.subr.mxu0 0.0
    %2177 = vmatpush1.msra.mxu0 0.0
    %2178 = vmatprep.subr.mxu0 0.0
    %2179 = vmatpush1.msra.mxu0 0.0
    %2180 = vmatprep.subr.mxu0 0.0
    %2181 = vmatpush1.msra.mxu0 0.0
    %2182 = vmatprep.subr.mxu0 0.0
    %2183 = vmatpush1.msra.mxu0 0.0
    %2184 = vmatprep.subr.mxu0 0.0
    %2185 = vmatpush1.msra.mxu0 0.0
    %2186 = vmatprep.subr.mxu0 0.0
    %2187 = vmatpush1.msra.mxu0 0.0
    %2188 = vmatprep.subr.mxu0 0.0
    %2189 = vmatpush1.msra.mxu0 0.0
    %2190 = vmatprep.mubr.f32.mxu0 0.0
    %2191 = vmatmul.mubr.f32.gmra.mrb[0].mxu0 %v1919
    %v2192 = vpop.f32.mrb[0].mxu0
    %v2193 = vadd.f32 %v2004, %v2192
    %v2194 = vpop.f32.mrb[0].mxu0
    %v2195 = vadd.f32 %v2008, %v2194
    %2196 = vmatprep.mubr.f32.mxu0 0.0
    %2197 = vmatmul.mubr.f32.gmra.mrb[0].mxu0 %v1920
    %v2198 = vpop.f32.mrb[0].mxu0
    %v2199 = vadd.f32 %v2004, %v2198
    %v2200 = vpop.f32.mrb[0].mxu0
    %v2201 = vadd.f32 %v2008, %v2200
    %2202 = vmatprep.mubr.f32.mxu0 0.0
    %2203 = vmatmul.mubr.f32.gmra.mrb[0].mxu0 %v1921
    %v2204 = vpop.f32.mrb[0].mxu0
    %v2205 = vadd.f32 %v2004, %v2204
    %v2206 = vpop.f32.mrb[0].mxu0
    %v2207 = vadd.f32 %v2008, %v2206
    %2208 = vmatprep.mubr.f32.mxu0 0.0
    %2209 = vmatmul.mubr.f32.gmra.mrb[0].mxu0 %v1922
    %v2210 = vpop.f32.mrb[0].mxu0
    %v2211 = vadd.f32 %v2004, %v2210
    %v2212 = vpop.f32.mrb[0].mxu0
    %v2213 = vadd.f32 %v2008, %v2212
    %2214 = vmatprep.mubr.f32.mxu0 0.0
    %2215 = vmatmul.mubr.f32.gmra.mrb[0].mxu0 %v1923
    %v2216 = vpop.f32.mrb[0].mxu0
    %v2217 = vadd.f32 %v2004, %v2216
    %v2218 = vpop.f32.mrb[0].mxu0
    %v2219 = vadd.f32 %v2008, %v2218
    %2220 = vmatprep.mubr.f32.mxu0 0.0
    %2221 = vmatmul.mubr.f32.gmra.mrb[0].mxu0 %v1924
    %v2222 = vpop.f32.mrb[0].mxu0
    %v2223 = vadd.f32 %v2004, %v2222
    %v2224 = vpop.f32.mrb[0].mxu0
    %v2225 = vadd.f32 %v2008, %v2224
    %2226 = vmatprep.mubr.f32.mxu0 0.0
    %2227 = vmatmul.mubr.f32.gmra.mrb[0].mxu0 %v1925
    %v2228 = vpop.f32.mrb[0].mxu0
    %v2229 = vadd.f32 %v2004, %v2228
    %v2230 = vpop.f32.mrb[0].mxu0
    %v2231 = vadd.f32 %v2008, %v2230
    %2232 = vmatprep.mubr.f32.mxu0 0.0
    %2233 = vmatmul.mubr.f32.gmra.mrb[0].mxu0 %v1926
    %v2234 = vpop.f32.mrb[0].mxu0
    %v2235 = vadd.f32 %v2004, %v2234
    %v2236 = vpop.f32.mrb[0].mxu0
    %v2237 = vadd.f32 %v2008, %v2236
    %2238 = vdwg.mxu0
    %2239 = vst [vmem:[#allocation2] sm:$0xff] %v2080
    %2240 = vst [vmem:[#allocation2 + $0x8] sm:$0xff] %v2082
    %2241 = vst [vmem:[#allocation2 + $0x10] sm:$0xff] %v2193
    %2242 = vst [vmem:[#allocation2 + $0x18] sm:$0xff] %v2195
    %2243 = vst [vmem:[#allocation2 + $0x20] sm:$0xff] %v2086
    %2244 = vst [vmem:[#allocation2 + $0x28] sm:$0xff] %v2088
    %2245 = vst [vmem:[#allocation2 + $0x30] sm:$0xff] %v2199
    %2246 = vst [vmem:[#allocation2 + $0x38] sm:$0xff] %v2201
    %2247 = vst [vmem:[#allocation2 + $0x40] sm:$0xff] %v2092
    %2248 = vst [vmem:[#allocation2 + $0x48] sm:$0xff] %v2094
    %2249 = vst [vmem:[#allocation2 + $0x50] sm:$0xff] %v2205
    %2250 = vst [vmem:[#allocation2 + $0x58] sm:$0xff] %v2207
    %2251 = vst [vmem:[#allocation2 + $0x60] sm:$0xff] %v2098
    %2252 = vst [vmem:[#allocation2 + $0x68] sm:$0xff] %v2100
    %2253 = vst [vmem:[#allocation2 + $0x70] sm:$0xff] %v2211
    %2254 = vst [vmem:[#allocation2 + $0x78] sm:$0xff] %v2213
    %2255 = vst [vmem:[#allocation2 + $0x80] sm:$0xff] %v2104
    %2256 = vst [vmem:[#allocation2 + $0x88] sm:$0xff] %v2106
    %2257 = vst [vmem:[#allocation2 + $0x90] sm:$0xff] %v2217
    %2258 = vst [vmem:[#allocation2 + $0x98] sm:$0xff] %v2219
    %2259 = vst [vmem:[#allocation2 + $0xa0] sm:$0xff] %v2110
    %2260 = vst [vmem:[#allocation2 + $0xa8] sm:$0xff] %v2112
    %2261 = vst [vmem:[#allocation2 + $0xb0] sm:$0xff] %v2223
    %2262 = vst [vmem:[#allocation2 + $0xb8] sm:$0xff] %v2225
    %2263 = vst [vmem:[#allocation2 + $0xc0] sm:$0xff] %v2116
    %2264 = vst [vmem:[#allocation2 + $0xc8] sm:$0xff] %v2118
    %2265 = vst [vmem:[#allocation2 + $0xd0] sm:$0xff] %v2229
    %2266 = vst [vmem:[#allocation2 + $0xd8] sm:$0xff] %v2231
    %2267 = vst [vmem:[#allocation2 + $0xe0] sm:$0xff] %v2122
    %2268 = vst [vmem:[#allocation2 + $0xe8] sm:$0xff] %v2124
    %2269 = vst [vmem:[#allocation2 + $0xf0] sm:$0xff] %v2235
    %2270 = vst [vmem:[#allocation2 + $0xf8] sm:$0xff] %v2237
    %2271 = vst [vmem:[#allocation4] sm:$0xff] 0.0
    %2272 = vst [vmem:[#allocation5] sm:$0xff] 0.0
    %v2273 = vld [vmem:[#allocation10] sm:$0xff]
    %v2274 = vld [vmem:[#allocation10 + $0x8] sm:$0xff]
    %v2275 = vld [vmem:[#allocation10 + $0x10] sm:$0xff]
    %v2276 = vld [vmem:[#allocation10 + $0x18] sm:$0xff]
    %v2277 = vld [vmem:[#allocation10 + $0x20] sm:$0xff]
    %v2278 = vld [vmem:[#allocation10 + $0x28] sm:$0xff]
    %v2279 = vld [vmem:[#allocation10 + $0x30] sm:$0xff]
    %v2280 = vld [vmem:[#allocation10 + $0x38] sm:$0xff]
    %v2281 = vld [vmem:[#allocation10 + $0x40] sm:$0xff]
    %v2282 = vld [vmem:[#allocation10 + $0x48] sm:$0xff]
    %v2283 = vld [vmem:[#allocation10 + $0x50] sm:$0xff]
    %v2284 = vld [vmem:[#allocation10 + $0x58] sm:$0xff]
    %v2285 = vld [vmem:[#allocation10 + $0x60] sm:$0xff]
    %v2286 = vld [vmem:[#allocation10 + $0x68] sm:$0xff]
    %v2287 = vld [vmem:[#allocation10 + $0x70] sm:$0xff]
    %v2288 = vld [vmem:[#allocation10 + $0x78] sm:$0xff]
    %v2289 = vld [vmem:[#allocation10 + $0x80] sm:$0xff]
    %v2290 = vld [vmem:[#allocation10 + $0x88] sm:$0xff]
    %v2291 = vld [vmem:[#allocation10 + $0x90] sm:$0xff]
    %v2292 = vld [vmem:[#allocation10 + $0x98] sm:$0xff]
    %v2293 = vld [vmem:[#allocation10 + $0xa0] sm:$0xff]
    %v2294 = vld [vmem:[#allocation10 + $0xa8] sm:$0xff]
    %v2295 = vld [vmem:[#allocation10 + $0xb0] sm:$0xff]
    %v2296 = vld [vmem:[#allocation10 + $0xb8] sm:$0xff]
    %v2297 = vld [vmem:[#allocation10 + $0xc0] sm:$0xff]
    %v2298 = vld [vmem:[#allocation10 + $0xc8] sm:$0xff]
    %v2299 = vld [vmem:[#allocation10 + $0xd0] sm:$0xff]
    %v2300 = vld [vmem:[#allocation10 + $0xd8] sm:$0xff]
    %v2301 = vld [vmem:[#allocation10 + $0xe0] sm:$0xff]
    %v2302 = vld [vmem:[#allocation10 + $0xe8] sm:$0xff]
    %v2303 = vld [vmem:[#allocation10 + $0xf0] sm:$0xff]
    %v2304 = vld [vmem:[#allocation10 + $0xf8] sm:$0xff]
    %v2305 = vld [vmem:[#allocation10 + $0x100] sm:$0xff]
    %v2306 = vld [vmem:[#allocation10 + $0x108] sm:$0xff]
    %v2307 = vld [vmem:[#allocation10 + $0x110] sm:$0xff]
    %v2308 = vld [vmem:[#allocation10 + $0x118] sm:$0xff]
    %v2309 = vld [vmem:[#allocation10 + $0x120] sm:$0xff]
    %v2310 = vld [vmem:[#allocation10 + $0x128] sm:$0xff]
    %v2311 = vld [vmem:[#allocation10 + $0x130] sm:$0xff]
    %v2312 = vld [vmem:[#allocation10 + $0x138] sm:$0xff]
    %v2313 = vld [vmem:[#allocation10 + $0x140] sm:$0xff]
    %v2314 = vld [vmem:[#allocation10 + $0x148] sm:$0xff]
    %v2315 = vld [vmem:[#allocation10 + $0x150] sm:$0xff]
    %v2316 = vld [vmem:[#allocation10 + $0x158] sm:$0xff]
    %v2317 = vld [vmem:[#allocation10 + $0x160] sm:$0xff]
    %v2318 = vld [vmem:[#allocation10 + $0x168] sm:$0xff]
    %v2319 = vld [vmem:[#allocation10 + $0x170] sm:$0xff]
    %v2320 = vld [vmem:[#allocation10 + $0x178] sm:$0xff]
    %v2321 = vld [vmem:[#allocation10 + $0x180] sm:$0xff]
    %v2322 = vld [vmem:[#allocation10 + $0x188] sm:$0xff]
    %v2323 = vld [vmem:[#allocation10 + $0x190] sm:$0xff]
    %v2324 = vld [vmem:[#allocation10 + $0x198] sm:$0xff]
    %v2325 = vld [vmem:[#allocation10 + $0x1a0] sm:$0xff]
    %v2326 = vld [vmem:[#allocation10 + $0x1a8] sm:$0xff]
    %v2327 = vld [vmem:[#allocation10 + $0x1b0] sm:$0xff]
    %v2328 = vld [vmem:[#allocation10 + $0x1b8] sm:$0xff]
    %v2329 = vld [vmem:[#allocation10 + $0x1c0] sm:$0xff]
    %v2330 = vld [vmem:[#allocation10 + $0x1c8] sm:$0xff]
    %v2331 = vld [vmem:[#allocation10 + $0x1d0] sm:$0xff]
    %v2332 = vld [vmem:[#allocation10 + $0x1d8] sm:$0xff]
    %v2333 = vld [vmem:[#allocation10 + $0x1e0] sm:$0xff]
    %v2334 = vld [vmem:[#allocation10 + $0x1e8] sm:$0xff]
    %v2335 = vld [vmem:[#allocation10 + $0x1f0] sm:$0xff]
    %v2336 = vld [vmem:[#allocation10 + $0x1f8] sm:$0xff]
    %v2337 = vld [vmem:[%s458] sm:$0xff]
    %v2338 = vld [vmem:[%s458 + $0x8] sm:$0xff]
    %v2339 = vld [vmem:[%s458 + $0x10] sm:$0xff]
    %v2340 = vld [vmem:[%s458 + $0x18] sm:$0xff]
    %v2341 = vld [vmem:[#allocation4] sm:$0xff]
    %2342 = vmatprep.subr.mxu0 %v2274
    %2343 = vmatpush1.msra.mxu0 %v2273
    %2344 = vmatprep.subr.mxu0 %v2278
    %2345 = vmatpush1.msra.mxu0 %v2277
    %2346 = vmatprep.subr.mxu0 %v2282
    %2347 = vmatpush1.msra.mxu0 %v2281
    %2348 = vmatprep.subr.mxu0 %v2286
    %2349 = vmatpush1.msra.mxu0 %v2285
    %2350 = vmatprep.subr.mxu0 %v2290
    %2351 = vmatpush1.msra.mxu0 %v2289
    %2352 = vmatprep.subr.mxu0 %v2294
    %2353 = vmatpush1.msra.mxu0 %v2293
    %2354 = vmatprep.subr.mxu0 %v2298
    %2355 = vmatpush1.msra.mxu0 %v2297
    %2356 = vmatprep.subr.mxu0 %v2302
    %2357 = vmatpush1.msra.mxu0 %v2301
    %2358 = vmatprep.subr.mxu0 %v2306
    %2359 = vmatpush1.msra.mxu0 %v2305
    %2360 = vmatprep.subr.mxu0 %v2310
    %2361 = vmatpush1.msra.mxu0 %v2309
    %2362 = vmatprep.subr.mxu0 %v2314
    %2363 = vmatpush1.msra.mxu0 %v2313
    %2364 = vmatprep.subr.mxu0 %v2318
    %2365 = vmatpush1.msra.mxu0 %v2317
    %2366 = vmatprep.subr.mxu0 %v2322
    %2367 = vmatpush1.msra.mxu0 %v2321
    %2368 = vmatprep.subr.mxu0 %v2326
    %2369 = vmatpush1.msra.mxu0 %v2325
    %2370 = vmatprep.subr.mxu0 %v2330
    %2371 = vmatpush1.msra.mxu0 %v2329
    %2372 = vmatprep.subr.mxu0 %v2334
    %2373 = vmatpush1.msra.mxu0 %v2333
    %2374 = vmatprep.subr.mxu0 0.0
    %2375 = vmatpush1.msra.mxu0 0.0
    %2376 = vmatprep.subr.mxu0 0.0
    %2377 = vmatpush1.msra.mxu0 0.0
    %2378 = vmatprep.subr.mxu0 0.0
    %2379 = vmatpush1.msra.mxu0 0.0
    %2380 = vmatprep.subr.mxu0 0.0
    %2381 = vmatpush1.msra.mxu0 0.0
    %2382 = vmatprep.subr.mxu0 0.0
    %2383 = vmatpush1.msra.mxu0 0.0
    %2384 = vmatprep.subr.mxu0 0.0
    %2385 = vmatpush1.msra.mxu0 0.0
    %2386 = vmatprep.subr.mxu0 0.0
    %2387 = vmatpush1.msra.mxu0 0.0
    %2388 = vmatprep.subr.mxu0 0.0
    %2389 = vmatpush1.msra.mxu0 0.0
    %2390 = vmatprep.subr.mxu0 0.0
    %2391 = vmatpush1.msra.mxu0 0.0
    %2392 = vmatprep.subr.mxu0 0.0
    %2393 = vmatpush1.msra.mxu0 0.0
    %2394 = vmatprep.subr.mxu0 0.0
    %2395 = vmatpush1.msra.mxu0 0.0
    %2396 = vmatprep.subr.mxu0 0.0
    %2397 = vmatpush1.msra.mxu0 0.0
    %2398 = vmatprep.subr.mxu0 0.0
    %2399 = vmatpush1.msra.mxu0 0.0
    %2400 = vmatprep.subr.mxu0 0.0
    %2401 = vmatpush1.msra.mxu0 0.0
    %2402 = vmatprep.subr.mxu0 0.0
    %2403 = vmatpush1.msra.mxu0 0.0
    %2404 = vmatprep.subr.mxu0 0.0
    %2405 = vmatpush1.msra.mxu0 0.0
    %2406 = vmatprep.mubr.f32.mxu0 0.0
    %2407 = vmatmul.mubr.f32.gmra.mrb[0].mxu0 %v2341
    %v2408 = vpop.f32.mrb[0].mxu0
    %v2409 = vadd.f32 0.0, %v2408
    %v2410 = vpop.f32.mrb[0].mxu0
    %v2411 = vadd.f32 0.0, %v2410
    %2412 = vdwg.mxu0
    %2413 = vmatprep.subr.mxu0 %v2276
    %2414 = vmatpush1.msra.mxu0 %v2275
    %2415 = vmatprep.subr.mxu0 %v2280
    %2416 = vmatpush1.msra.mxu0 %v2279
    %2417 = vmatprep.subr.mxu0 %v2284
    %2418 = vmatpush1.msra.mxu0 %v2283
    %2419 = vmatprep.subr.mxu0 %v2288
    %2420 = vmatpush1.msra.mxu0 %v2287
    %2421 = vmatprep.subr.mxu0 %v2292
    %2422 = vmatpush1.msra.mxu0 %v2291
    %2423 = vmatprep.subr.mxu0 %v2296
    %2424 = vmatpush1.msra.mxu0 %v2295
    %2425 = vmatprep.subr.mxu0 %v2300
    %2426 = vmatpush1.msra.mxu0 %v2299
    %2427 = vmatprep.subr.mxu0 %v2304
    %2428 = vmatpush1.msra.mxu0 %v2303
    %2429 = vmatprep.subr.mxu0 %v2308
    %2430 = vmatpush1.msra.mxu0 %v2307
    %2431 = vmatprep.subr.mxu0 %v2312
    %2432 = vmatpush1.msra.mxu0 %v2311
    %2433 = vmatprep.subr.mxu0 %v2316
    %2434 = vmatpush1.msra.mxu0 %v2315
    %2435 = vmatprep.subr.mxu0 %v2320
    %2436 = vmatpush1.msra.mxu0 %v2319
    %2437 = vmatprep.subr.mxu0 %v2324
    %2438 = vmatpush1.msra.mxu0 %v2323
    %2439 = vmatprep.subr.mxu0 %v2328
    %2440 = vmatpush1.msra.mxu0 %v2327
    %2441 = vmatprep.subr.mxu0 %v2332
    %2442 = vmatpush1.msra.mxu0 %v2331
    %2443 = vmatprep.subr.mxu0 %v2336
    %2444 = vmatpush1.msra.mxu0 %v2335
    %2445 = vmatprep.subr.mxu0 0.0
    %2446 = vmatpush1.msra.mxu0 0.0
    %2447 = vmatprep.subr.mxu0 0.0
    %2448 = vmatpush1.msra.mxu0 0.0
    %2449 = vmatprep.subr.mxu0 0.0
    %2450 = vmatpush1.msra.mxu0 0.0
    %2451 = vmatprep.subr.mxu0 0.0
    %2452 = vmatpush1.msra.mxu0 0.0
    %2453 = vmatprep.subr.mxu0 0.0
    %2454 = vmatpush1.msra.mxu0 0.0
    %2455 = vmatprep.subr.mxu0 0.0
    %2456 = vmatpush1.msra.mxu0 0.0
    %2457 = vmatprep.subr.mxu0 0.0
    %2458 = vmatpush1.msra.mxu0 0.0
    %2459 = vmatprep.subr.mxu0 0.0
    %2460 = vmatpush1.msra.mxu0 0.0
    %2461 = vmatprep.subr.mxu0 0.0
    %2462 = vmatpush1.msra.mxu0 0.0
    %2463 = vmatprep.subr.mxu0 0.0
    %2464 = vmatpush1.msra.mxu0 0.0
    %2465 = vmatprep.subr.mxu0 0.0
    %2466 = vmatpush1.msra.mxu0 0.0
    %2467 = vmatprep.subr.mxu0 0.0
    %2468 = vmatpush1.msra.mxu0 0.0
    %2469 = vmatprep.subr.mxu0 0.0
    %2470 = vmatpush1.msra.mxu0 0.0
    %2471 = vmatprep.subr.mxu0 0.0
    %2472 = vmatpush1.msra.mxu0 0.0
    %2473 = vmatprep.subr.mxu0 0.0
    %2474 = vmatpush1.msra.mxu0 0.0
    %2475 = vmatprep.subr.mxu0 0.0
    %2476 = vmatpush1.msra.mxu0 0.0
    %2477 = vmatprep.mubr.f32.mxu0 0.0
    %2478 = vmatmul.mubr.f32.gmra.mrb[0].mxu0 %v2341
    %v2479 = vpop.f32.mrb[0].mxu0
    %v2480 = vadd.f32 0.0, %v2479
    %v2481 = vpop.f32.mrb[0].mxu0
    %v2482 = vadd.f32 0.0, %v2481
    %2483 = vdwg.mxu0
    %v2484 = vadd.f32 %v2337, %v2409
    %v2485 = vadd.f32 %v2338, %v2411
    %v2486 = vadd.f32 %v2339, %v2480
    %v2487 = vadd.f32 %v2340, %v2482
    %v2488 = vxor.u32 %v2484, 2147483648
    %v2489 = vxor.u32 %v2485, 2147483648
    %v2490 = vxor.u32 %v2486, 2147483648
    %v2491 = vmul.f32 %v2488, 1.442695
    %v2492 = vpow.pop %v2491
    %v2493 = vmul.f32 %v2489, 1.442695
    %v2494 = vpow.pop %v2493
    %v2495 = vmul.f32 %v2490, 1.442695
    %v2496 = vpow.pop %v2495
    %v2497 = vadd.f32 %v2492, 1.0
    %v2498 = vadd.f32 %v2494, 1.0
    %v2499 = vadd.f32 %v2496, 1.0
    %v2500 = vrcp.pop %v2497
    %v2501 = vmul.f32 1.0, %v2500
    %v2502 = vrcp.pop %v2498
    %v2503 = vmul.f32 1.0, %v2502
    %v2504 = vrcp.pop %v2499
    %v2505 = vmul.f32 1.0, %v2504
    %v2506 = vtanh.pop %v2487
    %v2507 = vld [vmem:[#allocation5] sm:$0xff]
    %v2508 = vmul.f32 %v2503, %v2507
    %v2509 = vmul.f32 %v2501, %v2506
    %v2510 = vadd.f32 %v2508, %v2509
    %v2511 = vtanh.pop %v2510
    %v2512 = vmul.f32 %v2505, %v2511
    %2513 = vst [vmem:[#allocation5] sm:$0xff] %v2510
    %2514 = vst [vmem:[#allocation4] sm:$0xff] %v2512
    %v2515 = vld [vmem:[%s640] sm:$0xff]
    %v2516 = vld [vmem:[%s640 + $0x8] sm:$0xff]
    %v2517 = vld [vmem:[%s640 + $0x10] sm:$0xff]
    %v2518 = vld [vmem:[%s640 + $0x18] sm:$0xff]
    %v2519 = vld [vmem:[#allocation4] sm:$0xff]
    %2520 = vmatprep.subr.mxu0 %v2274
    %2521 = vmatpush1.msra.mxu0 %v2273
    %2522 = vmatprep.subr.mxu0 %v2278
    %2523 = vmatpush1.msra.mxu0 %v2277
    %2524 = vmatprep.subr.mxu0 %v2282
    %2525 = vmatpush1.msra.mxu0 %v2281
    %2526 = vmatprep.subr.mxu0 %v2286
    %2527 = vmatpush1.msra.mxu0 %v2285
    %2528 = vmatprep.subr.mxu0 %v2290
    %2529 = vmatpush1.msra.mxu0 %v2289
    %2530 = vmatprep.subr.mxu0 %v2294
    %2531 = vmatpush1.msra.mxu0 %v2293
    %2532 = vmatprep.subr.mxu0 %v2298
    %2533 = vmatpush1.msra.mxu0 %v2297
    %2534 = vmatprep.subr.mxu0 %v2302
    %2535 = vmatpush1.msra.mxu0 %v2301
    %2536 = vmatprep.subr.mxu0 %v2306
    %2537 = vmatpush1.msra.mxu0 %v2305
    %2538 = vmatprep.subr.mxu0 %v2310
    %2539 = vmatpush1.msra.mxu0 %v2309
    %2540 = vmatprep.subr.mxu0 %v2314
    %2541 = vmatpush1.msra.mxu0 %v2313
    %2542 = vmatprep.subr.mxu0 %v2318
    %2543 = vmatpush1.msra.mxu0 %v2317
    %2544 = vmatprep.subr.mxu0 %v2322
    %2545 = vmatpush1.msra.mxu0 %v2321
    %2546 = vmatprep.subr.mxu0 %v2326
    %2547 = vmatpush1.msra.mxu0 %v2325
    %2548 = vmatprep.subr.mxu0 %v2330
    %2549 = vmatpush1.msra.mxu0 %v2329
    %2550 = vmatprep.subr.mxu0 %v2334
    %2551 = vmatpush1.msra.mxu0 %v2333
    %2552 = vmatprep.subr.mxu0 0.0
    %2553 = vmatpush1.msra.mxu0 0.0
    %2554 = vmatprep.subr.mxu0 0.0
    %2555 = vmatpush1.msra.mxu0 0.0
    %2556 = vmatprep.subr.mxu0 0.0
    %2557 = vmatpush1.msra.mxu0 0.0
    %2558 = vmatprep.subr.mxu0 0.0
    %2559 = vmatpush1.msra.mxu0 0.0
    %2560 = vmatprep.subr.mxu0 0.0
    %2561 = vmatpush1.msra.mxu0 0.0
    %2562 = vmatprep.subr.mxu0 0.0
    %2563 = vmatpush1.msra.mxu0 0.0
    %2564 = vmatprep.subr.mxu0 0.0
    %2565 = vmatpush1.msra.mxu0 0.0
    %2566 = vmatprep.subr.mxu0 0.0
    %2567 = vmatpush1.msra.mxu0 0.0
    %2568 = vmatprep.subr.mxu0 0.0
    %2569 = vmatpush1.msra.mxu0 0.0
    %2570 = vmatprep.subr.mxu0 0.0
    %2571 = vmatpush1.msra.mxu0 0.0
    %2572 = vmatprep.subr.mxu0 0.0
    %2573 = vmatpush1.msra.mxu0 0.0
    %2574 = vmatprep.subr.mxu0 0.0
    %2575 = vmatpush1.msra.mxu0 0.0
    %2576 = vmatprep.subr.mxu0 0.0
    %2577 = vmatpush1.msra.mxu0 0.0
    %2578 = vmatprep.subr.mxu0 0.0
    %2579 = vmatpush1.msra.mxu0 0.0
    %2580 = vmatprep.subr.mxu0 0.0
    %2581 = vmatpush1.msra.mxu0 0.0
    %2582 = vmatprep.subr.mxu0 0.0
    %2583 = vmatpush1.msra.mxu0 0.0
    %2584 = vmatprep.mubr.f32.mxu0 0.0
    %2585 = vmatmul.mubr.f32.gmra.mrb[0].mxu0 %v2519
    %v2586 = vpop.f32.mrb[0].mxu0
    %v2587 = vadd.f32 0.0, %v2586
    %v2588 = vpop.f32.mrb[0].mxu0
    %v2589 = vadd.f32 0.0, %v2588
    %2590 = vdwg.mxu0
    %2591 = vmatprep.subr.mxu0 %v2276
    %2592 = vmatpush1.msra.mxu0 %v2275
    %2593 = vmatprep.subr.mxu0 %v2280
    %2594 = vmatpush1.msra.mxu0 %v2279
    %2595 = vmatprep.subr.mxu0 %v2284
    %2596 = vmatpush1.msra.mxu0 %v2283
    %2597 = vmatprep.subr.mxu0 %v2288
    %2598 = vmatpush1.msra.mxu0 %v2287
    %2599 = vmatprep.subr.mxu0 %v2292
    %2600 = vmatpush1.msra.mxu0 %v2291
    %2601 = vmatprep.subr.mxu0 %v2296
    %2602 = vmatpush1.msra.mxu0 %v2295
    %2603 = vmatprep.subr.mxu0 %v2300
    %2604 = vmatpush1.msra.mxu0 %v2299
    %2605 = vmatprep.subr.mxu0 %v2304
    %2606 = vmatpush1.msra.mxu0 %v2303
    %2607 = vmatprep.subr.mxu0 %v2308
    %2608 = vmatpush1.msra.mxu0 %v2307
    %2609 = vmatprep.subr.mxu0 %v2312
    %2610 = vmatpush1.msra.mxu0 %v2311
    %2611 = vmatprep.subr.mxu0 %v2316
    %2612 = vmatpush1.msra.mxu0 %v2315
    %2613 = vmatprep.subr.mxu0 %v2320
    %2614 = vmatpush1.msra.mxu0 %v2319
    %2615 = vmatprep.subr.mxu0 %v2324
    %2616 = vmatpush1.msra.mxu0 %v2323
    %2617 = vmatprep.subr.mxu0 %v2328
    %2618 = vmatpush1.msra.mxu0 %v2327
    %2619 = vmatprep.subr.mxu0 %v2332
    %2620 = vmatpush1.msra.mxu0 %v2331
    %2621 = vmatprep.subr.mxu0 %v2336
    %2622 = vmatpush1.msra.mxu0 %v2335
    %2623 = vmatprep.subr.mxu0 0.0
    %2624 = vmatpush1.msra.mxu0 0.0
    %2625 = vmatprep.subr.mxu0 0.0
    %2626 = vmatpush1.msra.mxu0 0.0
    %2627 = vmatprep.subr.mxu0 0.0
    %2628 = vmatpush1.msra.mxu0 0.0
    %2629 = vmatprep.subr.mxu0 0.0
    %2630 = vmatpush1.msra.mxu0 0.0
    %2631 = vmatprep.subr.mxu0 0.0
    %2632 = vmatpush1.msra.mxu0 0.0
    %2633 = vmatprep.subr.mxu0 0.0
    %2634 = vmatpush1.msra.mxu0 0.0
    %2635 = vmatprep.subr.mxu0 0.0
    %2636 = vmatpush1.msra.mxu0 0.0
    %2637 = vmatprep.subr.mxu0 0.0
    %2638 = vmatpush1.msra.mxu0 0.0
    %2639 = vmatprep.subr.mxu0 0.0
    %2640 = vmatpush1.msra.mxu0 0.0
    %2641 = vmatprep.subr.mxu0 0.0
    %2642 = vmatpush1.msra.mxu0 0.0
    %2643 = vmatprep.subr.mxu0 0.0
    %2644 = vmatpush1.msra.mxu0 0.0
    %2645 = vmatprep.subr.mxu0 0.0
    %2646 = vmatpush1.msra.mxu0 0.0
    %2647 = vmatprep.subr.mxu0 0.0
    %2648 = vmatpush1.msra.mxu0 0.0
    %2649 = vmatprep.subr.mxu0 0.0
    %2650 = vmatpush1.msra.mxu0 0.0
    %2651 = vmatprep.subr.mxu0 0.0
    %2652 = vmatpush1.msra.mxu0 0.0
    %2653 = vmatprep.subr.mxu0 0.0
    %2654 = vmatpush1.msra.mxu0 0.0
    %2655 = vmatprep.mubr.f32.mxu0 0.0
    %2656 = vmatmul.mubr.f32.gmra.mrb[0].mxu0 %v2519
    %v2657 = vpop.f32.mrb[0].mxu0
    %v2658 = vadd.f32 0.0, %v2657
    %v2659 = vpop.f32.mrb[0].mxu0
    %v2660 = vadd.f32 0.0, %v2659
    %2661 = vdwg.mxu0
    %v2662 = vadd.f32 %v2515, %v2587
    %v2663 = vadd.f32 %v2516, %v2589
    %v2664 = vadd.f32 %v2517, %v2658
    %v2665 = vadd.f32 %v2518, %v2660
    %v2666 = vxor.u32 %v2662, 2147483648
    %v2667 = vxor.u32 %v2663, 2147483648
    %v2668 = vxor.u32 %v2664, 2147483648
    %v2669 = vmul.f32 %v2666, 1.442695
    %v2670 = vpow.pop %v2669
    %v2671 = vmul.f32 %v2667, 1.442695
    %v2672 = vpow.pop %v2671
    %v2673 = vmul.f32 %v2668, 1.442695
    %v2674 = vpow.pop %v2673
    %v2675 = vadd.f32 %v2670, 1.0
    %v2676 = vadd.f32 %v2672, 1.0
    %v2677 = vadd.f32 %v2674, 1.0
    %v2678 = vrcp.pop %v2675
    %v2679 = vmul.f32 1.0, %v2678
    %v2680 = vrcp.pop %v2676
    %v2681 = vmul.f32 1.0, %v2680
    %v2682 = vrcp.pop %v2677
    %v2683 = vmul.f32 1.0, %v2682
    %v2684 = vtanh.pop %v2665
    %v2685 = vld [vmem:[#allocation5] sm:$0xff]
    %v2686 = vmul.f32 %v2681, %v2685
    %v2687 = vmul.f32 %v2679, %v2684
    %v2688 = vadd.f32 %v2686, %v2687
    %v2689 = vtanh.pop %v2688
    %v2690 = vmul.f32 %v2683, %v2689
    %2691 = vst [vmem:[#allocation5] sm:$0xff] %v2688
    %2692 = vst [vmem:[#allocation4] sm:$0xff] %v2690
    %v2693 = vld [vmem:[%s823] sm:$0xff]
    %v2694 = vld [vmem:[%s823 + $0x8] sm:$0xff]
    %v2695 = vld [vmem:[%s823 + $0x10] sm:$0xff]
    %v2696 = vld [vmem:[%s823 + $0x18] sm:$0xff]
    %v2697 = vld [vmem:[#allocation4] sm:$0xff]
    %2698 = vmatprep.subr.mxu0 %v2274
    %2699 = vmatpush1.msra.mxu0 %v2273
    %2700 = vmatprep.subr.mxu0 %v2278
    %2701 = vmatpush1.msra.mxu0 %v2277
    %2702 = vmatprep.subr.mxu0 %v2282
    %2703 = vmatpush1.msra.mxu0 %v2281
    %2704 = vmatprep.subr.mxu0 %v2286
    %2705 = vmatpush1.msra.mxu0 %v2285
    %2706 = vmatprep.subr.mxu0 %v2290
    %2707 = vmatpush1.msra.mxu0 %v2289
    %2708 = vmatprep.subr.mxu0 %v2294
    %2709 = vmatpush1.msra.mxu0 %v2293
    %2710 = vmatprep.subr.mxu0 %v2298
    %2711 = vmatpush1.msra.mxu0 %v2297
    %2712 = vmatprep.subr.mxu0 %v2302
    %2713 = vmatpush1.msra.mxu0 %v2301
    %2714 = vmatprep.subr.mxu0 %v2306
    %2715 = vmatpush1.msra.mxu0 %v2305
    %2716 = vmatprep.subr.mxu0 %v2310
    %2717 = vmatpush1.msra.mxu0 %v2309
    %2718 = vmatprep.subr.mxu0 %v2314
    %2719 = vmatpush1.msra.mxu0 %v2313
    %2720 = vmatprep.subr.mxu0 %v2318
    %2721 = vmatpush1.msra.mxu0 %v2317
    %2722 = vmatprep.subr.mxu0 %v2322
    %2723 = vmatpush1.msra.mxu0 %v2321
    %2724 = vmatprep.subr.mxu0 %v2326
    %2725 = vmatpush1.msra.mxu0 %v2325
    %2726 = vmatprep.subr.mxu0 %v2330
    %2727 = vmatpush1.msra.mxu0 %v2329
    %2728 = vmatprep.subr.mxu0 %v2334
    %2729 = vmatpush1.msra.mxu0 %v2333
    %2730 = vmatprep.subr.mxu0 0.0
    %2731 = vmatpush1.msra.mxu0 0.0
    %2732 = vmatprep.subr.mxu0 0.0
    %2733 = vmatpush1.msra.mxu0 0.0
    %2734 = vmatprep.subr.mxu0 0.0
    %2735 = vmatpush1.msra.mxu0 0.0
    %2736 = vmatprep.subr.mxu0 0.0
    %2737 = vmatpush1.msra.mxu0 0.0
    %2738 = vmatprep.subr.mxu0 0.0
    %2739 = vmatpush1.msra.mxu0 0.0
    %2740 = vmatprep.subr.mxu0 0.0
    %2741 = vmatpush1.msra.mxu0 0.0
    %2742 = vmatprep.subr.mxu0 0.0
    %2743 = vmatpush1.msra.mxu0 0.0
    %2744 = vmatprep.subr.mxu0 0.0
    %2745 = vmatpush1.msra.mxu0 0.0
    %2746 = vmatprep.subr.mxu0 0.0
    %2747 = vmatpush1.msra.mxu0 0.0
    %2748 = vmatprep.subr.mxu0 0.0
    %2749 = vmatpush1.msra.mxu0 0.0
    %2750 = vmatprep.subr.mxu0 0.0
    %2751 = vmatpush1.msra.mxu0 0.0
    %2752 = vmatprep.subr.mxu0 0.0
    %2753 = vmatpush1.msra.mxu0 0.0
    %2754 = vmatprep.subr.mxu0 0.0
    %2755 = vmatpush1.msra.mxu0 0.0
    %2756 = vmatprep.subr.mxu0 0.0
    %2757 = vmatpush1.msra.mxu0 0.0
    %2758 = vmatprep.subr.mxu0 0.0
    %2759 = vmatpush1.msra.mxu0 0.0
    %2760 = vmatprep.subr.mxu0 0.0
    %2761 = vmatpush1.msra.mxu0 0.0
    %2762 = vmatprep.mubr.f32.mxu0 0.0
    %2763 = vmatmul.mubr.f32.gmra.mrb[0].mxu0 %v2697
    %v2764 = vpop.f32.mrb[0].mxu0
    %v2765 = vadd.f32 0.0, %v2764
    %v2766 = vpop.f32.mrb[0].mxu0
    %v2767 = vadd.f32 0.0, %v2766
    %2768 = vdwg.mxu0
    %2769 = vmatprep.subr.mxu0 %v2276
    %2770 = vmatpush1.msra.mxu0 %v2275
    %2771 = vmatprep.subr.mxu0 %v2280
    %2772 = vmatpush1.msra.mxu0 %v2279
    %2773 = vmatprep.subr.mxu0 %v2284
    %2774 = vmatpush1.msra.mxu0 %v2283
    %2775 = vmatprep.subr.mxu0 %v2288
    %2776 = vmatpush1.msra.mxu0 %v2287
    %2777 = vmatprep.subr.mxu0 %v2292
    %2778 = vmatpush1.msra.mxu0 %v2291
    %2779 = vmatprep.subr.mxu0 %v2296
    %2780 = vmatpush1.msra.mxu0 %v2295
    %2781 = vmatprep.subr.mxu0 %v2300
    %2782 = vmatpush1.msra.mxu0 %v2299
    %2783 = vmatprep.subr.mxu0 %v2304
    %2784 = vmatpush1.msra.mxu0 %v2303
    %2785 = vmatprep.subr.mxu0 %v2308
    %2786 = vmatpush1.msra.mxu0 %v2307
    %2787 = vmatprep.subr.mxu0 %v2312
    %2788 = vmatpush1.msra.mxu0 %v2311
    %2789 = vmatprep.subr.mxu0 %v2316
    %2790 = vmatpush1.msra.mxu0 %v2315
    %2791 = vmatprep.subr.mxu0 %v2320
    %2792 = vmatpush1.msra.mxu0 %v2319
    %2793 = vmatprep.subr.mxu0 %v2324
    %2794 = vmatpush1.msra.mxu0 %v2323
    %2795 = vmatprep.subr.mxu0 %v2328
    %2796 = vmatpush1.msra.mxu0 %v2327
    %2797 = vmatprep.subr.mxu0 %v2332
    %2798 = vmatpush1.msra.mxu0 %v2331
    %2799 = vmatprep.subr.mxu0 %v2336
    %2800 = vmatpush1.msra.mxu0 %v2335
    %2801 = vmatprep.subr.mxu0 0.0
    %2802 = vmatpush1.msra.mxu0 0.0
    %2803 = vmatprep.subr.mxu0 0.0
    %2804 = vmatpush1.msra.mxu0 0.0
    %2805 = vmatprep.subr.mxu0 0.0
    %2806 = vmatpush1.msra.mxu0 0.0
    %2807 = vmatprep.subr.mxu0 0.0
    %2808 = vmatpush1.msra.mxu0 0.0
    %2809 = vmatprep.subr.mxu0 0.0
    %2810 = vmatpush1.msra.mxu0 0.0
    %2811 = vmatprep.subr.mxu0 0.0
    %2812 = vmatpush1.msra.mxu0 0.0
    %2813 = vmatprep.subr.mxu0 0.0
    %2814 = vmatpush1.msra.mxu0 0.0
    %2815 = vmatprep.subr.mxu0 0.0
    %2816 = vmatpush1.msra.mxu0 0.0
    %2817 = vmatprep.subr.mxu0 0.0
    %2818 = vmatpush1.msra.mxu0 0.0
    %2819 = vmatprep.subr.mxu0 0.0
    %2820 = vmatpush1.msra.mxu0 0.0
    %2821 = vmatprep.subr.mxu0 0.0
    %2822 = vmatpush1.msra.mxu0 0.0
    %2823 = vmatprep.subr.mxu0 0.0
    %2824 = vmatpush1.msra.mxu0 0.0
    %2825 = vmatprep.subr.mxu0 0.0
    %2826 = vmatpush1.msra.mxu0 0.0
    %2827 = vmatprep.subr.mxu0 0.0
    %2828 = vmatpush1.msra.mxu0 0.0
    %2829 = vmatprep.subr.mxu0 0.0
    %2830 = vmatpush1.msra.mxu0 0.0
    %2831 = vmatprep.subr.mxu0 0.0
    %2832 = vmatpush1.msra.mxu0 0.0
    %2833 = vmatprep.mubr.f32.mxu0 0.0
    %2834 = vmatmul.mubr.f32.gmra.mrb[0].mxu0 %v2697
    %v2835 = vpop.f32.mrb[0].mxu0
    %v2836 = vadd.f32 0.0, %v2835
    %v2837 = vpop.f32.mrb[0].mxu0
    %v2838 = vadd.f32 0.0, %v2837
    %2839 = vdwg.mxu0
    %v2840 = vadd.f32 %v2693, %v2765
    %v2841 = vadd.f32 %v2694, %v2767
    %v2842 = vadd.f32 %v2695, %v2836
    %v2843 = vadd.f32 %v2696, %v2838
    %v2844 = vxor.u32 %v2840, 2147483648
    %v2845 = vxor.u32 %v2841, 2147483648
    %v2846 = vxor.u32 %v2842, 2147483648
    %v2847 = vmul.f32 %v2844, 1.442695
    %v2848 = vpow.pop %v2847
    %v2849 = vmul.f32 %v2845, 1.442695
    %v2850 = vpow.pop %v2849
    %v2851 = vmul.f32 %v2846, 1.442695
    %v2852 = vpow.pop %v2851
    %v2853 = vadd.f32 %v2848, 1.0
    %v2854 = vadd.f32 %v2850, 1.0
    %v2855 = vadd.f32 %v2852, 1.0
    %v2856 = vrcp.pop %v2853
    %v2857 = vmul.f32 1.0, %v2856
    %v2858 = vrcp.pop %v2854
    %v2859 = vmul.f32 1.0, %v2858
    %v2860 = vrcp.pop %v2855
    %v2861 = vmul.f32 1.0, %v2860
    %v2862 = vtanh.pop %v2843
    %v2863 = vld [vmem:[#allocation5] sm:$0xff]
    %v2864 = vmul.f32 %v2859, %v2863
    %v2865 = vmul.f32 %v2857, %v2862
    %v2866 = vadd.f32 %v2864, %v2865
    %v2867 = vtanh.pop %v2866
    %v2868 = vmul.f32 %v2861, %v2867
    %2869 = vst [vmem:[#allocation5] sm:$0xff] %v2866
    %2870 = vst [vmem:[#allocation4] sm:$0xff] %v2868
    %v2871 = vld [vmem:[%s1006] sm:$0xff]
    %v2872 = vld [vmem:[%s1006 + $0x8] sm:$0xff]
    %v2873 = vld [vmem:[%s1006 + $0x10] sm:$0xff]
    %v2874 = vld [vmem:[%s1006 + $0x18] sm:$0xff]
    %v2875 = vld [vmem:[#allocation4] sm:$0xff]
    %2876 = vmatprep.subr.mxu0 %v2274
    %2877 = vmatpush1.msra.mxu0 %v2273
    %2878 = vmatprep.subr.mxu0 %v2278
    %2879 = vmatpush1.msra.mxu0 %v2277
    %2880 = vmatprep.subr.mxu0 %v2282
    %2881 = vmatpush1.msra.mxu0 %v2281
    %2882 = vmatprep.subr.mxu0 %v2286
    %2883 = vmatpush1.msra.mxu0 %v2285
    %2884 = vmatprep.subr.mxu0 %v2290
    %2885 = vmatpush1.msra.mxu0 %v2289
    %2886 = vmatprep.subr.mxu0 %v2294
    %2887 = vmatpush1.msra.mxu0 %v2293
    %2888 = vmatprep.subr.mxu0 %v2298
    %2889 = vmatpush1.msra.mxu0 %v2297
    %2890 = vmatprep.subr.mxu0 %v2302
    %2891 = vmatpush1.msra.mxu0 %v2301
    %2892 = vmatprep.subr.mxu0 %v2306
    %2893 = vmatpush1.msra.mxu0 %v2305
    %2894 = vmatprep.subr.mxu0 %v2310
    %2895 = vmatpush1.msra.mxu0 %v2309
    %2896 = vmatprep.subr.mxu0 %v2314
    %2897 = vmatpush1.msra.mxu0 %v2313
    %2898 = vmatprep.subr.mxu0 %v2318
    %2899 = vmatpush1.msra.mxu0 %v2317
    %2900 = vmatprep.subr.mxu0 %v2322
    %2901 = vmatpush1.msra.mxu0 %v2321
    %2902 = vmatprep.subr.mxu0 %v2326
    %2903 = vmatpush1.msra.mxu0 %v2325
    %2904 = vmatprep.subr.mxu0 %v2330
    %2905 = vmatpush1.msra.mxu0 %v2329
    %2906 = vmatprep.subr.mxu0 %v2334
    %2907 = vmatpush1.msra.mxu0 %v2333
    %2908 = vmatprep.subr.mxu0 0.0
    %2909 = vmatpush1.msra.mxu0 0.0
    %2910 = vmatprep.subr.mxu0 0.0
    %2911 = vmatpush1.msra.mxu0 0.0
    %2912 = vmatprep.subr.mxu0 0.0
    %2913 = vmatpush1.msra.mxu0 0.0
    %2914 = vmatprep.subr.mxu0 0.0
    %2915 = vmatpush1.msra.mxu0 0.0
    %2916 = vmatprep.subr.mxu0 0.0
    %2917 = vmatpush1.msra.mxu0 0.0
    %2918 = vmatprep.subr.mxu0 0.0
    %2919 = vmatpush1.msra.mxu0 0.0
    %2920 = vmatprep.subr.mxu0 0.0
    %2921 = vmatpush1.msra.mxu0 0.0
    %2922 = vmatprep.subr.mxu0 0.0
    %2923 = vmatpush1.msra.mxu0 0.0
    %2924 = vmatprep.subr.mxu0 0.0
    %2925 = vmatpush1.msra.mxu0 0.0
    %2926 = vmatprep.subr.mxu0 0.0
    %2927 = vmatpush1.msra.mxu0 0.0
    %2928 = vmatprep.subr.mxu0 0.0
    %2929 = vmatpush1.msra.mxu0 0.0
    %2930 = vmatprep.subr.mxu0 0.0
    %2931 = vmatpush1.msra.mxu0 0.0
    %2932 = vmatprep.subr.mxu0 0.0
    %2933 = vmatpush1.msra.mxu0 0.0
    %2934 = vmatprep.subr.mxu0 0.0
    %2935 = vmatpush1.msra.mxu0 0.0
    %2936 = vmatprep.subr.mxu0 0.0
    %2937 = vmatpush1.msra.mxu0 0.0
    %2938 = vmatprep.subr.mxu0 0.0
    %2939 = vmatpush1.msra.mxu0 0.0
    %2940 = vmatprep.mubr.f32.mxu0 0.0
    %2941 = vmatmul.mubr.f32.gmra.mrb[0].mxu0 %v2875
    %v2942 = vpop.f32.mrb[0].mxu0
    %v2943 = vadd.f32 0.0, %v2942
    %v2944 = vpop.f32.mrb[0].mxu0
    %v2945 = vadd.f32 0.0, %v2944
    %2946 = vdwg.mxu0
    %2947 = vmatprep.subr.mxu0 %v2276
    %2948 = vmatpush1.msra.mxu0 %v2275
    %2949 = vmatprep.subr.mxu0 %v2280
    %2950 = vmatpush1.msra.mxu0 %v2279
    %2951 = vmatprep.subr.mxu0 %v2284
    %2952 = vmatpush1.msra.mxu0 %v2283
    %2953 = vmatprep.subr.mxu0 %v2288
    %2954 = vmatpush1.msra.mxu0 %v2287
    %2955 = vmatprep.subr.mxu0 %v2292
    %2956 = vmatpush1.msra.mxu0 %v2291
    %2957 = vmatprep.subr.mxu0 %v2296
    %2958 = vmatpush1.msra.mxu0 %v2295
    %2959 = vmatprep.subr.mxu0 %v2300
    %2960 = vmatpush1.msra.mxu0 %v2299
    %2961 = vmatprep.subr.mxu0 %v2304
    %2962 = vmatpush1.msra.mxu0 %v2303
    %2963 = vmatprep.subr.mxu0 %v2308
    %2964 = vmatpush1.msra.mxu0 %v2307
    %2965 = vmatprep.subr.mxu0 %v2312
    %2966 = vmatpush1.msra.mxu0 %v2311
    %2967 = vmatprep.subr.mxu0 %v2316
    %2968 = vmatpush1.msra.mxu0 %v2315
    %2969 = vmatprep.subr.mxu0 %v2320
    %2970 = vmatpush1.msra.mxu0 %v2319
    %2971 = vmatprep.subr.mxu0 %v2324
    %2972 = vmatpush1.msra.mxu0 %v2323
    %2973 = vmatprep.subr.mxu0 %v2328
    %2974 = vmatpush1.msra.mxu0 %v2327
    %2975 = vmatprep.subr.mxu0 %v2332
    %2976 = vmatpush1.msra.mxu0 %v2331
    %2977 = vmatprep.subr.mxu0 %v2336
    %2978 = vmatpush1.msra.mxu0 %v2335
    %2979 = vmatprep.subr.mxu0 0.0
    %2980 = vmatpush1.msra.mxu0 0.0
    %2981 = vmatprep.subr.mxu0 0.0
    %2982 = vmatpush1.msra.mxu0 0.0
    %2983 = vmatprep.subr.mxu0 0.0
    %2984 = vmatpush1.msra.mxu0 0.0
    %2985 = vmatprep.subr.mxu0 0.0
    %2986 = vmatpush1.msra.mxu0 0.0
    %2987 = vmatprep.subr.mxu0 0.0
    %2988 = vmatpush1.msra.mxu0 0.0
    %2989 = vmatprep.subr.mxu0 0.0
    %2990 = vmatpush1.msra.mxu0 0.0
    %2991 = vmatprep.subr.mxu0 0.0
    %2992 = vmatpush1.msra.mxu0 0.0
    %2993 = vmatprep.subr.mxu0 0.0
    %2994 = vmatpush1.msra.mxu0 0.0
    %2995 = vmatprep.subr.mxu0 0.0
    %2996 = vmatpush1.msra.mxu0 0.0
    %2997 = vmatprep.subr.mxu0 0.0
    %2998 = vmatpush1.msra.mxu0 0.0
    %2999 = vmatprep.subr.mxu0 0.0
    %3000 = vmatpush1.msra.mxu0 0.0
    %3001 = vmatprep.subr.mxu0 0.0
    %3002 = vmatpush1.msra.mxu0 0.0
    %3003 = vmatprep.subr.mxu0 0.0
    %3004 = vmatpush1.msra.mxu0 0.0
    %3005 = vmatprep.subr.mxu0 0.0
    %3006 = vmatpush1.msra.mxu0 0.0
    %3007 = vmatprep.subr.mxu0 0.0
    %3008 = vmatpush1.msra.mxu0 0.0
    %3009 = vmatprep.subr.mxu0 0.0
    %3010 = vmatpush1.msra.mxu0 0.0
    %3011 = vmatprep.mubr.f32.mxu0 0.0
    %3012 = vmatmul.mubr.f32.gmra.mrb[0].mxu0 %v2875
    %v3013 = vpop.f32.mrb[0].mxu0
    %v3014 = vadd.f32 0.0, %v3013
    %v3015 = vpop.f32.mrb[0].mxu0
    %v3016 = vadd.f32 0.0, %v3015
    %3017 = vdwg.mxu0
    %v3018 = vadd.f32 %v2871, %v2943
    %v3019 = vadd.f32 %v2872, %v2945
    %v3020 = vadd.f32 %v2873, %v3014
    %v3021 = vadd.f32 %v2874, %v3016
    %v3022 = vxor.u32 %v3018, 2147483648
    %v3023 = vxor.u32 %v3019, 2147483648
    %v3024 = vxor.u32 %v3020, 2147483648
    %v3025 = vmul.f32 %v3022, 1.442695
    %v3026 = vpow.pop %v3025
    %v3027 = vmul.f32 %v3023, 1.442695
    %v3028 = vpow.pop %v3027
    %v3029 = vmul.f32 %v3024, 1.442695
    %v3030 = vpow.pop %v3029
    %v3031 = vadd.f32 %v3026, 1.0
    %v3032 = vadd.f32 %v3028, 1.0
    %v3033 = vadd.f32 %v3030, 1.0
    %v3034 = vrcp.pop %v3031
    %v3035 = vmul.f32 1.0, %v3034
    %v3036 = vrcp.pop %v3032
    %v3037 = vmul.f32 1.0, %v3036
    %v3038 = vrcp.pop %v3033
    %v3039 = vmul.f32 1.0, %v3038
    %v3040 = vtanh.pop %v3021
    %v3041 = vld [vmem:[#allocation5] sm:$0xff]
    %v3042 = vmul.f32 %v3037, %v3041
    %v3043 = vmul.f32 %v3035, %v3040
    %v3044 = vadd.f32 %v3042, %v3043
    %v3045 = vtanh.pop %v3044
    %v3046 = vmul.f32 %v3039, %v3045
    %3047 = vst [vmem:[#allocation5] sm:$0xff] %v3044
    %3048 = vst [vmem:[#allocation4] sm:$0xff] %v3046
    %v3049 = vld [vmem:[%s1189] sm:$0xff]
    %v3050 = vld [vmem:[%s1189 + $0x8] sm:$0xff]
    %v3051 = vld [vmem:[%s1189 + $0x10] sm:$0xff]
    %v3052 = vld [vmem:[%s1189 + $0x18] sm:$0xff]
    %v3053 = vld [vmem:[#allocation4] sm:$0xff]
    %3054 = vmatprep.subr.mxu0 %v2274
    %3055 = vmatpush1.msra.mxu0 %v2273
    %3056 = vmatprep.subr.mxu0 %v2278
    %3057 = vmatpush1.msra.mxu0 %v2277
    %3058 = vmatprep.subr.mxu0 %v2282
    %3059 = vmatpush1.msra.mxu0 %v2281
    %3060 = vmatprep.subr.mxu0 %v2286
    %3061 = vmatpush1.msra.mxu0 %v2285
    %3062 = vmatprep.subr.mxu0 %v2290
    %3063 = vmatpush1.msra.mxu0 %v2289
    %3064 = vmatprep.subr.mxu0 %v2294
    %3065 = vmatpush1.msra.mxu0 %v2293
    %3066 = vmatprep.subr.mxu0 %v2298
    %3067 = vmatpush1.msra.mxu0 %v2297
    %3068 = vmatprep.subr.mxu0 %v2302
    %3069 = vmatpush1.msra.mxu0 %v2301
    %3070 = vmatprep.subr.mxu0 %v2306
    %3071 = vmatpush1.msra.mxu0 %v2305
    %3072 = vmatprep.subr.mxu0 %v2310
    %3073 = vmatpush1.msra.mxu0 %v2309
    %3074 = vmatprep.subr.mxu0 %v2314
    %3075 = vmatpush1.msra.mxu0 %v2313
    %3076 = vmatprep.subr.mxu0 %v2318
    %3077 = vmatpush1.msra.mxu0 %v2317
    %3078 = vmatprep.subr.mxu0 %v2322
    %3079 = vmatpush1.msra.mxu0 %v2321
    %3080 = vmatprep.subr.mxu0 %v2326
    %3081 = vmatpush1.msra.mxu0 %v2325
    %3082 = vmatprep.subr.mxu0 %v2330
    %3083 = vmatpush1.msra.mxu0 %v2329
    %3084 = vmatprep.subr.mxu0 %v2334
    %3085 = vmatpush1.msra.mxu0 %v2333
    %3086 = vmatprep.subr.mxu0 0.0
    %3087 = vmatpush1.msra.mxu0 0.0
    %3088 = vmatprep.subr.mxu0 0.0
    %3089 = vmatpush1.msra.mxu0 0.0
    %3090 = vmatprep.subr.mxu0 0.0
    %3091 = vmatpush1.msra.mxu0 0.0
    %3092 = vmatprep.subr.mxu0 0.0
    %3093 = vmatpush1.msra.mxu0 0.0
    %3094 = vmatprep.subr.mxu0 0.0
    %3095 = vmatpush1.msra.mxu0 0.0
    %3096 = vmatprep.subr.mxu0 0.0
    %3097 = vmatpush1.msra.mxu0 0.0
    %3098 = vmatprep.subr.mxu0 0.0
    %3099 = vmatpush1.msra.mxu0 0.0
    %3100 = vmatprep.subr.mxu0 0.0
    %3101 = vmatpush1.msra.mxu0 0.0
    %3102 = vmatprep.subr.mxu0 0.0
    %3103 = vmatpush1.msra.mxu0 0.0
    %3104 = vmatprep.subr.mxu0 0.0
    %3105 = vmatpush1.msra.mxu0 0.0
    %3106 = vmatprep.subr.mxu0 0.0
    %3107 = vmatpush1.msra.mxu0 0.0
    %3108 = vmatprep.subr.mxu0 0.0
    %3109 = vmatpush1.msra.mxu0 0.0
    %3110 = vmatprep.subr.mxu0 0.0
    %3111 = vmatpush1.msra.mxu0 0.0
    %3112 = vmatprep.subr.mxu0 0.0
    %3113 = vmatpush1.msra.mxu0 0.0
    %3114 = vmatprep.subr.mxu0 0.0
    %3115 = vmatpush1.msra.mxu0 0.0
    %3116 = vmatprep.subr.mxu0 0.0
    %3117 = vmatpush1.msra.mxu0 0.0
    %3118 = vmatprep.mubr.f32.mxu0 0.0
    %3119 = vmatmul.mubr.f32.gmra.mrb[0].mxu0 %v3053
    %v3120 = vpop.f32.mrb[0].mxu0
    %v3121 = vadd.f32 0.0, %v3120
    %v3122 = vpop.f32.mrb[0].mxu0
    %v3123 = vadd.f32 0.0, %v3122
    %3124 = vdwg.mxu0
    %3125 = vmatprep.subr.mxu0 %v2276
    %3126 = vmatpush1.msra.mxu0 %v2275
    %3127 = vmatprep.subr.mxu0 %v2280
    %3128 = vmatpush1.msra.mxu0 %v2279
    %3129 = vmatprep.subr.mxu0 %v2284
    %3130 = vmatpush1.msra.mxu0 %v2283
    %3131 = vmatprep.subr.mxu0 %v2288
    %3132 = vmatpush1.msra.mxu0 %v2287
    %3133 = vmatprep.subr.mxu0 %v2292
    %3134 = vmatpush1.msra.mxu0 %v2291
    %3135 = vmatprep.subr.mxu0 %v2296
    %3136 = vmatpush1.msra.mxu0 %v2295
    %3137 = vmatprep.subr.mxu0 %v2300
    %3138 = vmatpush1.msra.mxu0 %v2299
    %3139 = vmatprep.subr.mxu0 %v2304
    %3140 = vmatpush1.msra.mxu0 %v2303
    %3141 = vmatprep.subr.mxu0 %v2308
    %3142 = vmatpush1.msra.mxu0 %v2307
    %3143 = vmatprep.subr.mxu0 %v2312
    %3144 = vmatpush1.msra.mxu0 %v2311
    %3145 = vmatprep.subr.mxu0 %v2316
    %3146 = vmatpush1.msra.mxu0 %v2315
    %3147 = vmatprep.subr.mxu0 %v2320
    %3148 = vmatpush1.msra.mxu0 %v2319
    %3149 = vmatprep.subr.mxu0 %v2324
    %3150 = vmatpush1.msra.mxu0 %v2323
    %3151 = vmatprep.subr.mxu0 %v2328
    %3152 = vmatpush1.msra.mxu0 %v2327
    %3153 = vmatprep.subr.mxu0 %v2332
    %3154 = vmatpush1.msra.mxu0 %v2331
    %3155 = vmatprep.subr.mxu0 %v2336
    %3156 = vmatpush1.msra.mxu0 %v2335
    %3157 = vmatprep.subr.mxu0 0.0
    %3158 = vmatpush1.msra.mxu0 0.0
    %3159 = vmatprep.subr.mxu0 0.0
    %3160 = vmatpush1.msra.mxu0 0.0
    %3161 = vmatprep.subr.mxu0 0.0
    %3162 = vmatpush1.msra.mxu0 0.0
    %3163 = vmatprep.subr.mxu0 0.0
    %3164 = vmatpush1.msra.mxu0 0.0
    %3165 = vmatprep.subr.mxu0 0.0
    %3166 = vmatpush1.msra.mxu0 0.0
    %3167 = vmatprep.subr.mxu0 0.0
    %3168 = vmatpush1.msra.mxu0 0.0
    %3169 = vmatprep.subr.mxu0 0.0
    %3170 = vmatpush1.msra.mxu0 0.0
    %3171 = vmatprep.subr.mxu0 0.0
    %3172 = vmatpush1.msra.mxu0 0.0
    %3173 = vmatprep.subr.mxu0 0.0
    %3174 = vmatpush1.msra.mxu0 0.0
    %3175 = vmatprep.subr.mxu0 0.0
    %3176 = vmatpush1.msra.mxu0 0.0
    %3177 = vmatprep.subr.mxu0 0.0
    %3178 = vmatpush1.msra.mxu0 0.0
    %3179 = vmatprep.subr.mxu0 0.0
    %3180 = vmatpush1.msra.mxu0 0.0
    %3181 = vmatprep.subr.mxu0 0.0
    %3182 = vmatpush1.msra.mxu0 0.0
    %3183 = vmatprep.subr.mxu0 0.0
    %3184 = vmatpush1.msra.mxu0 0.0
    %3185 = vmatprep.subr.mxu0 0.0
    %3186 = vmatpush1.msra.mxu0 0.0
    %3187 = vmatprep.subr.mxu0 0.0
    %3188 = vmatpush1.msra.mxu0 0.0
    %3189 = vmatprep.mubr.f32.mxu0 0.0
    %3190 = vmatmul.mubr.f32.gmra.mrb[0].mxu0 %v3053
    %v3191 = vpop.f32.mrb[0].mxu0
    %v3192 = vadd.f32 0.0, %v3191
    %v3193 = vpop.f32.mrb[0].mxu0
    %v3194 = vadd.f32 0.0, %v3193
    %3195 = vdwg.mxu0
    %v3196 = vadd.f32 %v3049, %v3121
    %v3197 = vadd.f32 %v3050, %v3123
    %v3198 = vadd.f32 %v3051, %v3192
    %v3199 = vadd.f32 %v3052, %v3194
    %v3200 = vxor.u32 %v3196, 2147483648
    %v3201 = vxor.u32 %v3197, 2147483648
    %v3202 = vxor.u32 %v3198, 2147483648
    %v3203 = vmul.f32 %v3200, 1.442695
    %v3204 = vpow.pop %v3203
    %v3205 = vmul.f32 %v3201, 1.442695
    %v3206 = vpow.pop %v3205
    %v3207 = vmul.f32 %v3202, 1.442695
    %v3208 = vpow.pop %v3207
    %v3209 = vadd.f32 %v3204, 1.0
    %v3210 = vadd.f32 %v3206, 1.0
    %v3211 = vadd.f32 %v3208, 1.0
    %v3212 = vrcp.pop %v3209
    %v3213 = vmul.f32 1.0, %v3212
    %v3214 = vrcp.pop %v3210
    %v3215 = vmul.f32 1.0, %v3214
    %v3216 = vrcp.pop %v3211
    %v3217 = vmul.f32 1.0, %v3216
    %v3218 = vtanh.pop %v3199
    %v3219 = vld [vmem:[#allocation5] sm:$0xff]
    %v3220 = vmul.f32 %v3215, %v3219
    %v3221 = vmul.f32 %v3213, %v3218
    %v3222 = vadd.f32 %v3220, %v3221
    %v3223 = vtanh.pop %v3222
    %v3224 = vmul.f32 %v3217, %v3223
    %3225 = vst [vmem:[#allocation5] sm:$0xff] %v3222
    %3226 = vst [vmem:[#allocation4] sm:$0xff] %v3224
    %v3227 = vld [vmem:[%s1372] sm:$0xff]
    %v3228 = vld [vmem:[%s1372 + $0x8] sm:$0xff]
    %v3229 = vld [vmem:[%s1372 + $0x10] sm:$0xff]
    %v3230 = vld [vmem:[%s1372 + $0x18] sm:$0xff]
    %v3231 = vld [vmem:[#allocation4] sm:$0xff]
    %3232 = vmatprep.subr.mxu0 %v2274
    %3233 = vmatpush1.msra.mxu0 %v2273
    %3234 = vmatprep.subr.mxu0 %v2278
    %3235 = vmatpush1.msra.mxu0 %v2277
    %3236 = vmatprep.subr.mxu0 %v2282
    %3237 = vmatpush1.msra.mxu0 %v2281
    %3238 = vmatprep.subr.mxu0 %v2286
    %3239 = vmatpush1.msra.mxu0 %v2285
    %3240 = vmatprep.subr.mxu0 %v2290
    %3241 = vmatpush1.msra.mxu0 %v2289
    %3242 = vmatprep.subr.mxu0 %v2294
    %3243 = vmatpush1.msra.mxu0 %v2293
    %3244 = vmatprep.subr.mxu0 %v2298
    %3245 = vmatpush1.msra.mxu0 %v2297
    %3246 = vmatprep.subr.mxu0 %v2302
    %3247 = vmatpush1.msra.mxu0 %v2301
    %3248 = vmatprep.subr.mxu0 %v2306
    %3249 = vmatpush1.msra.mxu0 %v2305
    %3250 = vmatprep.subr.mxu0 %v2310
    %3251 = vmatpush1.msra.mxu0 %v2309
    %3252 = vmatprep.subr.mxu0 %v2314
    %3253 = vmatpush1.msra.mxu0 %v2313
    %3254 = vmatprep.subr.mxu0 %v2318
    %3255 = vmatpush1.msra.mxu0 %v2317
    %3256 = vmatprep.subr.mxu0 %v2322
    %3257 = vmatpush1.msra.mxu0 %v2321
    %3258 = vmatprep.subr.mxu0 %v2326
    %3259 = vmatpush1.msra.mxu0 %v2325
    %3260 = vmatprep.subr.mxu0 %v2330
    %3261 = vmatpush1.msra.mxu0 %v2329
    %3262 = vmatprep.subr.mxu0 %v2334
    %3263 = vmatpush1.msra.mxu0 %v2333
    %3264 = vmatprep.subr.mxu0 0.0
    %3265 = vmatpush1.msra.mxu0 0.0
    %3266 = vmatprep.subr.mxu0 0.0
    %3267 = vmatpush1.msra.mxu0 0.0
    %3268 = vmatprep.subr.mxu0 0.0
    %3269 = vmatpush1.msra.mxu0 0.0
    %3270 = vmatprep.subr.mxu0 0.0
    %3271 = vmatpush1.msra.mxu0 0.0
    %3272 = vmatprep.subr.mxu0 0.0
    %3273 = vmatpush1.msra.mxu0 0.0
    %3274 = vmatprep.subr.mxu0 0.0
    %3275 = vmatpush1.msra.mxu0 0.0
    %3276 = vmatprep.subr.mxu0 0.0
    %3277 = vmatpush1.msra.mxu0 0.0
    %3278 = vmatprep.subr.mxu0 0.0
    %3279 = vmatpush1.msra.mxu0 0.0
    %3280 = vmatprep.subr.mxu0 0.0
    %3281 = vmatpush1.msra.mxu0 0.0
    %3282 = vmatprep.subr.mxu0 0.0
    %3283 = vmatpush1.msra.mxu0 0.0
    %3284 = vmatprep.subr.mxu0 0.0
    %3285 = vmatpush1.msra.mxu0 0.0
    %3286 = vmatprep.subr.mxu0 0.0
    %3287 = vmatpush1.msra.mxu0 0.0
    %3288 = vmatprep.subr.mxu0 0.0
    %3289 = vmatpush1.msra.mxu0 0.0
    %3290 = vmatprep.subr.mxu0 0.0
    %3291 = vmatpush1.msra.mxu0 0.0
    %3292 = vmatprep.subr.mxu0 0.0
    %3293 = vmatpush1.msra.mxu0 0.0
    %3294 = vmatprep.subr.mxu0 0.0
    %3295 = vmatpush1.msra.mxu0 0.0
    %3296 = vmatprep.mubr.f32.mxu0 0.0
    %3297 = vmatmul.mubr.f32.gmra.mrb[0].mxu0 %v3231
    %v3298 = vpop.f32.mrb[0].mxu0
    %v3299 = vadd.f32 0.0, %v3298
    %v3300 = vpop.f32.mrb[0].mxu0
    %v3301 = vadd.f32 0.0, %v3300
    %3302 = vdwg.mxu0
    %3303 = vmatprep.subr.mxu0 %v2276
    %3304 = vmatpush1.msra.mxu0 %v2275
    %3305 = vmatprep.subr.mxu0 %v2280
    %3306 = vmatpush1.msra.mxu0 %v2279
    %3307 = vmatprep.subr.mxu0 %v2284
    %3308 = vmatpush1.msra.mxu0 %v2283
    %3309 = vmatprep.subr.mxu0 %v2288
    %3310 = vmatpush1.msra.mxu0 %v2287
    %3311 = vmatprep.subr.mxu0 %v2292
    %3312 = vmatpush1.msra.mxu0 %v2291
    %3313 = vmatprep.subr.mxu0 %v2296
    %3314 = vmatpush1.msra.mxu0 %v2295
    %3315 = vmatprep.subr.mxu0 %v2300
    %3316 = vmatpush1.msra.mxu0 %v2299
    %3317 = vmatprep.subr.mxu0 %v2304
    %3318 = vmatpush1.msra.mxu0 %v2303
    %3319 = vmatprep.subr.mxu0 %v2308
    %3320 = vmatpush1.msra.mxu0 %v2307
    %3321 = vmatprep.subr.mxu0 %v2312
    %3322 = vmatpush1.msra.mxu0 %v2311
    %3323 = vmatprep.subr.mxu0 %v2316
    %3324 = vmatpush1.msra.mxu0 %v2315
    %3325 = vmatprep.subr.mxu0 %v2320
    %3326 = vmatpush1.msra.mxu0 %v2319
    %3327 = vmatprep.subr.mxu0 %v2324
    %3328 = vmatpush1.msra.mxu0 %v2323
    %3329 = vmatprep.subr.mxu0 %v2328
    %3330 = vmatpush1.msra.mxu0 %v2327
    %3331 = vmatprep.subr.mxu0 %v2332
    %3332 = vmatpush1.msra.mxu0 %v2331
    %3333 = vmatprep.subr.mxu0 %v2336
    %3334 = vmatpush1.msra.mxu0 %v2335
    %3335 = vmatprep.subr.mxu0 0.0
    %3336 = vmatpush1.msra.mxu0 0.0
    %3337 = vmatprep.subr.mxu0 0.0
    %3338 = vmatpush1.msra.mxu0 0.0
    %3339 = vmatprep.subr.mxu0 0.0
    %3340 = vmatpush1.msra.mxu0 0.0
    %3341 = vmatprep.subr.mxu0 0.0
    %3342 = vmatpush1.msra.mxu0 0.0
    %3343 = vmatprep.subr.mxu0 0.0
    %3344 = vmatpush1.msra.mxu0 0.0
    %3345 = vmatprep.subr.mxu0 0.0
    %3346 = vmatpush1.msra.mxu0 0.0
    %3347 = vmatprep.subr.mxu0 0.0
    %3348 = vmatpush1.msra.mxu0 0.0
    %3349 = vmatprep.subr.mxu0 0.0
    %3350 = vmatpush1.msra.mxu0 0.0
    %3351 = vmatprep.subr.mxu0 0.0
    %3352 = vmatpush1.msra.mxu0 0.0
    %3353 = vmatprep.subr.mxu0 0.0
    %3354 = vmatpush1.msra.mxu0 0.0
    %3355 = vmatprep.subr.mxu0 0.0
    %3356 = vmatpush1.msra.mxu0 0.0
    %3357 = vmatprep.subr.mxu0 0.0
    %3358 = vmatpush1.msra.mxu0 0.0
    %3359 = vmatprep.subr.mxu0 0.0
    %3360 = vmatpush1.msra.mxu0 0.0
    %3361 = vmatprep.subr.mxu0 0.0
    %3362 = vmatpush1.msra.mxu0 0.0
    %3363 = vmatprep.subr.mxu0 0.0
    %3364 = vmatpush1.msra.mxu0 0.0
    %3365 = vmatprep.subr.mxu0 0.0
    %3366 = vmatpush1.msra.mxu0 0.0
    %3367 = vmatprep.mubr.f32.mxu0 0.0
    %3368 = vmatmul.mubr.f32.gmra.mrb[0].mxu0 %v3231
    %v3369 = vpop.f32.mrb[0].mxu0
    %v3370 = vadd.f32 0.0, %v3369
    %v3371 = vpop.f32.mrb[0].mxu0
    %v3372 = vadd.f32 0.0, %v3371
    %3373 = vdwg.mxu0
    %v3374 = vadd.f32 %v3227, %v3299
    %v3375 = vadd.f32 %v3228, %v3301
    %v3376 = vadd.f32 %v3229, %v3370
    %v3377 = vadd.f32 %v3230, %v3372
    %v3378 = vxor.u32 %v3374, 2147483648
    %v3379 = vxor.u32 %v3375, 2147483648
    %v3380 = vxor.u32 %v3376, 2147483648
    %v3381 = vmul.f32 %v3378, 1.442695
    %v3382 = vpow.pop %v3381
    %v3383 = vmul.f32 %v3379, 1.442695
    %v3384 = vpow.pop %v3383
    %v3385 = vmul.f32 %v3380, 1.442695
    %v3386 = vpow.pop %v3385
    %v3387 = vadd.f32 %v3382, 1.0
    %v3388 = vadd.f32 %v3384, 1.0
    %v3389 = vadd.f32 %v3386, 1.0
    %v3390 = vrcp.pop %v3387
    %v3391 = vmul.f32 1.0, %v3390
    %v3392 = vrcp.pop %v3388
    %v3393 = vmul.f32 1.0, %v3392
    %v3394 = vrcp.pop %v3389
    %v3395 = vmul.f32 1.0, %v3394
    %v3396 = vtanh.pop %v3377
    %v3397 = vld [vmem:[#allocation5] sm:$0xff]
    %v3398 = vmul.f32 %v3393, %v3397
    %v3399 = vmul.f32 %v3391, %v3396
    %v3400 = vadd.f32 %v3398, %v3399
    %v3401 = vtanh.pop %v3400
    %v3402 = vmul.f32 %v3395, %v3401
    %3403 = vst [vmem:[#allocation5] sm:$0xff] %v3400
    %3404 = vst [vmem:[#allocation4] sm:$0xff] %v3402
    %v3405 = vld [vmem:[%s1555] sm:$0xff]
    %v3406 = vld [vmem:[%s1555 + $0x8] sm:$0xff]
    %v3407 = vld [vmem:[%s1555 + $0x10] sm:$0xff]
    %v3408 = vld [vmem:[%s1555 + $0x18] sm:$0xff]
    %v3409 = vld [vmem:[#allocation4] sm:$0xff]
    %3410 = vmatprep.subr.mxu0 %v2274
    %3411 = vmatpush1.msra.mxu0 %v2273
    %3412 = vmatprep.subr.mxu0 %v2278
    %3413 = vmatpush1.msra.mxu0 %v2277
    %3414 = vmatprep.subr.mxu0 %v2282
    %3415 = vmatpush1.msra.mxu0 %v2281
    %3416 = vmatprep.subr.mxu0 %v2286
    %3417 = vmatpush1.msra.mxu0 %v2285
    %3418 = vmatprep.subr.mxu0 %v2290
    %3419 = vmatpush1.msra.mxu0 %v2289
    %3420 = vmatprep.subr.mxu0 %v2294
    %3421 = vmatpush1.msra.mxu0 %v2293
    %3422 = vmatprep.subr.mxu0 %v2298
    %3423 = vmatpush1.msra.mxu0 %v2297
    %3424 = vmatprep.subr.mxu0 %v2302
    %3425 = vmatpush1.msra.mxu0 %v2301
    %3426 = vmatprep.subr.mxu0 %v2306
    %3427 = vmatpush1.msra.mxu0 %v2305
    %3428 = vmatprep.subr.mxu0 %v2310
    %3429 = vmatpush1.msra.mxu0 %v2309
    %3430 = vmatprep.subr.mxu0 %v2314
    %3431 = vmatpush1.msra.mxu0 %v2313
    %3432 = vmatprep.subr.mxu0 %v2318
    %3433 = vmatpush1.msra.mxu0 %v2317
    %3434 = vmatprep.subr.mxu0 %v2322
    %3435 = vmatpush1.msra.mxu0 %v2321
    %3436 = vmatprep.subr.mxu0 %v2326
    %3437 = vmatpush1.msra.mxu0 %v2325
    %3438 = vmatprep.subr.mxu0 %v2330
    %3439 = vmatpush1.msra.mxu0 %v2329
    %3440 = vmatprep.subr.mxu0 %v2334
    %3441 = vmatpush1.msra.mxu0 %v2333
    %3442 = vmatprep.subr.mxu0 0.0
    %3443 = vmatpush1.msra.mxu0 0.0
    %3444 = vmatprep.subr.mxu0 0.0
    %3445 = vmatpush1.msra.mxu0 0.0
    %3446 = vmatprep.subr.mxu0 0.0
    %3447 = vmatpush1.msra.mxu0 0.0
    %3448 = vmatprep.subr.mxu0 0.0
    %3449 = vmatpush1.msra.mxu0 0.0
    %3450 = vmatprep.subr.mxu0 0.0
    %3451 = vmatpush1.msra.mxu0 0.0
    %3452 = vmatprep.subr.mxu0 0.0
    %3453 = vmatpush1.msra.mxu0 0.0
    %3454 = vmatprep.subr.mxu0 0.0
    %3455 = vmatpush1.msra.mxu0 0.0
    %3456 = vmatprep.subr.mxu0 0.0
    %3457 = vmatpush1.msra.mxu0 0.0
    %3458 = vmatprep.subr.mxu0 0.0
    %3459 = vmatpush1.msra.mxu0 0.0
    %3460 = vmatprep.subr.mxu0 0.0
    %3461 = vmatpush1.msra.mxu0 0.0
    %3462 = vmatprep.subr.mxu0 0.0
    %3463 = vmatpush1.msra.mxu0 0.0
    %3464 = vmatprep.subr.mxu0 0.0
    %3465 = vmatpush1.msra.mxu0 0.0
    %3466 = vmatprep.subr.mxu0 0.0
    %3467 = vmatpush1.msra.mxu0 0.0
    %3468 = vmatprep.subr.mxu0 0.0
    %3469 = vmatpush1.msra.mxu0 0.0
    %3470 = vmatprep.subr.mxu0 0.0
    %3471 = vmatpush1.msra.mxu0 0.0
    %3472 = vmatprep.subr.mxu0 0.0
    %3473 = vmatpush1.msra.mxu0 0.0
    %3474 = vmatprep.mubr.f32.mxu0 0.0
    %3475 = vmatmul.mubr.f32.gmra.mrb[0].mxu0 %v3409
    %v3476 = vpop.f32.mrb[0].mxu0
    %v3477 = vadd.f32 0.0, %v3476
    %v3478 = vpop.f32.mrb[0].mxu0
    %v3479 = vadd.f32 0.0, %v3478
    %3480 = vdwg.mxu0
    %3481 = vmatprep.subr.mxu0 %v2276
    %3482 = vmatpush1.msra.mxu0 %v2275
    %3483 = vmatprep.subr.mxu0 %v2280
    %3484 = vmatpush1.msra.mxu0 %v2279
    %3485 = vmatprep.subr.mxu0 %v2284
    %3486 = vmatpush1.msra.mxu0 %v2283
    %3487 = vmatprep.subr.mxu0 %v2288
    %3488 = vmatpush1.msra.mxu0 %v2287
    %3489 = vmatprep.subr.mxu0 %v2292
    %3490 = vmatpush1.msra.mxu0 %v2291
    %3491 = vmatprep.subr.mxu0 %v2296
    %3492 = vmatpush1.msra.mxu0 %v2295
    %3493 = vmatprep.subr.mxu0 %v2300
    %3494 = vmatpush1.msra.mxu0 %v2299
    %3495 = vmatprep.subr.mxu0 %v2304
    %3496 = vmatpush1.msra.mxu0 %v2303
    %3497 = vmatprep.subr.mxu0 %v2308
    %3498 = vmatpush1.msra.mxu0 %v2307
    %3499 = vmatprep.subr.mxu0 %v2312
    %3500 = vmatpush1.msra.mxu0 %v2311
    %3501 = vmatprep.subr.mxu0 %v2316
    %3502 = vmatpush1.msra.mxu0 %v2315
    %3503 = vmatprep.subr.mxu0 %v2320
    %3504 = vmatpush1.msra.mxu0 %v2319
    %3505 = vmatprep.subr.mxu0 %v2324
    %3506 = vmatpush1.msra.mxu0 %v2323
    %3507 = vmatprep.subr.mxu0 %v2328
    %3508 = vmatpush1.msra.mxu0 %v2327
    %3509 = vmatprep.subr.mxu0 %v2332
    %3510 = vmatpush1.msra.mxu0 %v2331
    %3511 = vmatprep.subr.mxu0 %v2336
    %3512 = vmatpush1.msra.mxu0 %v2335
    %3513 = vmatprep.subr.mxu0 0.0
    %3514 = vmatpush1.msra.mxu0 0.0
    %3515 = vmatprep.subr.mxu0 0.0
    %3516 = vmatpush1.msra.mxu0 0.0
    %3517 = vmatprep.subr.mxu0 0.0
    %3518 = vmatpush1.msra.mxu0 0.0
    %3519 = vmatprep.subr.mxu0 0.0
    %3520 = vmatpush1.msra.mxu0 0.0
    %3521 = vmatprep.subr.mxu0 0.0
    %3522 = vmatpush1.msra.mxu0 0.0
    %3523 = vmatprep.subr.mxu0 0.0
    %3524 = vmatpush1.msra.mxu0 0.0
    %3525 = vmatprep.subr.mxu0 0.0
    %3526 = vmatpush1.msra.mxu0 0.0
    %3527 = vmatprep.subr.mxu0 0.0
    %3528 = vmatpush1.msra.mxu0 0.0
    %3529 = vmatprep.subr.mxu0 0.0
    %3530 = vmatpush1.msra.mxu0 0.0
    %3531 = vmatprep.subr.mxu0 0.0
    %3532 = vmatpush1.msra.mxu0 0.0
    %3533 = vmatprep.subr.mxu0 0.0
    %3534 = vmatpush1.msra.mxu0 0.0
    %3535 = vmatprep.subr.mxu0 0.0
    %3536 = vmatpush1.msra.mxu0 0.0
    %3537 = vmatprep.subr.mxu0 0.0
    %3538 = vmatpush1.msra.mxu0 0.0
    %3539 = vmatprep.subr.mxu0 0.0
    %3540 = vmatpush1.msra.mxu0 0.0
    %3541 = vmatprep.subr.mxu0 0.0
    %3542 = vmatpush1.msra.mxu0 0.0
    %3543 = vmatprep.subr.mxu0 0.0
    %3544 = vmatpush1.msra.mxu0 0.0
    %3545 = vmatprep.mubr.f32.mxu0 0.0
    %3546 = vmatmul.mubr.f32.gmra.mrb[0].mxu0 %v3409
    %v3547 = vpop.f32.mrb[0].mxu0
    %v3548 = vadd.f32 0.0, %v3547
    %v3549 = vpop.f32.mrb[0].mxu0
    %v3550 = vadd.f32 0.0, %v3549
    %3551 = vdwg.mxu0
    %v3552 = vadd.f32 %v3405, %v3477
    %v3553 = vadd.f32 %v3406, %v3479
    %v3554 = vadd.f32 %v3407, %v3548
    %v3555 = vadd.f32 %v3408, %v3550
    %v3556 = vxor.u32 %v3552, 2147483648
    %v3557 = vxor.u32 %v3553, 2147483648
    %v3558 = vxor.u32 %v3554, 2147483648
    %v3559 = vmul.f32 %v3556, 1.442695
    %v3560 = vpow.pop %v3559
    %v3561 = vmul.f32 %v3557, 1.442695
    %v3562 = vpow.pop %v3561
    %v3563 = vmul.f32 %v3558, 1.442695
    %v3564 = vpow.pop %v3563
    %v3565 = vadd.f32 %v3560, 1.0
    %v3566 = vadd.f32 %v3562, 1.0
    %v3567 = vadd.f32 %v3564, 1.0
    %v3568 = vrcp.pop %v3565
    %v3569 = vmul.f32 1.0, %v3568
    %v3570 = vrcp.pop %v3566
    %v3571 = vmul.f32 1.0, %v3570
    %v3572 = vrcp.pop %v3567
    %v3573 = vmul.f32 1.0, %v3572
    %v3574 = vtanh.pop %v3555
    %v3575 = vld [vmem:[#allocation5] sm:$0xff]
    %v3576 = vmul.f32 %v3571, %v3575
    %v3577 = vmul.f32 %v3569, %v3574
    %v3578 = vadd.f32 %v3576, %v3577
    %v3579 = vtanh.pop %v3578
    %v3580 = vmul.f32 %v3573, %v3579
    %3581 = vst [vmem:[#allocation5] sm:$0xff] %v3578
    %3582 = vst [vmem:[#allocation4] sm:$0xff] %v3580
    %v3583 = vld [vmem:[%s1738] sm:$0xff]
    %v3584 = vld [vmem:[%s1738 + $0x8] sm:$0xff]
    %v3585 = vld [vmem:[%s1738 + $0x10] sm:$0xff]
    %v3586 = vld [vmem:[%s1738 + $0x18] sm:$0xff]
    %v3587 = vld [vmem:[#allocation4] sm:$0xff]
    %3588 = vmatprep.subr.mxu0 %v2274
    %3589 = vmatpush1.msra.mxu0 %v2273
    %3590 = vmatprep.subr.mxu0 %v2278
    %3591 = vmatpush1.msra.mxu0 %v2277
    %3592 = vmatprep.subr.mxu0 %v2282
    %3593 = vmatpush1.msra.mxu0 %v2281
    %3594 = vmatprep.subr.mxu0 %v2286
    %3595 = vmatpush1.msra.mxu0 %v2285
    %3596 = vmatprep.subr.mxu0 %v2290
    %3597 = vmatpush1.msra.mxu0 %v2289
    %3598 = vmatprep.subr.mxu0 %v2294
    %3599 = vmatpush1.msra.mxu0 %v2293
    %3600 = vmatprep.subr.mxu0 %v2298
    %3601 = vmatpush1.msra.mxu0 %v2297
    %3602 = vmatprep.subr.mxu0 %v2302
    %3603 = vmatpush1.msra.mxu0 %v2301
    %3604 = vmatprep.subr.mxu0 %v2306
    %3605 = vmatpush1.msra.mxu0 %v2305
    %3606 = vmatprep.subr.mxu0 %v2310
    %3607 = vmatpush1.msra.mxu0 %v2309
    %3608 = vmatprep.subr.mxu0 %v2314
    %3609 = vmatpush1.msra.mxu0 %v2313
    %3610 = vmatprep.subr.mxu0 %v2318
    %3611 = vmatpush1.msra.mxu0 %v2317
    %3612 = vmatprep.subr.mxu0 %v2322
    %3613 = vmatpush1.msra.mxu0 %v2321
    %3614 = vmatprep.subr.mxu0 %v2326
    %3615 = vmatpush1.msra.mxu0 %v2325
    %3616 = vmatprep.subr.mxu0 %v2330
    %3617 = vmatpush1.msra.mxu0 %v2329
    %3618 = vmatprep.subr.mxu0 %v2334
    %3619 = vmatpush1.msra.mxu0 %v2333
    %3620 = vmatprep.subr.mxu0 0.0
    %3621 = vmatpush1.msra.mxu0 0.0
    %3622 = vmatprep.subr.mxu0 0.0
    %3623 = vmatpush1.msra.mxu0 0.0
    %3624 = vmatprep.subr.mxu0 0.0
    %3625 = vmatpush1.msra.mxu0 0.0
    %3626 = vmatprep.subr.mxu0 0.0
    %3627 = vmatpush1.msra.mxu0 0.0
    %3628 = vmatprep.subr.mxu0 0.0
    %3629 = vmatpush1.msra.mxu0 0.0
    %3630 = vmatprep.subr.mxu0 0.0
    %3631 = vmatpush1.msra.mxu0 0.0
    %3632 = vmatprep.subr.mxu0 0.0
    %3633 = vmatpush1.msra.mxu0 0.0
    %3634 = vmatprep.subr.mxu0 0.0
    %3635 = vmatpush1.msra.mxu0 0.0
    %3636 = vmatprep.subr.mxu0 0.0
    %3637 = vmatpush1.msra.mxu0 0.0
    %3638 = vmatprep.subr.mxu0 0.0
    %3639 = vmatpush1.msra.mxu0 0.0
    %3640 = vmatprep.subr.mxu0 0.0
    %3641 = vmatpush1.msra.mxu0 0.0
    %3642 = vmatprep.subr.mxu0 0.0
    %3643 = vmatpush1.msra.mxu0 0.0
    %3644 = vmatprep.subr.mxu0 0.0
    %3645 = vmatpush1.msra.mxu0 0.0
    %3646 = vmatprep.subr.mxu0 0.0
    %3647 = vmatpush1.msra.mxu0 0.0
    %3648 = vmatprep.subr.mxu0 0.0
    %3649 = vmatpush1.msra.mxu0 0.0
    %3650 = vmatprep.subr.mxu0 0.0
    %3651 = vmatpush1.msra.mxu0 0.0
    %3652 = vmatprep.mubr.f32.mxu0 0.0
    %3653 = vmatmul.mubr.f32.gmra.mrb[0].mxu0 %v3587
    %v3654 = vpop.f32.mrb[0].mxu0
    %v3655 = vadd.f32 0.0, %v3654
    %v3656 = vpop.f32.mrb[0].mxu0
    %v3657 = vadd.f32 0.0, %v3656
    %3658 = vdwg.mxu0
    %3659 = vmatprep.subr.mxu0 %v2276
    %3660 = vmatpush1.msra.mxu0 %v2275
    %3661 = vmatprep.subr.mxu0 %v2280
    %3662 = vmatpush1.msra.mxu0 %v2279
    %3663 = vmatprep.subr.mxu0 %v2284
    %3664 = vmatpush1.msra.mxu0 %v2283
    %3665 = vmatprep.subr.mxu0 %v2288
    %3666 = vmatpush1.msra.mxu0 %v2287
    %3667 = vmatprep.subr.mxu0 %v2292
    %3668 = vmatpush1.msra.mxu0 %v2291
    %3669 = vmatprep.subr.mxu0 %v2296
    %3670 = vmatpush1.msra.mxu0 %v2295
    %3671 = vmatprep.subr.mxu0 %v2300
    %3672 = vmatpush1.msra.mxu0 %v2299
    %3673 = vmatprep.subr.mxu0 %v2304
    %3674 = vmatpush1.msra.mxu0 %v2303
    %3675 = vmatprep.subr.mxu0 %v2308
    %3676 = vmatpush1.msra.mxu0 %v2307
    %3677 = vmatprep.subr.mxu0 %v2312
    %3678 = vmatpush1.msra.mxu0 %v2311
    %3679 = vmatprep.subr.mxu0 %v2316
    %3680 = vmatpush1.msra.mxu0 %v2315
    %3681 = vmatprep.subr.mxu0 %v2320
    %3682 = vmatpush1.msra.mxu0 %v2319
    %3683 = vmatprep.subr.mxu0 %v2324
    %3684 = vmatpush1.msra.mxu0 %v2323
    %3685 = vmatprep.subr.mxu0 %v2328
    %3686 = vmatpush1.msra.mxu0 %v2327
    %3687 = vmatprep.subr.mxu0 %v2332
    %3688 = vmatpush1.msra.mxu0 %v2331
    %3689 = vmatprep.subr.mxu0 %v2336
    %3690 = vmatpush1.msra.mxu0 %v2335
    %3691 = vmatprep.subr.mxu0 0.0
    %3692 = vmatpush1.msra.mxu0 0.0
    %3693 = vmatprep.subr.mxu0 0.0
    %3694 = vmatpush1.msra.mxu0 0.0
    %3695 = vmatprep.subr.mxu0 0.0
    %3696 = vmatpush1.msra.mxu0 0.0
    %3697 = vmatprep.subr.mxu0 0.0
    %3698 = vmatpush1.msra.mxu0 0.0
    %3699 = vmatprep.subr.mxu0 0.0
    %3700 = vmatpush1.msra.mxu0 0.0
    %3701 = vmatprep.subr.mxu0 0.0
    %3702 = vmatpush1.msra.mxu0 0.0
    %3703 = vmatprep.subr.mxu0 0.0
    %3704 = vmatpush1.msra.mxu0 0.0
    %3705 = vmatprep.subr.mxu0 0.0
    %3706 = vmatpush1.msra.mxu0 0.0
    %3707 = vmatprep.subr.mxu0 0.0
    %3708 = vmatpush1.msra.mxu0 0.0
    %3709 = vmatprep.subr.mxu0 0.0
    %3710 = vmatpush1.msra.mxu0 0.0
    %3711 = vmatprep.subr.mxu0 0.0
    %3712 = vmatpush1.msra.mxu0 0.0
    %3713 = vmatprep.subr.mxu0 0.0
    %3714 = vmatpush1.msra.mxu0 0.0
    %3715 = vmatprep.subr.mxu0 0.0
    %3716 = vmatpush1.msra.mxu0 0.0
    %3717 = vmatprep.subr.mxu0 0.0
    %3718 = vmatpush1.msra.mxu0 0.0
    %3719 = vmatprep.subr.mxu0 0.0
    %3720 = vmatpush1.msra.mxu0 0.0
    %3721 = vmatprep.subr.mxu0 0.0
    %3722 = vmatpush1.msra.mxu0 0.0
    %3723 = vmatprep.mubr.f32.mxu0 0.0
    %3724 = vmatmul.mubr.f32.gmra.mrb[0].mxu0 %v3587
    %v3725 = vpop.f32.mrb[0].mxu0
    %v3726 = vadd.f32 0.0, %v3725
    %v3727 = vpop.f32.mrb[0].mxu0
    %v3728 = vadd.f32 0.0, %v3727
    %3729 = vdwg.mxu0
    %v3730 = vadd.f32 %v3583, %v3655
    %v3731 = vadd.f32 %v3584, %v3657
    %v3732 = vadd.f32 %v3585, %v3726
    %v3733 = vadd.f32 %v3586, %v3728
    %v3734 = vxor.u32 %v3730, 2147483648
    %v3735 = vxor.u32 %v3731, 2147483648
    %v3736 = vxor.u32 %v3732, 2147483648
    %v3737 = vmul.f32 %v3734, 1.442695
    %v3738 = vpow.pop %v3737
    %v3739 = vmul.f32 %v3735, 1.442695
    %v3740 = vpow.pop %v3739
    %v3741 = vmul.f32 %v3736, 1.442695
    %v3742 = vpow.pop %v3741
    %v3743 = vadd.f32 %v3738, 1.0
    %v3744 = vadd.f32 %v3740, 1.0
    %v3745 = vadd.f32 %v3742, 1.0
    %v3746 = vrcp.pop %v3743
    %v3747 = vmul.f32 1.0, %v3746
    %v3748 = vrcp.pop %v3744
    %v3749 = vmul.f32 1.0, %v3748
    %v3750 = vrcp.pop %v3745
    %v3751 = vmul.f32 1.0, %v3750
    %v3752 = vtanh.pop %v3733
    %v3753 = vld [vmem:[#allocation5] sm:$0xff]
    %v3754 = vmul.f32 %v3749, %v3753
    %v3755 = vmul.f32 %v3747, %v3752
    %v3756 = vadd.f32 %v3754, %v3755
    %v3757 = vtanh.pop %v3756
    %v3758 = vmul.f32 %v3751, %v3757
    %3759 = vst [vmem:[#allocation5] sm:$0xff] %v3756
    %3760 = vst [vmem:[#allocation4] sm:$0xff] %v3758
    %v3761 = vld [vmem:[#allocation4] sm:$0xff]
    %v3762 = vld [vmem:[%s7] sm:$0xff]
    %v3763 = vld [vmem:[%s7 + $0x8] sm:$0xff]
    %v3764 = vld [vmem:[%s7 + $0x10] sm:$0xff]
    %v3765 = vld [vmem:[%s7 + $0x18] sm:$0xff]
    %v3766 = vld [vmem:[%s7 + $0x20] sm:$0xff]
    %v3767 = vld [vmem:[%s7 + $0x28] sm:$0xff]
    %v3768 = vld [vmem:[%s7 + $0x30] sm:$0xff]
    %v3769 = vld [vmem:[%s7 + $0x38] sm:$0xff]
    %v3770 = vld [vmem:[%s7 + $0x40] sm:$0xff]
    %v3771 = vld [vmem:[%s7 + $0x48] sm:$0xff]
    %v3772 = vld [vmem:[%s7 + $0x50] sm:$0xff]
    %v3773 = vld [vmem:[%s7 + $0x58] sm:$0xff]
    %v3774 = vld [vmem:[%s7 + $0x60] sm:$0xff]
    %v3775 = vld [vmem:[%s7 + $0x68] sm:$0xff]
    %v3776 = vld [vmem:[%s7 + $0x70] sm:$0xff]
    %v3777 = vld [vmem:[%s7 + $0x78] sm:$0xff]
    %v3778 = vld [vmem:[%s8] sm:$0x1]
    %v3780 = vlaneseq
    %v3781 = vshrl.u32 %v3780, 7
    %v3782 = vsub.s32 0, %v3781
    %v3783 = vrot.slane %v3778, %v3782
    %3785 = vmatprep.subr.mxu0 0.0
    %3786 = vmatpush1.msra.mxu0 %v3762
    %3787 = vmatprep.subr.mxu0 0.0
    %3788 = vmatpush1.msra.mxu0 %v3763
    %3789 = vmatprep.subr.mxu0 0.0
    %3790 = vmatpush1.msra.mxu0 %v3764
    %3791 = vmatprep.subr.mxu0 0.0
    %3792 = vmatpush1.msra.mxu0 %v3765
    %3793 = vmatprep.subr.mxu0 0.0
    %3794 = vmatpush1.msra.mxu0 %v3766
    %3795 = vmatprep.subr.mxu0 0.0
    %3796 = vmatpush1.msra.mxu0 %v3767
    %3797 = vmatprep.subr.mxu0 0.0
    %3798 = vmatpush1.msra.mxu0 %v3768
    %3799 = vmatprep.subr.mxu0 0.0
    %3800 = vmatpush1.msra.mxu0 %v3769
    %3801 = vmatprep.subr.mxu0 0.0
    %3802 = vmatpush1.msra.mxu0 %v3770
    %3803 = vmatprep.subr.mxu0 0.0
    %3804 = vmatpush1.msra.mxu0 %v3771
    %3805 = vmatprep.subr.mxu0 0.0
    %3806 = vmatpush1.msra.mxu0 %v3772
    %3807 = vmatprep.subr.mxu0 0.0
    %3808 = vmatpush1.msra.mxu0 %v3773
    %3809 = vmatprep.subr.mxu0 0.0
    %3810 = vmatpush1.msra.mxu0 %v3774
    %3811 = vmatprep.subr.mxu0 0.0
    %3812 = vmatpush1.msra.mxu0 %v3775
    %3813 = vmatprep.subr.mxu0 0.0
    %3814 = vmatpush1.msra.mxu0 %v3776
    %3815 = vmatprep.subr.mxu0 0.0
    %3816 = vmatpush1.msra.mxu0 %v3777
    %3817 = vmatprep.subr.mxu0 0.0
    %3818 = vmatpush1.msra.mxu0 0.0
    %3819 = vmatprep.subr.mxu0 0.0
    %3820 = vmatpush1.msra.mxu0 0.0
    %3821 = vmatprep.subr.mxu0 0.0
    %3822 = vmatpush1.msra.mxu0 0.0
    %3823 = vmatprep.subr.mxu0 0.0
    %3824 = vmatpush1.msra.mxu0 0.0
    %3825 = vmatprep.subr.mxu0 0.0
    %3826 = vmatpush1.msra.mxu0 0.0
    %3827 = vmatprep.subr.mxu0 0.0
    %3828 = vmatpush1.msra.mxu0 0.0
    %3829 = vmatprep.subr.mxu0 0.0
    %3830 = vmatpush1.msra.mxu0 0.0
    %3831 = vmatprep.subr.mxu0 0.0
    %3832 = vmatpush1.msra.mxu0 0.0
    %3833 = vmatprep.subr.mxu0 0.0
    %3834 = vmatpush1.msra.mxu0 0.0
    %3835 = vmatprep.subr.mxu0 0.0
    %3836 = vmatpush1.msra.mxu0 0.0
    %3837 = vmatprep.subr.mxu0 0.0
    %3838 = vmatpush1.msra.mxu0 0.0
    %3839 = vmatprep.subr.mxu0 0.0
    %3840 = vmatpush1.msra.mxu0 0.0
    %3841 = vmatprep.subr.mxu0 0.0
    %3842 = vmatpush1.msra.mxu0 0.0
    %3843 = vmatprep.subr.mxu0 0.0
    %3844 = vmatpush1.msra.mxu0 0.0
    %3845 = vmatprep.subr.mxu0 0.0
    %3846 = vmatpush1.msra.mxu0 0.0
    %3847 = vmatprep.subr.mxu0 0.0
    %3848 = vmatpush1.msra.mxu0 0.0
    %3849 = vmatprep.mubr.f32.mxu0 0.0
    %3850 = vmatmul.mubr.f32.gmra.mrb[0].mxu0 %v3761
    %v3851 = vpop.f32.mrb[0].mxu0
    %v3852 = vadd.f32 %v3783, %v3851
    %v3853 = vpop.f32.mrb[0].mxu0
    %3854 = vdwg.mxu0
    %vm3855 = vcmask 31744
    %3856 = vst.msk [vmem:[%s9] sm:$0xff] %vm3855, %v3852
    // Predicated region
    $region50: #{lstm_model_forward.1} parent=1 // pred_check
      _
    $region51: #{lstm_model_forward.1} parent=1 // pred_check_branch
      %3858 = sbr.rel (0) target = $region53
    $region52: #{lstm_model_forward.1} parent=1 // pred_region
      _
    $region53: #{lstm_model_forward.1} parent=1 // pred_fallthru
      _
    // Predicated region
    $region54: #{lstm_model_forward.1} parent=1 // pred_check
      _
    $region55: #{lstm_model_forward.1} parent=1 // pred_check_branch
      %3860 = sbr.rel (0) target = $region57
    $region56: #{lstm_model_forward.1} parent=1 // pred_region
      _
    $region57: #{lstm_model_forward.1} parent=1 // pred_fallthru
      _
    %3861 = vsyncpa [#allocation7], 1
    %3862 = vsyncpa [#allocation9], 1

</llo_original>
